<compile_context>
chip_gen: v7x
topology: tpu7x:2x2x1
jax: 0.10.0
libtpu: 0.0.40
codegen_flags: <defaults>
</compile_context>

<pallas_src>
import numpy as np
import jax
import jax.numpy as jnp
from jax.experimental import pallas as pl
from jax.experimental.pallas import tpu as pltpu

NEG_SLOPE = 0.2   # LeakyReLU(0.2)
BN_EPS = 1e-5     # nn.BatchNorm2d default eps


# --------------------------- host-side packing ------------------------------

def _conv_toeplitz(w, h_in, w_in, stride, pad):
    """Dense operator T such that flat_out = flat_in @ T reproduces the conv.

    w: [kh, kw, Cin, Cout] (HWIO, cross-correlation like nn.Conv2d).
    flat_in  = NHWC activation flattened to [N, h_in*w_in*Cin]
    flat_out = NHWC activation flattened to [N, h_out*w_out*Cout]
    Taps falling on zero padding are omitted (they contribute exactly 0).
    """
    kh, kw, cin, cout = w.shape
    h_out = (h_in + 2 * pad - kh) // stride + 1
    w_out = (w_in + 2 * pad - kw) // stride + 1
    t = np.zeros((h_in * w_in * cin, h_out * w_out * cout), np.float32)
    wn = np.asarray(w, np.float32)
    for oh in range(h_out):
        for ow in range(w_out):
            o0 = (oh * w_out + ow) * cout
            for i in range(kh):
                hi = oh * stride + i - pad
                if not 0 <= hi < h_in:
                    continue
                for j in range(kw):
                    wj = ow * stride + j - pad
                    if not 0 <= wj < w_in:
                        continue
                    i0 = (hi * w_in + wj) * cin
                    t[i0:i0 + cin, o0:o0 + cout] = wn[i, j]
    return t, h_out, w_out


def pack_params(params, h_in, w_in):
    """One-time repack (outside the jitted forward) into kernel-ready arrays."""
    convs, (w5, b5), bns = params
    packed = []
    h, w = h_in, w_in

    # layer 1: conv + bias (+ fused LeakyReLU in the kernel)
    w1, b1 = convs[0]
    t1, h, w = _conv_toeplitz(w1, h, w, 2, 1)
    b1_tiled = np.tile(np.asarray(b1, np.float32), h * w)[None, :]     # [1, Ho*Wo*C]
    packed += [jnp.asarray(t1, jnp.bfloat16), jnp.asarray(b1_tiled)]

    # layers 2-4: conv (bias dropped -- exactly cancelled by BN mean
    # subtraction) + BatchNorm helper matrices.
    for l in range(1, 4):
        wl, _dead_bias = convs[l]
        tl, h, w = _conv_toeplitz(wl, h, w, 2, 1)
        c = wl.shape[-1]
        gamma, beta = bns[l - 1]
        eye = np.eye(c, dtype=np.float32)
        p_sum = np.kron(np.ones((h * w, 1), np.float32), eye)          # [HW*C, C]
        p_bc = np.kron(np.ones((1, h * w), np.float32), eye)           # [C, HW*C]
        packed += [jnp.asarray(tl, jnp.bfloat16),
                   jnp.asarray(gamma, jnp.float32)[None, :],
                   jnp.asarray(beta, jnp.float32)[None, :],
                   jnp.asarray(p_sum), jnp.asarray(p_bc)]

    # head: 3x3 s1 p1 conv + bias (+ fused sigmoid in the kernel)
    t5, h, w = _conv_toeplitz(w5, h, w, 1, 1)
    b5_tiled = np.tile(np.asarray(b5, np.float32), h * w)[None, :]
    packed += [jnp.asarray(t5, jnp.bfloat16), jnp.asarray(b5_tiled)]
    return tuple(packed)


# ------------------------------ Pallas kernel --------------------------------

def _lrelu(z):
    return jnp.where(z > 0, z, NEG_SLOPE * z)


def _bn_lrelu(y, g_ref, b_ref, ps_ref, pb_ref, n):
    """Training-mode BatchNorm (batch stats, biased var, two-pass f32) + LeakyReLU.

    y: [N, HW*C] f32 raw conv output (flat NHWC).  ps/pb are 0/1 matrices that
    reduce over / broadcast across the HW positions interleaved in the lane dim.
    """
    ps = ps_ref[...]                                   # [HW*C, C]
    pb = pb_ref[...]                                   # [C, HW*C]
    m = float(n * (ps.shape[0] // ps.shape[1]))        # N * H * W
    ch_sum = jnp.sum(jnp.dot(y, ps, preferred_element_type=jnp.float32),
                     axis=0, keepdims=True)
    mean = ch_sum / m                                                  # [1, C]
    yc = y - jnp.dot(mean, pb, preferred_element_type=jnp.float32)     # centered
    var = jnp.sum(jnp.dot(yc * yc, ps, preferred_element_type=jnp.float32),
                  axis=0, keepdims=True) / m                           # biased var
    scale = g_ref[...] * jax.lax.rsqrt(var + BN_EPS)                   # [1, C]
    z = (yc * jnp.dot(scale, pb, preferred_element_type=jnp.float32)
         + jnp.dot(b_ref[...], pb, preferred_element_type=jnp.float32))
    return _lrelu(z).astype(jnp.bfloat16)


def _discriminator_kernel(x_ref,
                          w1_ref, b1_ref,
                          w2_ref, g2_ref, be2_ref, ps2_ref, pb2_ref,
                          w3_ref, g3_ref, be3_ref, ps3_ref, pb3_ref,
                          w4_ref, g4_ref, be4_ref, ps4_ref, pb4_ref,
                          w5_ref, b5_ref,
                          out_ref):
    n = x_ref.shape[0]
    x = x_ref[...]                                     # [N, H*W*Cin] bf16

    # layer 1: conv + bias + LeakyReLU (one GEMM, f32 accumulate)
    y = jnp.dot(x, w1_ref[...], preferred_element_type=jnp.float32) + b1_ref[...]
    h = _lrelu(y).astype(jnp.bfloat16)

    # layers 2-4: conv -> BatchNorm(batch stats) -> LeakyReLU, all in VMEM values
    h = _bn_lrelu(jnp.dot(h, w2_ref[...], preferred_element_type=jnp.float32),
                  g2_ref, be2_ref, ps2_ref, pb2_ref, n)
    h = _bn_lrelu(jnp.dot(h, w3_ref[...], preferred_element_type=jnp.float32),
                  g3_ref, be3_ref, ps3_ref, pb3_ref, n)
    h = _bn_lrelu(jnp.dot(h, w4_ref[...], preferred_element_type=jnp.float32),
                  g4_ref, be4_ref, ps4_ref, pb4_ref, n)

    # head: conv + bias + exact numerically-stable sigmoid
    z = jnp.dot(h, w5_ref[...], preferred_element_type=jnp.float32) + b5_ref[...]
    e = jnp.exp(-jnp.abs(z))
    inv = 1.0 / (1.0 + e)
    out_ref[...] = jnp.where(z >= 0, inv, e * inv)


# ------------------------------ JAX glue -------------------------------------

def init_params(key, input_channels, ndf):
    chans = [input_channels, ndf, ndf * 2, ndf * 4, ndf * 8]
    keys = jax.random.split(key, 16)
    ki = 0
    convs = []
    for l in range(4):  # four stride-2 4x4 convs (HWIO weights, with bias)
        cin, cout = chans[l], chans[l + 1]
        w = 0.05 * jax.random.normal(keys[ki], (4, 4, cin, cout), jnp.float32); ki += 1
        b = 0.05 * jax.random.normal(keys[ki], (cout,), jnp.float32); ki += 1
        convs.append((w, b))
    w5 = 0.05 * jax.random.normal(keys[ki], (3, 3, chans[4], 1), jnp.float32); ki += 1
    b5 = 0.05 * jax.random.normal(keys[ki], (1,), jnp.float32); ki += 1
    bns = []
    for l in range(3):  # BatchNorm2d after convs 2, 3, 4
        cout = chans[l + 2]
        gamma = 1.0 + 0.1 * jax.random.normal(keys[ki], (cout,), jnp.float32); ki += 1
        beta = 0.1 * jax.random.normal(keys[ki], (cout,), jnp.float32); ki += 1
        bns.append((gamma, beta))
    return convs, (w5, b5), bns


def discriminator_forward(x_nchw, packed):
    # TODO(synk): the PyTorch forward's host-side print() is a Python side
    # effect, not a tensor op; omitted.
    n = x_nchw.shape[0]
    x = jnp.transpose(x_nchw, (0, 2, 3, 1)).astype(jnp.bfloat16).reshape(n, -1)
    inputs = (x,) + tuple(packed)

    in_specs = [pl.BlockSpec(a.shape, lambda i: (0, 0)) for a in inputs]

    # advisory cost estimate (main GEMMs + BN helper matmuls)
    t_idx, ps_idx, g_idx = (0, 2, 7, 12, 17), (5, 10, 15), (3, 8, 13)
    flops = 2 * n * sum(int(packed[i].shape[0]) * int(packed[i].shape[1])
                        for i in t_idx)
    flops += sum(2 * (2 * n + 3) * int(packed[i].shape[0]) * int(packed[i].shape[1])
                 for i in ps_idx)
    trans = n + sum(int(packed[i].shape[1]) for i in g_idx)
    bytes_accessed = sum(int(a.size) * a.dtype.itemsize for a in inputs) + n * 4

    out = pl.pallas_call(
        _discriminator_kernel,
        grid=(1,),                                   # whole batch in one step:
        in_specs=in_specs,                           # launch-bound workload, and BN
        out_specs=pl.BlockSpec((n, 1), lambda i: (0, 0)),   # stats couple the batch
        out_shape=jax.ShapeDtypeStruct((n, 1), jnp.float32),
        compiler_params=pltpu.CompilerParams(dimension_semantics=("arbitrary",)),
        cost_estimate=pl.CostEstimate(flops=flops, transcendentals=trans,
                                      bytes_accessed=bytes_accessed),
    )(*inputs)
    return out.reshape(n, 1, 1, 1)                   # NHWC 1x1 == NCHW [N,1,1,1]


if __name__ == "__main__":
    key = jax.random.PRNGKey(0)
    k_params, k_x = jax.random.split(key)

    input_channels, ndf = 4, 8
    x = jax.random.normal(k_x, (2, input_channels, 16, 16), jnp.float32)

    params = init_params(k_params, input_channels, ndf)
    packed = pack_params(params, 16, 16)             # one-time, outside the jit

    fwd = jax.jit(discriminator_forward)
    out = jax.block_until_ready(fwd(x, packed))

    assert out.shape == (2, 1, 1, 1), out.shape
    assert bool(jnp.all((out >= 0.0) & (out <= 1.0)))  # sigmoid output range
    print("KERNEL_OK")
</pallas_src>

<mosaic_0001>
module attributes {stable_mosaic.version = 11 : i64} {
  func.func @_discriminator_kernel(%arg0: i32, %arg1: memref<2x1024xbf16, #tpu.memory_space<vmem>>, %arg2: memref<1024x512xbf16, #tpu.memory_space<vmem>>, %arg3: memref<1x512xf32, #tpu.memory_space<vmem>>, %arg4: memref<512x256xbf16, #tpu.memory_space<vmem>>, %arg5: memref<1x16xf32, #tpu.memory_space<vmem>>, %arg6: memref<1x16xf32, #tpu.memory_space<vmem>>, %arg7: memref<256x16xf32, #tpu.memory_space<vmem>>, %arg8: memref<16x256xf32, #tpu.memory_space<vmem>>, %arg9: memref<256x128xbf16, #tpu.memory_space<vmem>>, %arg10: memref<1x32xf32, #tpu.memory_space<vmem>>, %arg11: memref<1x32xf32, #tpu.memory_space<vmem>>, %arg12: memref<128x32xf32, #tpu.memory_space<vmem>>, %arg13: memref<32x128xf32, #tpu.memory_space<vmem>>, %arg14: memref<128x64xbf16, #tpu.memory_space<vmem>>, %arg15: memref<1x64xf32, #tpu.memory_space<vmem>>, %arg16: memref<1x64xf32, #tpu.memory_space<vmem>>, %arg17: memref<64x64xf32, #tpu.memory_space<vmem>>, %arg18: memref<64x64xf32, #tpu.memory_space<vmem>>, %arg19: memref<64x1xbf16, #tpu.memory_space<vmem>>, %arg20: memref<1x1xf32, #tpu.memory_space<vmem>>, %arg21: memref<2x1xf32, #tpu.memory_space<vmem>>) attributes {dimension_semantics = [#tpu.dimension_semantics<arbitrary>], iteration_bounds = array<i64: 1>, scalar_prefetch = 0 : i64, scratch_operands = 0 : i64, tpu.core_type = #tpu.core_type<tc>, window_params = [{pipeline_mode = #tpu.pipeline_mode<synchronous>, transform_indices = @transform_0, window_bounds = array<i64: 2, 1024>}, {pipeline_mode = #tpu.pipeline_mode<synchronous>, transform_indices = @transform_1, window_bounds = array<i64: 1024, 512>}, {pipeline_mode = #tpu.pipeline_mode<synchronous>, transform_indices = @transform_2, window_bounds = array<i64: 1, 512>}, {pipeline_mode = #tpu.pipeline_mode<synchronous>, transform_indices = @transform_3, window_bounds = array<i64: 512, 256>}, {pipeline_mode = #tpu.pipeline_mode<synchronous>, transform_indices = @transform_4, window_bounds = array<i64: 1, 16>}, {pipeline_mode = #tpu.pipeline_mode<synchronous>, transform_indices = @transform_5, window_bounds = array<i64: 1, 16>}, {pipeline_mode = #tpu.pipeline_mode<synchronous>, transform_indices = @transform_6, window_bounds = array<i64: 256, 16>}, {pipeline_mode = #tpu.pipeline_mode<synchronous>, transform_indices = @transform_7, window_bounds = array<i64: 16, 256>}, {pipeline_mode = #tpu.pipeline_mode<synchronous>, transform_indices = @transform_8, window_bounds = array<i64: 256, 128>}, {pipeline_mode = #tpu.pipeline_mode<synchronous>, transform_indices = @transform_9, window_bounds = array<i64: 1, 32>}, {pipeline_mode = #tpu.pipeline_mode<synchronous>, transform_indices = @transform_10, window_bounds = array<i64: 1, 32>}, {pipeline_mode = #tpu.pipeline_mode<synchronous>, transform_indices = @transform_11, window_bounds = array<i64: 128, 32>}, {pipeline_mode = #tpu.pipeline_mode<synchronous>, transform_indices = @transform_12, window_bounds = array<i64: 32, 128>}, {pipeline_mode = #tpu.pipeline_mode<synchronous>, transform_indices = @transform_13, window_bounds = array<i64: 128, 64>}, {pipeline_mode = #tpu.pipeline_mode<synchronous>, transform_indices = @transform_14, window_bounds = array<i64: 1, 64>}, {pipeline_mode = #tpu.pipeline_mode<synchronous>, transform_indices = @transform_15, window_bounds = array<i64: 1, 64>}, {pipeline_mode = #tpu.pipeline_mode<synchronous>, transform_indices = @transform_16, window_bounds = array<i64: 64, 64>}, {pipeline_mode = #tpu.pipeline_mode<synchronous>, transform_indices = @transform_17, window_bounds = array<i64: 64, 64>}, {pipeline_mode = #tpu.pipeline_mode<synchronous>, transform_indices = @transform_18, window_bounds = array<i64: 64, 1>}, {pipeline_mode = #tpu.pipeline_mode<synchronous>, transform_indices = @transform_19, window_bounds = array<i64: 1, 1>}, {pipeline_mode = #tpu.pipeline_mode<synchronous>, transform_indices = @transform_20, window_bounds = array<i64: 2, 1>}]} {
    %c0 = arith.constant 0 : index
    %c0_0 = arith.constant 0 : index
    %0 = vector.load %arg1[%c0, %c0_0] : memref<2x1024xbf16, #tpu.memory_space<vmem>>, vector<2x1024xbf16>
    %c0_1 = arith.constant 0 : index
    %c0_2 = arith.constant 0 : index
    %1 = vector.load %arg2[%c0_1, %c0_2] : memref<1024x512xbf16, #tpu.memory_space<vmem>>, vector<1024x512xbf16>
    %cst = arith.constant dense<0.000000e+00> : vector<2x512xf32>
    %2 = tpu.matmul %0, %1, %cst {dimension_numbers = #tpu.dot_dimension_numbers<[1], [0], [0], [1], [0, 0, 1, 1], [], []>} : vector<2x1024xbf16>, vector<1024x512xbf16>, vector<2x512xf32> -> vector<2x512xf32>
    %c0_3 = arith.constant 0 : index
    %c0_4 = arith.constant 0 : index
    %3 = vector.load %arg3[%c0_3, %c0_4] : memref<1x512xf32, #tpu.memory_space<vmem>>, vector<1x512xf32>
    %4 = vector.broadcast %3 : vector<1x512xf32> to vector<2x512xf32>
    %5 = arith.addf %2, %4 : vector<2x512xf32>
    %cst_5 = arith.constant 0.000000e+00 : f32
    %6 = vector.broadcast %cst_5 : f32 to vector<2x512xf32>
    %7 = arith.cmpf ogt, %5, %6 : vector<2x512xf32>
    %cst_6 = arith.constant 2.000000e-01 : f32
    %8 = vector.broadcast %cst_6 : f32 to vector<2x512xf32>
    %9 = arith.mulf %8, %5 : vector<2x512xf32>
    %10 = arith.select %7, %5, %9 : vector<2x512xi1>, vector<2x512xf32>
    %11 = arith.truncf %10 : vector<2x512xf32> to vector<2x512xbf16>
    %c0_7 = arith.constant 0 : index
    %c0_8 = arith.constant 0 : index
    %12 = vector.load %arg4[%c0_7, %c0_8] : memref<512x256xbf16, #tpu.memory_space<vmem>>, vector<512x256xbf16>
    %cst_9 = arith.constant dense<0.000000e+00> : vector<2x256xf32>
    %13 = tpu.matmul %11, %12, %cst_9 {dimension_numbers = #tpu.dot_dimension_numbers<[1], [0], [0], [1], [0, 0, 1, 1], [], []>} : vector<2x512xbf16>, vector<512x256xbf16>, vector<2x256xf32> -> vector<2x256xf32>
    %c0_10 = arith.constant 0 : index
    %c0_11 = arith.constant 0 : index
    %14 = vector.load %arg7[%c0_10, %c0_11] : memref<256x16xf32, #tpu.memory_space<vmem>>, vector<256x16xf32>
    %c0_12 = arith.constant 0 : index
    %c0_13 = arith.constant 0 : index
    %15 = vector.load %arg8[%c0_12, %c0_13] : memref<16x256xf32, #tpu.memory_space<vmem>>, vector<16x256xf32>
    %cst_14 = arith.constant dense<0.000000e+00> : vector<2x16xf32>
    %16 = tpu.matmul %13, %14, %cst_14 {dimension_numbers = #tpu.dot_dimension_numbers<[1], [0], [0], [1], [0, 0, 1, 1], [], []>} : vector<2x256xf32>, vector<256x16xf32>, vector<2x16xf32> -> vector<2x16xf32>
    %cst_15 = arith.constant dense<0.000000e+00> : vector<16xf32>
    %17 = vector.multi_reduction <add>, %16, %cst_15 [0] : vector<2x16xf32> to vector<16xf32>
    %18 = vector.shape_cast %17 : vector<16xf32> to vector<1x16xf32>
    %cst_16 = arith.constant 3.200000e+01 : f32
    %19 = vector.broadcast %cst_16 : f32 to vector<1x16xf32>
    %20 = arith.divf %18, %19 : vector<1x16xf32>
    %cst_17 = arith.constant dense<0.000000e+00> : vector<1x256xf32>
    %21 = tpu.matmul %20, %15, %cst_17 {dimension_numbers = #tpu.dot_dimension_numbers<[1], [0], [0], [1], [0, 0, 1, 1], [], []>} : vector<1x16xf32>, vector<16x256xf32>, vector<1x256xf32> -> vector<1x256xf32>
    %22 = vector.broadcast %21 : vector<1x256xf32> to vector<2x256xf32>
    %23 = arith.subf %13, %22 : vector<2x256xf32>
    %24 = arith.mulf %23, %23 : vector<2x256xf32>
    %cst_18 = arith.constant dense<0.000000e+00> : vector<2x16xf32>
    %25 = tpu.matmul %24, %14, %cst_18 {dimension_numbers = #tpu.dot_dimension_numbers<[1], [0], [0], [1], [0, 0, 1, 1], [], []>} : vector<2x256xf32>, vector<256x16xf32>, vector<2x16xf32> -> vector<2x16xf32>
    %cst_19 = arith.constant dense<0.000000e+00> : vector<16xf32>
    %26 = vector.multi_reduction <add>, %25, %cst_19 [0] : vector<2x16xf32> to vector<16xf32>
    %27 = vector.shape_cast %26 : vector<16xf32> to vector<1x16xf32>
    %cst_20 = arith.constant 3.200000e+01 : f32
    %28 = vector.broadcast %cst_20 : f32 to vector<1x16xf32>
    %29 = arith.divf %27, %28 : vector<1x16xf32>
    %c0_21 = arith.constant 0 : index
    %c0_22 = arith.constant 0 : index
    %30 = vector.load %arg5[%c0_21, %c0_22] : memref<1x16xf32, #tpu.memory_space<vmem>>, vector<1x16xf32>
    %cst_23 = arith.constant 9.99999974E-6 : f32
    %31 = vector.broadcast %cst_23 : f32 to vector<1x16xf32>
    %32 = arith.addf %29, %31 : vector<1x16xf32>
    %33 = math.rsqrt %32 : vector<1x16xf32>
    %34 = arith.mulf %30, %33 : vector<1x16xf32>
    %cst_24 = arith.constant dense<0.000000e+00> : vector<1x256xf32>
    %35 = tpu.matmul %34, %15, %cst_24 {dimension_numbers = #tpu.dot_dimension_numbers<[1], [0], [0], [1], [0, 0, 1, 1], [], []>} : vector<1x16xf32>, vector<16x256xf32>, vector<1x256xf32> -> vector<1x256xf32>
    %36 = vector.broadcast %35 : vector<1x256xf32> to vector<2x256xf32>
    %37 = arith.mulf %23, %36 : vector<2x256xf32>
    %c0_25 = arith.constant 0 : index
    %c0_26 = arith.constant 0 : index
    %38 = vector.load %arg6[%c0_25, %c0_26] : memref<1x16xf32, #tpu.memory_space<vmem>>, vector<1x16xf32>
    %cst_27 = arith.constant dense<0.000000e+00> : vector<1x256xf32>
    %39 = tpu.matmul %38, %15, %cst_27 {dimension_numbers = #tpu.dot_dimension_numbers<[1], [0], [0], [1], [0, 0, 1, 1], [], []>} : vector<1x16xf32>, vector<16x256xf32>, vector<1x256xf32> -> vector<1x256xf32>
    %40 = vector.broadcast %39 : vector<1x256xf32> to vector<2x256xf32>
    %41 = arith.addf %37, %40 : vector<2x256xf32>
    %cst_28 = arith.constant 0.000000e+00 : f32
    %42 = vector.broadcast %cst_28 : f32 to vector<2x256xf32>
    %43 = arith.cmpf ogt, %41, %42 : vector<2x256xf32>
    %cst_29 = arith.constant 2.000000e-01 : f32
    %44 = vector.broadcast %cst_29 : f32 to vector<2x256xf32>
    %45 = arith.mulf %44, %41 : vector<2x256xf32>
    %46 = arith.select %43, %41, %45 : vector<2x256xi1>, vector<2x256xf32>
    %47 = arith.truncf %46 : vector<2x256xf32> to vector<2x256xbf16>
    %c0_30 = arith.constant 0 : index
    %c0_31 = arith.constant 0 : index
    %48 = vector.load %arg9[%c0_30, %c0_31] : memref<256x128xbf16, #tpu.memory_space<vmem>>, vector<256x128xbf16>
    %cst_32 = arith.constant dense<0.000000e+00> : vector<2x128xf32>
    %49 = tpu.matmul %47, %48, %cst_32 {dimension_numbers = #tpu.dot_dimension_numbers<[1], [0], [0], [1], [0, 0, 1, 1], [], []>} : vector<2x256xbf16>, vector<256x128xbf16>, vector<2x128xf32> -> vector<2x128xf32>
    %c0_33 = arith.constant 0 : index
    %c0_34 = arith.constant 0 : index
    %50 = vector.load %arg12[%c0_33, %c0_34] : memref<128x32xf32, #tpu.memory_space<vmem>>, vector<128x32xf32>
    %c0_35 = arith.constant 0 : index
    %c0_36 = arith.constant 0 : index
    %51 = vector.load %arg13[%c0_35, %c0_36] : memref<32x128xf32, #tpu.memory_space<vmem>>, vector<32x128xf32>
    %cst_37 = arith.constant dense<0.000000e+00> : vector<2x32xf32>
    %52 = tpu.matmul %49, %50, %cst_37 {dimension_numbers = #tpu.dot_dimension_numbers<[1], [0], [0], [1], [0, 0, 1, 1], [], []>} : vector<2x128xf32>, vector<128x32xf32>, vector<2x32xf32> -> vector<2x32xf32>
    %cst_38 = arith.constant dense<0.000000e+00> : vector<32xf32>
    %53 = vector.multi_reduction <add>, %52, %cst_38 [0] : vector<2x32xf32> to vector<32xf32>
    %54 = vector.shape_cast %53 : vector<32xf32> to vector<1x32xf32>
    %cst_39 = arith.constant 8.000000e+00 : f32
    %55 = vector.broadcast %cst_39 : f32 to vector<1x32xf32>
    %56 = arith.divf %54, %55 : vector<1x32xf32>
    %cst_40 = arith.constant dense<0.000000e+00> : vector<1x128xf32>
    %57 = tpu.matmul %56, %51, %cst_40 {dimension_numbers = #tpu.dot_dimension_numbers<[1], [0], [0], [1], [0, 0, 1, 1], [], []>} : vector<1x32xf32>, vector<32x128xf32>, vector<1x128xf32> -> vector<1x128xf32>
    %58 = vector.broadcast %57 : vector<1x128xf32> to vector<2x128xf32>
    %59 = arith.subf %49, %58 : vector<2x128xf32>
    %60 = arith.mulf %59, %59 : vector<2x128xf32>
    %cst_41 = arith.constant dense<0.000000e+00> : vector<2x32xf32>
    %61 = tpu.matmul %60, %50, %cst_41 {dimension_numbers = #tpu.dot_dimension_numbers<[1], [0], [0], [1], [0, 0, 1, 1], [], []>} : vector<2x128xf32>, vector<128x32xf32>, vector<2x32xf32> -> vector<2x32xf32>
    %cst_42 = arith.constant dense<0.000000e+00> : vector<32xf32>
    %62 = vector.multi_reduction <add>, %61, %cst_42 [0] : vector<2x32xf32> to vector<32xf32>
    %63 = vector.shape_cast %62 : vector<32xf32> to vector<1x32xf32>
    %cst_43 = arith.constant 8.000000e+00 : f32
    %64 = vector.broadcast %cst_43 : f32 to vector<1x32xf32>
    %65 = arith.divf %63, %64 : vector<1x32xf32>
    %c0_44 = arith.constant 0 : index
    %c0_45 = arith.constant 0 : index
    %66 = vector.load %arg10[%c0_44, %c0_45] : memref<1x32xf32, #tpu.memory_space<vmem>>, vector<1x32xf32>
    %cst_46 = arith.constant 9.99999974E-6 : f32
    %67 = vector.broadcast %cst_46 : f32 to vector<1x32xf32>
    %68 = arith.addf %65, %67 : vector<1x32xf32>
    %69 = math.rsqrt %68 : vector<1x32xf32>
    %70 = arith.mulf %66, %69 : vector<1x32xf32>
    %cst_47 = arith.constant dense<0.000000e+00> : vector<1x128xf32>
    %71 = tpu.matmul %70, %51, %cst_47 {dimension_numbers = #tpu.dot_dimension_numbers<[1], [0], [0], [1], [0, 0, 1, 1], [], []>} : vector<1x32xf32>, vector<32x128xf32>, vector<1x128xf32> -> vector<1x128xf32>
    %72 = vector.broadcast %71 : vector<1x128xf32> to vector<2x128xf32>
    %73 = arith.mulf %59, %72 : vector<2x128xf32>
    %c0_48 = arith.constant 0 : index
    %c0_49 = arith.constant 0 : index
    %74 = vector.load %arg11[%c0_48, %c0_49] : memref<1x32xf32, #tpu.memory_space<vmem>>, vector<1x32xf32>
    %cst_50 = arith.constant dense<0.000000e+00> : vector<1x128xf32>
    %75 = tpu.matmul %74, %51, %cst_50 {dimension_numbers = #tpu.dot_dimension_numbers<[1], [0], [0], [1], [0, 0, 1, 1], [], []>} : vector<1x32xf32>, vector<32x128xf32>, vector<1x128xf32> -> vector<1x128xf32>
    %76 = vector.broadcast %75 : vector<1x128xf32> to vector<2x128xf32>
    %77 = arith.addf %73, %76 : vector<2x128xf32>
    %cst_51 = arith.constant 0.000000e+00 : f32
    %78 = vector.broadcast %cst_51 : f32 to vector<2x128xf32>
    %79 = arith.cmpf ogt, %77, %78 : vector<2x128xf32>
    %cst_52 = arith.constant 2.000000e-01 : f32
    %80 = vector.broadcast %cst_52 : f32 to vector<2x128xf32>
    %81 = arith.mulf %80, %77 : vector<2x128xf32>
    %82 = arith.select %79, %77, %81 : vector<2x128xi1>, vector<2x128xf32>
    %83 = arith.truncf %82 : vector<2x128xf32> to vector<2x128xbf16>
    %c0_53 = arith.constant 0 : index
    %c0_54 = arith.constant 0 : index
    %84 = vector.load %arg14[%c0_53, %c0_54] : memref<128x64xbf16, #tpu.memory_space<vmem>>, vector<128x64xbf16>
    %cst_55 = arith.constant dense<0.000000e+00> : vector<2x64xf32>
    %85 = tpu.matmul %83, %84, %cst_55 {dimension_numbers = #tpu.dot_dimension_numbers<[1], [0], [0], [1], [0, 0, 1, 1], [], []>} : vector<2x128xbf16>, vector<128x64xbf16>, vector<2x64xf32> -> vector<2x64xf32>
    %c0_56 = arith.constant 0 : index
    %c0_57 = arith.constant 0 : index
    %86 = vector.load %arg17[%c0_56, %c0_57] : memref<64x64xf32, #tpu.memory_space<vmem>>, vector<64x64xf32>
    %c0_58 = arith.constant 0 : index
    %c0_59 = arith.constant 0 : index
    %87 = vector.load %arg18[%c0_58, %c0_59] : memref<64x64xf32, #tpu.memory_space<vmem>>, vector<64x64xf32>
    %cst_60 = arith.constant dense<0.000000e+00> : vector<2x64xf32>
    %88 = tpu.matmul %85, %86, %cst_60 {dimension_numbers = #tpu.dot_dimension_numbers<[1], [0], [0], [1], [0, 0, 1, 1], [], []>} : vector<2x64xf32>, vector<64x64xf32>, vector<2x64xf32> -> vector<2x64xf32>
    %cst_61 = arith.constant dense<0.000000e+00> : vector<64xf32>
    %89 = vector.multi_reduction <add>, %88, %cst_61 [0] : vector<2x64xf32> to vector<64xf32>
    %90 = vector.shape_cast %89 : vector<64xf32> to vector<1x64xf32>
    %cst_62 = arith.constant 2.000000e+00 : f32
    %91 = vector.broadcast %cst_62 : f32 to vector<1x64xf32>
    %92 = arith.divf %90, %91 : vector<1x64xf32>
    %cst_63 = arith.constant dense<0.000000e+00> : vector<1x64xf32>
    %93 = tpu.matmul %92, %87, %cst_63 {dimension_numbers = #tpu.dot_dimension_numbers<[1], [0], [0], [1], [0, 0, 1, 1], [], []>} : vector<1x64xf32>, vector<64x64xf32>, vector<1x64xf32> -> vector<1x64xf32>
    %94 = vector.broadcast %93 : vector<1x64xf32> to vector<2x64xf32>
    %95 = arith.subf %85, %94 : vector<2x64xf32>
    %96 = arith.mulf %95, %95 : vector<2x64xf32>
    %cst_64 = arith.constant dense<0.000000e+00> : vector<2x64xf32>
    %97 = tpu.matmul %96, %86, %cst_64 {dimension_numbers = #tpu.dot_dimension_numbers<[1], [0], [0], [1], [0, 0, 1, 1], [], []>} : vector<2x64xf32>, vector<64x64xf32>, vector<2x64xf32> -> vector<2x64xf32>
    %cst_65 = arith.constant dense<0.000000e+00> : vector<64xf32>
    %98 = vector.multi_reduction <add>, %97, %cst_65 [0] : vector<2x64xf32> to vector<64xf32>
    %99 = vector.shape_cast %98 : vector<64xf32> to vector<1x64xf32>
    %cst_66 = arith.constant 2.000000e+00 : f32
    %100 = vector.broadcast %cst_66 : f32 to vector<1x64xf32>
    %101 = arith.divf %99, %100 : vector<1x64xf32>
    %c0_67 = arith.constant 0 : index
    %c0_68 = arith.constant 0 : index
    %102 = vector.load %arg15[%c0_67, %c0_68] : memref<1x64xf32, #tpu.memory_space<vmem>>, vector<1x64xf32>
    %cst_69 = arith.constant 9.99999974E-6 : f32
    %103 = vector.broadcast %cst_69 : f32 to vector<1x64xf32>
    %104 = arith.addf %101, %103 : vector<1x64xf32>
    %105 = math.rsqrt %104 : vector<1x64xf32>
    %106 = arith.mulf %102, %105 : vector<1x64xf32>
    %cst_70 = arith.constant dense<0.000000e+00> : vector<1x64xf32>
    %107 = tpu.matmul %106, %87, %cst_70 {dimension_numbers = #tpu.dot_dimension_numbers<[1], [0], [0], [1], [0, 0, 1, 1], [], []>} : vector<1x64xf32>, vector<64x64xf32>, vector<1x64xf32> -> vector<1x64xf32>
    %108 = vector.broadcast %107 : vector<1x64xf32> to vector<2x64xf32>
    %109 = arith.mulf %95, %108 : vector<2x64xf32>
    %c0_71 = arith.constant 0 : index
    %c0_72 = arith.constant 0 : index
    %110 = vector.load %arg16[%c0_71, %c0_72] : memref<1x64xf32, #tpu.memory_space<vmem>>, vector<1x64xf32>
    %cst_73 = arith.constant dense<0.000000e+00> : vector<1x64xf32>
    %111 = tpu.matmul %110, %87, %cst_73 {dimension_numbers = #tpu.dot_dimension_numbers<[1], [0], [0], [1], [0, 0, 1, 1], [], []>} : vector<1x64xf32>, vector<64x64xf32>, vector<1x64xf32> -> vector<1x64xf32>
    %112 = vector.broadcast %111 : vector<1x64xf32> to vector<2x64xf32>
    %113 = arith.addf %109, %112 : vector<2x64xf32>
    %cst_74 = arith.constant 0.000000e+00 : f32
    %114 = vector.broadcast %cst_74 : f32 to vector<2x64xf32>
    %115 = arith.cmpf ogt, %113, %114 : vector<2x64xf32>
    %cst_75 = arith.constant 2.000000e-01 : f32
    %116 = vector.broadcast %cst_75 : f32 to vector<2x64xf32>
    %117 = arith.mulf %116, %113 : vector<2x64xf32>
    %118 = arith.select %115, %113, %117 : vector<2x64xi1>, vector<2x64xf32>
    %119 = arith.truncf %118 : vector<2x64xf32> to vector<2x64xbf16>
    %c0_76 = arith.constant 0 : index
    %c0_77 = arith.constant 0 : index
    %120 = vector.load %arg19[%c0_76, %c0_77] : memref<64x1xbf16, #tpu.memory_space<vmem>>, vector<64x1xbf16>
    %cst_78 = arith.constant dense<0.000000e+00> : vector<2x1xf32>
    %121 = tpu.matmul %119, %120, %cst_78 {dimension_numbers = #tpu.dot_dimension_numbers<[1], [0], [0], [1], [0, 0, 1, 1], [], []>} : vector<2x64xbf16>, vector<64x1xbf16>, vector<2x1xf32> -> vector<2x1xf32>
    %c0_79 = arith.constant 0 : index
    %c0_80 = arith.constant 0 : index
    %122 = vector.load %arg20[%c0_79, %c0_80] : memref<1x1xf32, #tpu.memory_space<vmem>>, vector<1x1xf32>
    %123 = vector.broadcast %122 : vector<1x1xf32> to vector<2x1xf32>
    %124 = arith.addf %121, %123 : vector<2x1xf32>
    %125 = math.absf %124 : vector<2x1xf32>
    %cst_81 = arith.constant 0.000000e+00 : f32
    %126 = vector.broadcast %cst_81 : f32 to vector<2x1xf32>
    %127 = arith.subf %126, %125 : vector<2x1xf32>
    %128 = math.exp %127 : vector<2x1xf32>
    %cst_82 = arith.constant 1.000000e+00 : f32
    %129 = vector.broadcast %cst_82 : f32 to vector<2x1xf32>
    %130 = arith.addf %129, %128 : vector<2x1xf32>
    %cst_83 = arith.constant 1.000000e+00 : f32
    %131 = vector.broadcast %cst_83 : f32 to vector<2x1xf32>
    %132 = arith.divf %131, %130 : vector<2x1xf32>
    %cst_84 = arith.constant 0.000000e+00 : f32
    %133 = vector.broadcast %cst_84 : f32 to vector<2x1xf32>
    %134 = arith.cmpf oge, %124, %133 : vector<2x1xf32>
    %135 = arith.mulf %128, %132 : vector<2x1xf32>
    %136 = arith.select %134, %132, %135 : vector<2x1xi1>, vector<2x1xf32>
    %c0_85 = arith.constant 0 : index
    %c0_86 = arith.constant 0 : index
    %137 = vector.load %arg21[%c0_85, %c0_86] : memref<2x1xf32, #tpu.memory_space<vmem>>, vector<2x1xf32>
    tpu.vector_store %arg21[%c0_85, %c0_86], %136 {strides = array<i32>} : memref<2x1xf32, #tpu.memory_space<vmem>>, vector<2x1xf32>,
    return
  }
  func.func @transform_0(%arg0: i32) -> (i32, i32) {
    %c0_i32 = arith.constant 0 : i32
    %c0_i32_0 = arith.constant 0 : i32
    %c0_i32_1 = arith.constant 0 : i32
    return %c0_i32, %c0_i32_0 : i32, i32
  }
  func.func @transform_1(%arg0: i32) -> (i32, i32) {
    %c0_i32 = arith.constant 0 : i32
    %c0_i32_0 = arith.constant 0 : i32
    %c0_i32_1 = arith.constant 0 : i32
    return %c0_i32, %c0_i32_0 : i32, i32
  }
  func.func @transform_2(%arg0: i32) -> (i32, i32) {
    %c0_i32 = arith.constant 0 : i32
    %c0_i32_0 = arith.constant 0 : i32
    %c0_i32_1 = arith.constant 0 : i32
    return %c0_i32, %c0_i32_0 : i32, i32
  }
  func.func @transform_3(%arg0: i32) -> (i32, i32) {
    %c0_i32 = arith.constant 0 : i32
    %c0_i32_0 = arith.constant 0 : i32
    %c0_i32_1 = arith.constant 0 : i32
    return %c0_i32, %c0_i32_0 : i32, i32
  }
  func.func @transform_4(%arg0: i32) -> (i32, i32) {
    %c0_i32 = arith.constant 0 : i32
    %c0_i32_0 = arith.constant 0 : i32
    %c0_i32_1 = arith.constant 0 : i32
    return %c0_i32, %c0_i32_0 : i32, i32
  }
  func.func @transform_5(%arg0: i32) -> (i32, i32) {
    %c0_i32 = arith.constant 0 : i32
    %c0_i32_0 = arith.constant 0 : i32
    %c0_i32_1 = arith.constant 0 : i32
    return %c0_i32, %c0_i32_0 : i32, i32
  }
  func.func @transform_6(%arg0: i32) -> (i32, i32) {
    %c0_i32 = arith.constant 0 : i32
    %c0_i32_0 = arith.constant 0 : i32
    %c0_i32_1 = arith.constant 0 : i32
    return %c0_i32, %c0_i32_0 : i32, i32
  }
  func.func @transform_7(%arg0: i32) -> (i32, i32) {
    %c0_i32 = arith.constant 0 : i32
    %c0_i32_0 = arith.constant 0 : i32
    %c0_i32_1 = arith.constant 0 : i32
    return %c0_i32, %c0_i32_0 : i32, i32
  }
  func.func @transform_8(%arg0: i32) -> (i32, i32) {
    %c0_i32 = arith.constant 0 : i32
    %c0_i32_0 = arith.constant 0 : i32
    %c0_i32_1 = arith.constant 0 : i32
    return %c0_i32, %c0_i32_0 : i32, i32
  }
  func.func @transform_9(%arg0: i32) -> (i32, i32) {
    %c0_i32 = arith.constant 0 : i32
    %c0_i32_0 = arith.constant 0 : i32
    %c0_i32_1 = arith.constant 0 : i32
    return %c0_i32, %c0_i32_0 : i32, i32
  }
  func.func @transform_10(%arg0: i32) -> (i32, i32) {
    %c0_i32 = arith.constant 0 : i32
    %c0_i32_0 = arith.constant 0 : i32
    %c0_i32_1 = arith.constant 0 : i32
    return %c0_i32, %c0_i32_0 : i32, i32
  }
  func.func @transform_11(%arg0: i32) -> (i32, i32) {
    %c0_i32 = arith.constant 0 : i32
    %c0_i32_0 = arith.constant 0 : i32
    %c0_i32_1 = arith.constant 0 : i32
    return %c0_i32, %c0_i32_0 : i32, i32
  }
  func.func @transform_12(%arg0: i32) -> (i32, i32) {
    %c0_i32 = arith.constant 0 : i32
    %c0_i32_0 = arith.constant 0 : i32
    %c0_i32_1 = arith.constant 0 : i32
    return %c0_i32, %c0_i32_0 : i32, i32
  }
  func.func @transform_13(%arg0: i32) -> (i32, i32) {
    %c0_i32 = arith.constant 0 : i32
    %c0_i32_0 = arith.constant 0 : i32
    %c0_i32_1 = arith.constant 0 : i32
    return %c0_i32, %c0_i32_0 : i32, i32
  }
  func.func @transform_14(%arg0: i32) -> (i32, i32) {
    %c0_i32 = arith.constant 0 : i32
    %c0_i32_0 = arith.constant 0 : i32
    %c0_i32_1 = arith.constant 0 : i32
    return %c0_i32, %c0_i32_0 : i32, i32
  }
  func.func @transform_15(%arg0: i32) -> (i32, i32) {
    %c0_i32 = arith.constant 0 : i32
    %c0_i32_0 = arith.constant 0 : i32
    %c0_i32_1 = arith.constant 0 : i32
    return %c0_i32, %c0_i32_0 : i32, i32
  }
  func.func @transform_16(%arg0: i32) -> (i32, i32) {
    %c0_i32 = arith.constant 0 : i32
    %c0_i32_0 = arith.constant 0 : i32
    %c0_i32_1 = arith.constant 0 : i32
    return %c0_i32, %c0_i32_0 : i32, i32
  }
  func.func @transform_17(%arg0: i32) -> (i32, i32) {
    %c0_i32 = arith.constant 0 : i32
    %c0_i32_0 = arith.constant 0 : i32
    %c0_i32_1 = arith.constant 0 : i32
    return %c0_i32, %c0_i32_0 : i32, i32
  }
  func.func @transform_18(%arg0: i32) -> (i32, i32) {
    %c0_i32 = arith.constant 0 : i32
    %c0_i32_0 = arith.constant 0 : i32
    %c0_i32_1 = arith.constant 0 : i32
    return %c0_i32, %c0_i32_0 : i32, i32
  }
  func.func @transform_19(%arg0: i32) -> (i32, i32) {
    %c0_i32 = arith.constant 0 : i32
    %c0_i32_0 = arith.constant 0 : i32
    %c0_i32_1 = arith.constant 0 : i32
    return %c0_i32, %c0_i32_0 : i32, i32
  }
  func.func @transform_20(%arg0: i32) -> (i32, i32) {
    %c0_i32 = arith.constant 0 : i32
    %c0_i32_0 = arith.constant 0 : i32
    %c0_i32_1 = arith.constant 0 : i32
    return %c0_i32, %c0_i32_0 : i32, i32
  }
}

</mosaic_0001>

<llo_original>
// kernel: discriminator_forward.1
$region0: #{discriminator_forward.1}
  #allocation0 [shape = 'u32[]', space=smem, size = 0x4, offset = 0x4, fixed_abs, tag = 'smem constant byte address 0x4 - core index']
  #allocation1 [shape = 'u32[144,128]{1,0:T(1,128)}', space=vmem, size = 0x12000, scoped, tag = 'internal scratch']
  #allocation2 [shape = 'f32[1,1]{1,0:T(1,128)S(1)}', space=vmem, size = 0x200, scoped, tag = 'scoped memory for discriminator_forward.1']
  %s0 = inlined_call_operand.vmem [shape: bf16[2,1024], index: 0, kind: input, shape index: {}]
  %s1 = inlined_call_operand.hbm [shape: bf16[1024,512], index: 1, kind: input, shape index: {}]
  %s2 = inlined_call_operand.vmem [shape: f32[1,512], index: 2, kind: input, shape index: {}]
  %s3 = inlined_call_operand.vmem [shape: bf16[512,256], index: 3, kind: input, shape index: {}]
  %s4 = inlined_call_operand.vmem [shape: f32[1,16], index: 4, kind: input, shape index: {}]
  %s5 = inlined_call_operand.vmem [shape: f32[1,16], index: 5, kind: input, shape index: {}]
  %s6 = inlined_call_operand.vmem [shape: f32[256,16], index: 6, kind: input, shape index: {}]
  %s7 = inlined_call_operand.vmem [shape: f32[16,256], index: 7, kind: input, shape index: {}]
  %s8 = inlined_call_operand.vmem [shape: bf16[256,128], index: 8, kind: input, shape index: {}]
  %s9 = inlined_call_operand.vmem [shape: f32[1,32], index: 9, kind: input, shape index: {}]
  %s10 = inlined_call_operand.vmem [shape: f32[1,32], index: 10, kind: input, shape index: {}]
  %s11 = inlined_call_operand.vmem [shape: f32[128,32], index: 11, kind: input, shape index: {}]
  %s12 = inlined_call_operand.vmem [shape: f32[32,128], index: 12, kind: input, shape index: {}]
  %s13 = inlined_call_operand.vmem [shape: bf16[128,64], index: 13, kind: input, shape index: {}]
  %s14 = inlined_call_operand.vmem [shape: f32[1,64], index: 14, kind: input, shape index: {}]
  %s15 = inlined_call_operand.vmem [shape: f32[1,64], index: 15, kind: input, shape index: {}]
  %s16 = inlined_call_operand.vmem [shape: f32[64,64], index: 16, kind: input, shape index: {}]
  %s17 = inlined_call_operand.vmem [shape: f32[64,64], index: 17, kind: input, shape index: {}]
  %s18 = inlined_call_operand.vmem [shape: bf16[64,1], index: 18, kind: input, shape index: {}]
  %s19 = inlined_call_operand.<no memory space> [shape: f32[1,1], index: 19, kind: input, shape index: {}]
  %s20 = inlined_call_operand.vmem [shape: f32[2,1], index: 20, kind: output, shape index: {}]
  %s21 = sld [smem:[#allocation0]]
  $region94: #{discriminator_forward.1} parent=0
    _
  %s23 = ssub.s32 1, %s21
  %s24 = scalar_select 0, %s23, %s21
  %v25 = vstv %s19
  %26 = vst [vmem:[#allocation2] sm:$0x1] %v25
  $region1: #{discriminator_forward.1} parent=0
    #allocation3 [shape = 'u8[1048576]{0}', space=vmem, size = 0x100000, scoped, tag = 'input window, operand 1, single buffered']
    #allocation4 [shape = 's32[1]{0}', space=sflag, size = 0x4, scoped, tag = 'scoped memory for discriminator_forward.1']
    %27 = vsyncpa [#allocation4], 0
    // Predicated region
    $region2: #{discriminator_forward.1} parent=1 // pred_check
      _
    $region3: #{discriminator_forward.1} parent=1 // pred_check_branch
      %29 = sbr.rel (0) target = $region5
    $region4: #{discriminator_forward.1} parent=1 // pred_region
      _
    $region5: #{discriminator_forward.1} parent=1 // pred_fallthru
      _
    // Predicated region
    $region6: #{discriminator_forward.1} parent=1 // pred_check
      _
    $region7: #{discriminator_forward.1} parent=1 // pred_check_branch
      %31 = sbr.rel (0) target = $region9
    $region8: #{discriminator_forward.1} parent=1 // pred_region
      %s33 = ssub.s32 32768, 32768
      %34 = vsyncadd [#allocation4], %s33
      %s35 = sshll.u32 [#allocation3], 4
      %s36 = int_to_ptr.vmem [resolvable:$true] %s35
      %41 = dma.hbm_to_vmem [thread:$0]  %s1, 32768, %s36, [#allocation4], 256, 256, 16
    $region9: #{discriminator_forward.1} parent=1 // pred_fallthru
      _
    // Predicated region
    $region10: #{discriminator_forward.1} parent=1 // pred_check
      _
    $region11: #{discriminator_forward.1} parent=1 // pred_check_branch
      %43 = sbr.rel (0) target = $region13
    $region12: #{discriminator_forward.1} parent=1 // pred_region
      _
    $region13: #{discriminator_forward.1} parent=1 // pred_fallthru
      _
    // Predicated region
    $region14: #{discriminator_forward.1} parent=1 // pred_check
      _
    $region15: #{discriminator_forward.1} parent=1 // pred_check_branch
      %45 = sbr.rel (0) target = $region17
    $region16: #{discriminator_forward.1} parent=1 // pred_region
      _
    $region17: #{discriminator_forward.1} parent=1 // pred_fallthru
      _
    // Predicated region
    $region18: #{discriminator_forward.1} parent=1 // pred_check
      _
    $region19: #{discriminator_forward.1} parent=1 // pred_check_branch
      %47 = sbr.rel (0) target = $region21
    $region20: #{discriminator_forward.1} parent=1 // pred_region
      _
    $region21: #{discriminator_forward.1} parent=1 // pred_fallthru
      _
    // Predicated region
    $region22: #{discriminator_forward.1} parent=1 // pred_check
      _
    $region23: #{discriminator_forward.1} parent=1 // pred_check_branch
      %49 = sbr.rel (0) target = $region25
    $region24: #{discriminator_forward.1} parent=1 // pred_region
      _
    $region25: #{discriminator_forward.1} parent=1 // pred_fallthru
      _
    // Predicated region
    $region26: #{discriminator_forward.1} parent=1 // pred_check
      _
    $region27: #{discriminator_forward.1} parent=1 // pred_check_branch
      %51 = sbr.rel (0) target = $region29
    $region28: #{discriminator_forward.1} parent=1 // pred_region
      _
    $region29: #{discriminator_forward.1} parent=1 // pred_fallthru
      _
    // Predicated region
    $region30: #{discriminator_forward.1} parent=1 // pred_check
      _
    $region31: #{discriminator_forward.1} parent=1 // pred_check_branch
      %53 = sbr.rel (0) target = $region33
    $region32: #{discriminator_forward.1} parent=1 // pred_region
      _
    $region33: #{discriminator_forward.1} parent=1 // pred_fallthru
      _
    // Predicated region
    $region34: #{discriminator_forward.1} parent=1 // pred_check
      _
    $region35: #{discriminator_forward.1} parent=1 // pred_check_branch
      %55 = sbr.rel (0) target = $region37
    $region36: #{discriminator_forward.1} parent=1 // pred_region
      _
    $region37: #{discriminator_forward.1} parent=1 // pred_fallthru
      _
    // Predicated region
    $region38: #{discriminator_forward.1} parent=1 // pred_check
      _
    $region39: #{discriminator_forward.1} parent=1 // pred_check_branch
      %57 = sbr.rel (0) target = $region41
    $region40: #{discriminator_forward.1} parent=1 // pred_region
      _
    $region41: #{discriminator_forward.1} parent=1 // pred_fallthru
      _
    // Predicated region
    $region42: #{discriminator_forward.1} parent=1 // pred_check
      _
    $region43: #{discriminator_forward.1} parent=1 // pred_check_branch
      %59 = sbr.rel (0) target = $region45
    $region44: #{discriminator_forward.1} parent=1 // pred_region
      _
    $region45: #{discriminator_forward.1} parent=1 // pred_fallthru
      _
    // Predicated region
    $region46: #{discriminator_forward.1} parent=1 // pred_check
      _
    $region47: #{discriminator_forward.1} parent=1 // pred_check_branch
      %61 = sbr.rel (0) target = $region49
    $region48: #{discriminator_forward.1} parent=1 // pred_region
      _
    $region49: #{discriminator_forward.1} parent=1 // pred_fallthru
      _
    // Predicated region
    $region50: #{discriminator_forward.1} parent=1 // pred_check
      _
    $region51: #{discriminator_forward.1} parent=1 // pred_check_branch
      %63 = sbr.rel (0) target = $region53
    $region52: #{discriminator_forward.1} parent=1 // pred_region
      _
    $region53: #{discriminator_forward.1} parent=1 // pred_fallthru
      _
    // Predicated region
    $region54: #{discriminator_forward.1} parent=1 // pred_check
      _
    $region55: #{discriminator_forward.1} parent=1 // pred_check_branch
      %65 = sbr.rel (0) target = $region57
    $region56: #{discriminator_forward.1} parent=1 // pred_region
      _
    $region57: #{discriminator_forward.1} parent=1 // pred_fallthru
      _
    // Predicated region
    $region58: #{discriminator_forward.1} parent=1 // pred_check
      _
    $region59: #{discriminator_forward.1} parent=1 // pred_check_branch
      %67 = sbr.rel (0) target = $region61
    $region60: #{discriminator_forward.1} parent=1 // pred_region
      _
    $region61: #{discriminator_forward.1} parent=1 // pred_fallthru
      _
    // Predicated region
    $region62: #{discriminator_forward.1} parent=1 // pred_check
      _
    $region63: #{discriminator_forward.1} parent=1 // pred_check_branch
      %69 = sbr.rel (0) target = $region65
    $region64: #{discriminator_forward.1} parent=1 // pred_region
      _
    $region65: #{discriminator_forward.1} parent=1 // pred_fallthru
      _
    // Predicated region
    $region66: #{discriminator_forward.1} parent=1 // pred_check
      _
    $region67: #{discriminator_forward.1} parent=1 // pred_check_branch
      %71 = sbr.rel (0) target = $region69
    $region68: #{discriminator_forward.1} parent=1 // pred_region
      _
    $region69: #{discriminator_forward.1} parent=1 // pred_fallthru
      _
    // Predicated region
    $region70: #{discriminator_forward.1} parent=1 // pred_check
      _
    $region71: #{discriminator_forward.1} parent=1 // pred_check_branch
      %73 = sbr.rel (0) target = $region73
    $region72: #{discriminator_forward.1} parent=1 // pred_region
      _
    $region73: #{discriminator_forward.1} parent=1 // pred_fallthru
      _
    // Predicated region
    $region74: #{discriminator_forward.1} parent=1 // pred_check
      _
    $region75: #{discriminator_forward.1} parent=1 // pred_check_branch
      %75 = sbr.rel (0) target = $region77
    $region76: #{discriminator_forward.1} parent=1 // pred_region
      _
    $region77: #{discriminator_forward.1} parent=1 // pred_fallthru
      _
    // Predicated region
    $region78: #{discriminator_forward.1} parent=1 // pred_check
      _
    $region79: #{discriminator_forward.1} parent=1 // pred_check_branch
      %77 = sbr.rel (0) target = $region81
    $region80: #{discriminator_forward.1} parent=1 // pred_region
      _
    $region81: #{discriminator_forward.1} parent=1 // pred_fallthru
      _
    // Predicated region
    $region82: #{discriminator_forward.1} parent=1 // pred_check
      _
    $region83: #{discriminator_forward.1} parent=1 // pred_check_branch
      %79 = sbr.rel (0) target = $region85
    $region84: #{discriminator_forward.1} parent=1 // pred_region
      %80 = dma.done [#allocation4], 32768
    $region85: #{discriminator_forward.1} parent=1 // pred_fallthru
      _
    %v82 = vld [vmem:[%s0] sm:$0xff]
    %v83 = vld [vmem:[#allocation3] sm:$0xff]
    %v84 = vld [vmem:[#allocation3 + $0x8] sm:$0xff]
    %v85 = vld [vmem:[#allocation3 + $0x10] sm:$0xff]
    %v86 = vld [vmem:[#allocation3 + $0x18] sm:$0xff]
    %v87 = vld [vmem:[#allocation3 + $0x20] sm:$0xff]
    %v88 = vld [vmem:[#allocation3 + $0x28] sm:$0xff]
    %v89 = vld [vmem:[#allocation3 + $0x30] sm:$0xff]
    %v90 = vld [vmem:[#allocation3 + $0x38] sm:$0xff]
    %v91 = vld [vmem:[#allocation3 + $0x40] sm:$0xff]
    %v92 = vld [vmem:[#allocation3 + $0x48] sm:$0xff]
    %v93 = vld [vmem:[#allocation3 + $0x50] sm:$0xff]
    %v94 = vld [vmem:[#allocation3 + $0x58] sm:$0xff]
    %v95 = vld [vmem:[#allocation3 + $0x60] sm:$0xff]
    %v96 = vld [vmem:[#allocation3 + $0x68] sm:$0xff]
    %v97 = vld [vmem:[#allocation3 + $0x70] sm:$0xff]
    %v98 = vld [vmem:[#allocation3 + $0x78] sm:$0xff]
    %v99 = vld [vmem:[#allocation3 + $0x80] sm:$0xff]
    %v100 = vld [vmem:[#allocation3 + $0x88] sm:$0xff]
    %v101 = vld [vmem:[#allocation3 + $0x90] sm:$0xff]
    %v102 = vld [vmem:[#allocation3 + $0x98] sm:$0xff]
    %v103 = vld [vmem:[#allocation3 + $0xa0] sm:$0xff]
    %v104 = vld [vmem:[#allocation3 + $0xa8] sm:$0xff]
    %v105 = vld [vmem:[#allocation3 + $0xb0] sm:$0xff]
    %v106 = vld [vmem:[#allocation3 + $0xb8] sm:$0xff]
    %v107 = vld [vmem:[#allocation3 + $0xc0] sm:$0xff]
    %v108 = vld [vmem:[#allocation3 + $0xc8] sm:$0xff]
    %v109 = vld [vmem:[#allocation3 + $0xd0] sm:$0xff]
    %v110 = vld [vmem:[#allocation3 + $0xd8] sm:$0xff]
    %v111 = vld [vmem:[#allocation3 + $0xe0] sm:$0xff]
    %v112 = vld [vmem:[#allocation3 + $0xe8] sm:$0xff]
    %v113 = vld [vmem:[#allocation3 + $0xf0] sm:$0xff]
    %v114 = vld [vmem:[#allocation3 + $0xf8] sm:$0xff]
    %v115 = vld [vmem:[#allocation3 + $0x100] sm:$0xff]
    %v116 = vld [vmem:[#allocation3 + $0x108] sm:$0xff]
    %v117 = vld [vmem:[#allocation3 + $0x110] sm:$0xff]
    %v118 = vld [vmem:[#allocation3 + $0x118] sm:$0xff]
    %v119 = vld [vmem:[#allocation3 + $0x120] sm:$0xff]
    %v120 = vld [vmem:[#allocation3 + $0x128] sm:$0xff]
    %v121 = vld [vmem:[#allocation3 + $0x130] sm:$0xff]
    %v122 = vld [vmem:[#allocation3 + $0x138] sm:$0xff]
    %v123 = vld [vmem:[#allocation3 + $0x140] sm:$0xff]
    %v124 = vld [vmem:[#allocation3 + $0x148] sm:$0xff]
    %v125 = vld [vmem:[#allocation3 + $0x150] sm:$0xff]
    %v126 = vld [vmem:[#allocation3 + $0x158] sm:$0xff]
    %v127 = vld [vmem:[#allocation3 + $0x160] sm:$0xff]
    %v128 = vld [vmem:[#allocation3 + $0x168] sm:$0xff]
    %v129 = vld [vmem:[#allocation3 + $0x170] sm:$0xff]
    %v130 = vld [vmem:[#allocation3 + $0x178] sm:$0xff]
    %v131 = vld [vmem:[#allocation3 + $0x180] sm:$0xff]
    %v132 = vld [vmem:[#allocation3 + $0x188] sm:$0xff]
    %v133 = vld [vmem:[#allocation3 + $0x190] sm:$0xff]
    %v134 = vld [vmem:[#allocation3 + $0x198] sm:$0xff]
    %v135 = vld [vmem:[#allocation3 + $0x1a0] sm:$0xff]
    %v136 = vld [vmem:[#allocation3 + $0x1a8] sm:$0xff]
    %v137 = vld [vmem:[#allocation3 + $0x1b0] sm:$0xff]
    %v138 = vld [vmem:[#allocation3 + $0x1b8] sm:$0xff]
    %v139 = vld [vmem:[#allocation3 + $0x1c0] sm:$0xff]
    %v140 = vld [vmem:[#allocation3 + $0x1c8] sm:$0xff]
    %v141 = vld [vmem:[#allocation3 + $0x1d0] sm:$0xff]
    %v142 = vld [vmem:[#allocation3 + $0x1d8] sm:$0xff]
    %v143 = vld [vmem:[#allocation3 + $0x1e0] sm:$0xff]
    %v144 = vld [vmem:[#allocation3 + $0x1e8] sm:$0xff]
    %v145 = vld [vmem:[#allocation3 + $0x1f0] sm:$0xff]
    %v146 = vld [vmem:[#allocation3 + $0x1f8] sm:$0xff]
    %v147 = vld [vmem:[#allocation3 + $0x200] sm:$0xff]
    %v148 = vld [vmem:[#allocation3 + $0x208] sm:$0xff]
    %v149 = vld [vmem:[#allocation3 + $0x210] sm:$0xff]
    %v150 = vld [vmem:[#allocation3 + $0x218] sm:$0xff]
    %v151 = vld [vmem:[#allocation3 + $0x220] sm:$0xff]
    %v152 = vld [vmem:[#allocation3 + $0x228] sm:$0xff]
    %v153 = vld [vmem:[#allocation3 + $0x230] sm:$0xff]
    %v154 = vld [vmem:[#allocation3 + $0x238] sm:$0xff]
    %v155 = vld [vmem:[#allocation3 + $0x240] sm:$0xff]
    %v156 = vld [vmem:[#allocation3 + $0x248] sm:$0xff]
    %v157 = vld [vmem:[#allocation3 + $0x250] sm:$0xff]
    %v158 = vld [vmem:[#allocation3 + $0x258] sm:$0xff]
    %v159 = vld [vmem:[#allocation3 + $0x260] sm:$0xff]
    %v160 = vld [vmem:[#allocation3 + $0x268] sm:$0xff]
    %v161 = vld [vmem:[#allocation3 + $0x270] sm:$0xff]
    %v162 = vld [vmem:[#allocation3 + $0x278] sm:$0xff]
    %v163 = vld [vmem:[#allocation3 + $0x280] sm:$0xff]
    %v164 = vld [vmem:[#allocation3 + $0x288] sm:$0xff]
    %v165 = vld [vmem:[#allocation3 + $0x290] sm:$0xff]
    %v166 = vld [vmem:[#allocation3 + $0x298] sm:$0xff]
    %v167 = vld [vmem:[#allocation3 + $0x2a0] sm:$0xff]
    %v168 = vld [vmem:[#allocation3 + $0x2a8] sm:$0xff]
    %v169 = vld [vmem:[#allocation3 + $0x2b0] sm:$0xff]
    %v170 = vld [vmem:[#allocation3 + $0x2b8] sm:$0xff]
    %v171 = vld [vmem:[#allocation3 + $0x2c0] sm:$0xff]
    %v172 = vld [vmem:[#allocation3 + $0x2c8] sm:$0xff]
    %v173 = vld [vmem:[#allocation3 + $0x2d0] sm:$0xff]
    %v174 = vld [vmem:[#allocation3 + $0x2d8] sm:$0xff]
    %v175 = vld [vmem:[#allocation3 + $0x2e0] sm:$0xff]
    %v176 = vld [vmem:[#allocation3 + $0x2e8] sm:$0xff]
    %v177 = vld [vmem:[#allocation3 + $0x2f0] sm:$0xff]
    %v178 = vld [vmem:[#allocation3 + $0x2f8] sm:$0xff]
    %v179 = vld [vmem:[#allocation3 + $0x300] sm:$0xff]
    %v180 = vld [vmem:[#allocation3 + $0x308] sm:$0xff]
    %v181 = vld [vmem:[#allocation3 + $0x310] sm:$0xff]
    %v182 = vld [vmem:[#allocation3 + $0x318] sm:$0xff]
    %v183 = vld [vmem:[#allocation3 + $0x320] sm:$0xff]
    %v184 = vld [vmem:[#allocation3 + $0x328] sm:$0xff]
    %v185 = vld [vmem:[#allocation3 + $0x330] sm:$0xff]
    %v186 = vld [vmem:[#allocation3 + $0x338] sm:$0xff]
    %v187 = vld [vmem:[#allocation3 + $0x340] sm:$0xff]
    %v188 = vld [vmem:[#allocation3 + $0x348] sm:$0xff]
    %v189 = vld [vmem:[#allocation3 + $0x350] sm:$0xff]
    %v190 = vld [vmem:[#allocation3 + $0x358] sm:$0xff]
    %v191 = vld [vmem:[#allocation3 + $0x360] sm:$0xff]
    %v192 = vld [vmem:[#allocation3 + $0x368] sm:$0xff]
    %v193 = vld [vmem:[#allocation3 + $0x370] sm:$0xff]
    %v194 = vld [vmem:[#allocation3 + $0x378] sm:$0xff]
    %v195 = vld [vmem:[#allocation3 + $0x380] sm:$0xff]
    %v196 = vld [vmem:[#allocation3 + $0x388] sm:$0xff]
    %v197 = vld [vmem:[#allocation3 + $0x390] sm:$0xff]
    %v198 = vld [vmem:[#allocation3 + $0x398] sm:$0xff]
    %v199 = vld [vmem:[#allocation3 + $0x3a0] sm:$0xff]
    %v200 = vld [vmem:[#allocation3 + $0x3a8] sm:$0xff]
    %v201 = vld [vmem:[#allocation3 + $0x3b0] sm:$0xff]
    %v202 = vld [vmem:[#allocation3 + $0x3b8] sm:$0xff]
    %v203 = vld [vmem:[#allocation3 + $0x3c0] sm:$0xff]
    %v204 = vld [vmem:[#allocation3 + $0x3c8] sm:$0xff]
    %v205 = vld [vmem:[#allocation3 + $0x3d0] sm:$0xff]
    %v206 = vld [vmem:[#allocation3 + $0x3d8] sm:$0xff]
    %v207 = vld [vmem:[#allocation3 + $0x3e0] sm:$0xff]
    %v208 = vld [vmem:[#allocation3 + $0x3e8] sm:$0xff]
    %v209 = vld [vmem:[#allocation3 + $0x3f0] sm:$0xff]
    %v210 = vld [vmem:[#allocation3 + $0x3f8] sm:$0xff]
    %v211 = vld [vmem:[#allocation3 + $0x400] sm:$0xff]
    %v212 = vld [vmem:[#allocation3 + $0x408] sm:$0xff]
    %v213 = vld [vmem:[#allocation3 + $0x410] sm:$0xff]
    %v214 = vld [vmem:[#allocation3 + $0x418] sm:$0xff]
    %v215 = vld [vmem:[#allocation3 + $0x420] sm:$0xff]
    %v216 = vld [vmem:[#allocation3 + $0x428] sm:$0xff]
    %v217 = vld [vmem:[#allocation3 + $0x430] sm:$0xff]
    %v218 = vld [vmem:[#allocation3 + $0x438] sm:$0xff]
    %v219 = vld [vmem:[#allocation3 + $0x440] sm:$0xff]
    %v220 = vld [vmem:[#allocation3 + $0x448] sm:$0xff]
    %v221 = vld [vmem:[#allocation3 + $0x450] sm:$0xff]
    %v222 = vld [vmem:[#allocation3 + $0x458] sm:$0xff]
    %v223 = vld [vmem:[#allocation3 + $0x460] sm:$0xff]
    %v224 = vld [vmem:[#allocation3 + $0x468] sm:$0xff]
    %v225 = vld [vmem:[#allocation3 + $0x470] sm:$0xff]
    %v226 = vld [vmem:[#allocation3 + $0x478] sm:$0xff]
    %v227 = vld [vmem:[#allocation3 + $0x480] sm:$0xff]
    %v228 = vld [vmem:[#allocation3 + $0x488] sm:$0xff]
    %v229 = vld [vmem:[#allocation3 + $0x490] sm:$0xff]
    %v230 = vld [vmem:[#allocation3 + $0x498] sm:$0xff]
    %v231 = vld [vmem:[#allocation3 + $0x4a0] sm:$0xff]
    %v232 = vld [vmem:[#allocation3 + $0x4a8] sm:$0xff]
    %v233 = vld [vmem:[#allocation3 + $0x4b0] sm:$0xff]
    %v234 = vld [vmem:[#allocation3 + $0x4b8] sm:$0xff]
    %v235 = vld [vmem:[#allocation3 + $0x4c0] sm:$0xff]
    %v236 = vld [vmem:[#allocation3 + $0x4c8] sm:$0xff]
    %v237 = vld [vmem:[#allocation3 + $0x4d0] sm:$0xff]
    %v238 = vld [vmem:[#allocation3 + $0x4d8] sm:$0xff]
    %v239 = vld [vmem:[#allocation3 + $0x4e0] sm:$0xff]
    %v240 = vld [vmem:[#allocation3 + $0x4e8] sm:$0xff]
    %v241 = vld [vmem:[#allocation3 + $0x4f0] sm:$0xff]
    %v242 = vld [vmem:[#allocation3 + $0x4f8] sm:$0xff]
    %v243 = vld [vmem:[#allocation3 + $0x500] sm:$0xff]
    %v244 = vld [vmem:[#allocation3 + $0x508] sm:$0xff]
    %v245 = vld [vmem:[#allocation3 + $0x510] sm:$0xff]
    %v246 = vld [vmem:[#allocation3 + $0x518] sm:$0xff]
    %v247 = vld [vmem:[#allocation3 + $0x520] sm:$0xff]
    %v248 = vld [vmem:[#allocation3 + $0x528] sm:$0xff]
    %v249 = vld [vmem:[#allocation3 + $0x530] sm:$0xff]
    %v250 = vld [vmem:[#allocation3 + $0x538] sm:$0xff]
    %v251 = vld [vmem:[#allocation3 + $0x540] sm:$0xff]
    %v252 = vld [vmem:[#allocation3 + $0x548] sm:$0xff]
    %v253 = vld [vmem:[#allocation3 + $0x550] sm:$0xff]
    %v254 = vld [vmem:[#allocation3 + $0x558] sm:$0xff]
    %v255 = vld [vmem:[#allocation3 + $0x560] sm:$0xff]
    %v256 = vld [vmem:[#allocation3 + $0x568] sm:$0xff]
    %v257 = vld [vmem:[#allocation3 + $0x570] sm:$0xff]
    %v258 = vld [vmem:[#allocation3 + $0x578] sm:$0xff]
    %v259 = vld [vmem:[#allocation3 + $0x580] sm:$0xff]
    %v260 = vld [vmem:[#allocation3 + $0x588] sm:$0xff]
    %v261 = vld [vmem:[#allocation3 + $0x590] sm:$0xff]
    %v262 = vld [vmem:[#allocation3 + $0x598] sm:$0xff]
    %v263 = vld [vmem:[#allocation3 + $0x5a0] sm:$0xff]
    %v264 = vld [vmem:[#allocation3 + $0x5a8] sm:$0xff]
    %v265 = vld [vmem:[#allocation3 + $0x5b0] sm:$0xff]
    %v266 = vld [vmem:[#allocation3 + $0x5b8] sm:$0xff]
    %v267 = vld [vmem:[#allocation3 + $0x5c0] sm:$0xff]
    %v268 = vld [vmem:[#allocation3 + $0x5c8] sm:$0xff]
    %v269 = vld [vmem:[#allocation3 + $0x5d0] sm:$0xff]
    %v270 = vld [vmem:[#allocation3 + $0x5d8] sm:$0xff]
    %v271 = vld [vmem:[#allocation3 + $0x5e0] sm:$0xff]
    %v272 = vld [vmem:[#allocation3 + $0x5e8] sm:$0xff]
    %v273 = vld [vmem:[#allocation3 + $0x5f0] sm:$0xff]
    %v274 = vld [vmem:[#allocation3 + $0x5f8] sm:$0xff]
    %v275 = vld [vmem:[#allocation3 + $0x600] sm:$0xff]
    %v276 = vld [vmem:[#allocation3 + $0x608] sm:$0xff]
    %v277 = vld [vmem:[#allocation3 + $0x610] sm:$0xff]
    %v278 = vld [vmem:[#allocation3 + $0x618] sm:$0xff]
    %v279 = vld [vmem:[#allocation3 + $0x620] sm:$0xff]
    %v280 = vld [vmem:[#allocation3 + $0x628] sm:$0xff]
    %v281 = vld [vmem:[#allocation3 + $0x630] sm:$0xff]
    %v282 = vld [vmem:[#allocation3 + $0x638] sm:$0xff]
    %v283 = vld [vmem:[#allocation3 + $0x640] sm:$0xff]
    %v284 = vld [vmem:[#allocation3 + $0x648] sm:$0xff]
    %v285 = vld [vmem:[#allocation3 + $0x650] sm:$0xff]
    %v286 = vld [vmem:[#allocation3 + $0x658] sm:$0xff]
    %v287 = vld [vmem:[#allocation3 + $0x660] sm:$0xff]
    %v288 = vld [vmem:[#allocation3 + $0x668] sm:$0xff]
    %v289 = vld [vmem:[#allocation3 + $0x670] sm:$0xff]
    %v290 = vld [vmem:[#allocation3 + $0x678] sm:$0xff]
    %v291 = vld [vmem:[#allocation3 + $0x680] sm:$0xff]
    %v292 = vld [vmem:[#allocation3 + $0x688] sm:$0xff]
    %v293 = vld [vmem:[#allocation3 + $0x690] sm:$0xff]
    %v294 = vld [vmem:[#allocation3 + $0x698] sm:$0xff]
    %v295 = vld [vmem:[#allocation3 + $0x6a0] sm:$0xff]
    %v296 = vld [vmem:[#allocation3 + $0x6a8] sm:$0xff]
    %v297 = vld [vmem:[#allocation3 + $0x6b0] sm:$0xff]
    %v298 = vld [vmem:[#allocation3 + $0x6b8] sm:$0xff]
    %v299 = vld [vmem:[#allocation3 + $0x6c0] sm:$0xff]
    %v300 = vld [vmem:[#allocation3 + $0x6c8] sm:$0xff]
    %v301 = vld [vmem:[#allocation3 + $0x6d0] sm:$0xff]
    %v302 = vld [vmem:[#allocation3 + $0x6d8] sm:$0xff]
    %v303 = vld [vmem:[#allocation3 + $0x6e0] sm:$0xff]
    %v304 = vld [vmem:[#allocation3 + $0x6e8] sm:$0xff]
    %v305 = vld [vmem:[#allocation3 + $0x6f0] sm:$0xff]
    %v306 = vld [vmem:[#allocation3 + $0x6f8] sm:$0xff]
    %v307 = vld [vmem:[#allocation3 + $0x700] sm:$0xff]
    %v308 = vld [vmem:[#allocation3 + $0x708] sm:$0xff]
    %v309 = vld [vmem:[#allocation3 + $0x710] sm:$0xff]
    %v310 = vld [vmem:[#allocation3 + $0x718] sm:$0xff]
    %v311 = vld [vmem:[#allocation3 + $0x720] sm:$0xff]
    %v312 = vld [vmem:[#allocation3 + $0x728] sm:$0xff]
    %v313 = vld [vmem:[#allocation3 + $0x730] sm:$0xff]
    %v314 = vld [vmem:[#allocation3 + $0x738] sm:$0xff]
    %v315 = vld [vmem:[#allocation3 + $0x740] sm:$0xff]
    %v316 = vld [vmem:[#allocation3 + $0x748] sm:$0xff]
    %v317 = vld [vmem:[#allocation3 + $0x750] sm:$0xff]
    %v318 = vld [vmem:[#allocation3 + $0x758] sm:$0xff]
    %v319 = vld [vmem:[#allocation3 + $0x760] sm:$0xff]
    %v320 = vld [vmem:[#allocation3 + $0x768] sm:$0xff]
    %v321 = vld [vmem:[#allocation3 + $0x770] sm:$0xff]
    %v322 = vld [vmem:[#allocation3 + $0x778] sm:$0xff]
    %v323 = vld [vmem:[#allocation3 + $0x780] sm:$0xff]
    %v324 = vld [vmem:[#allocation3 + $0x788] sm:$0xff]
    %v325 = vld [vmem:[#allocation3 + $0x790] sm:$0xff]
    %v326 = vld [vmem:[#allocation3 + $0x798] sm:$0xff]
    %v327 = vld [vmem:[#allocation3 + $0x7a0] sm:$0xff]
    %v328 = vld [vmem:[#allocation3 + $0x7a8] sm:$0xff]
    %v329 = vld [vmem:[#allocation3 + $0x7b0] sm:$0xff]
    %v330 = vld [vmem:[#allocation3 + $0x7b8] sm:$0xff]
    %v331 = vld [vmem:[#allocation3 + $0x7c0] sm:$0xff]
    %v332 = vld [vmem:[#allocation3 + $0x7c8] sm:$0xff]
    %v333 = vld [vmem:[#allocation3 + $0x7d0] sm:$0xff]
    %v334 = vld [vmem:[#allocation3 + $0x7d8] sm:$0xff]
    %v335 = vld [vmem:[#allocation3 + $0x7e0] sm:$0xff]
    %v336 = vld [vmem:[#allocation3 + $0x7e8] sm:$0xff]
    %v337 = vld [vmem:[#allocation3 + $0x7f0] sm:$0xff]
    %v338 = vld [vmem:[#allocation3 + $0x7f8] sm:$0xff]
    %v339 = vld [vmem:[%s2] sm:$0xf]
    %v341 = vlaneseq
    %v342 = vshrl.u32 %v341, 7
    %v343 = vsub.s32 0, %v342
    %v344 = vrot.slane %v339, %v343
    %v345 = vlaneseq
    %v346 = vshrl.u32 %v345, 7
    %v347 = vsub.s32 1, %v346
    %v348 = vrot.slane %v339, %v347
    %v349 = vlaneseq
    %v350 = vshrl.u32 %v349, 7
    %v351 = vsub.s32 2, %v350
    %v352 = vrot.slane %v339, %v351
    %v353 = vlaneseq
    %v354 = vshrl.u32 %v353, 7
    %v355 = vsub.s32 3, %v354
    %v356 = vrot.slane %v339, %v355
    %v362 = vcombine.high %v82, %v82
    %v364 = vunpack.c.l.s4 1966171168
    %v365 = vunpack.c.0.s8 %v364
    %v366 = vlaneseq
    %v367 = vshrl.u32 %v366, 7
    %v368 = vsub.s32 %v365, %v367
    %v369 = vrot.slane %v82, %v368
    %v371 = vunpack.c.l.s4 1966171168
    %v372 = vunpack.c.0.s8 %v371
    %v373 = vlaneseq
    %v374 = vshrl.u32 %v373, 7
    %v375 = vsub.s32 %v372, %v374
    %v376 = vrot.slane %v362, %v375
    %v377 = vcombine.high %v369, %v369
    %v378 = vcombine.high %v376, %v376
    %v380 = vunpack.c.l.s4 1966171168
    %v381 = vunpack.c.0.s8 %v380
    %v382 = vlaneseq
    %v383 = vshrl.u32 %v382, 7
    %v384 = vsub.s32 %v381, %v383
    %v385 = vrot.slane %v369, %v384
    %v387 = vunpack.c.l.s4 1966171168
    %v388 = vunpack.c.0.s8 %v387
    %v389 = vlaneseq
    %v390 = vshrl.u32 %v389, 7
    %v391 = vsub.s32 %v388, %v390
    %v392 = vrot.slane %v376, %v391
    %v394 = vunpack.c.l.s4 1966171168
    %v395 = vunpack.c.0.s8 %v394
    %v396 = vlaneseq
    %v397 = vshrl.u32 %v396, 7
    %v398 = vsub.s32 %v395, %v397
    %v399 = vrot.slane %v377, %v398
    %v401 = vunpack.c.l.s4 1966171168
    %v402 = vunpack.c.0.s8 %v401
    %v403 = vlaneseq
    %v404 = vshrl.u32 %v403, 7
    %v405 = vsub.s32 %v402, %v404
    %v406 = vrot.slane %v378, %v405
    %v407 = vcombine.high %v385, %v385
    %v408 = vcombine.high %v392, %v392
    %v409 = vcombine.high %v399, %v399
    %v410 = vcombine.high %v406, %v406
    %v675 = vunpack.c.l.b16 %v83
    %v676 = vunpack.c.h.b16 %v83
    %v677 = vunpack.c.l.b16 %v84
    %v678 = vunpack.c.h.b16 %v84
    %v679 = vunpack.c.l.b16 %v85
    %v680 = vunpack.c.h.b16 %v85
    %v681 = vunpack.c.l.b16 %v86
    %v682 = vunpack.c.h.b16 %v86
    %v683 = vunpack.c.l.b16 %v87
    %v684 = vunpack.c.h.b16 %v87
    %v685 = vunpack.c.l.b16 %v88
    %v686 = vunpack.c.h.b16 %v88
    %v687 = vunpack.c.l.b16 %v89
    %v688 = vunpack.c.h.b16 %v89
    %v689 = vunpack.c.l.b16 %v90
    %v690 = vunpack.c.h.b16 %v90
    %v691 = vunpack.c.l.b16 %v91
    %v692 = vunpack.c.h.b16 %v91
    %v693 = vunpack.c.l.b16 %v92
    %v694 = vunpack.c.h.b16 %v92
    %v695 = vunpack.c.l.b16 %v93
    %v696 = vunpack.c.h.b16 %v93
    %v697 = vunpack.c.l.b16 %v94
    %v698 = vunpack.c.h.b16 %v94
    %v699 = vunpack.c.l.b16 %v95
    %v700 = vunpack.c.h.b16 %v95
    %v701 = vunpack.c.l.b16 %v96
    %v702 = vunpack.c.h.b16 %v96
    %v703 = vunpack.c.l.b16 %v97
    %v704 = vunpack.c.h.b16 %v97
    %v705 = vunpack.c.l.b16 %v98
    %v706 = vunpack.c.h.b16 %v98
    %v707 = vunpack.c.l.b16 %v99
    %v708 = vunpack.c.h.b16 %v99
    %v709 = vunpack.c.l.b16 %v100
    %v710 = vunpack.c.h.b16 %v100
    %v711 = vunpack.c.l.b16 %v101
    %v712 = vunpack.c.h.b16 %v101
    %v713 = vunpack.c.l.b16 %v102
    %v714 = vunpack.c.h.b16 %v102
    %v715 = vunpack.c.l.b16 %v103
    %v716 = vunpack.c.h.b16 %v103
    %v717 = vunpack.c.l.b16 %v104
    %v718 = vunpack.c.h.b16 %v104
    %v719 = vunpack.c.l.b16 %v105
    %v720 = vunpack.c.h.b16 %v105
    %v721 = vunpack.c.l.b16 %v106
    %v722 = vunpack.c.h.b16 %v106
    %v723 = vunpack.c.l.b16 %v107
    %v724 = vunpack.c.h.b16 %v107
    %v725 = vunpack.c.l.b16 %v108
    %v726 = vunpack.c.h.b16 %v108
    %v727 = vunpack.c.l.b16 %v109
    %v728 = vunpack.c.h.b16 %v109
    %v729 = vunpack.c.l.b16 %v110
    %v730 = vunpack.c.h.b16 %v110
    %v731 = vunpack.c.l.b16 %v111
    %v732 = vunpack.c.h.b16 %v111
    %v733 = vunpack.c.l.b16 %v112
    %v734 = vunpack.c.h.b16 %v112
    %v735 = vunpack.c.l.b16 %v113
    %v736 = vunpack.c.h.b16 %v113
    %v737 = vunpack.c.l.b16 %v114
    %v738 = vunpack.c.h.b16 %v114
    %v739 = vunpack.c.l.b16 %v115
    %v740 = vunpack.c.h.b16 %v115
    %v741 = vunpack.c.l.b16 %v116
    %v742 = vunpack.c.h.b16 %v116
    %v743 = vunpack.c.l.b16 %v117
    %v744 = vunpack.c.h.b16 %v117
    %v745 = vunpack.c.l.b16 %v118
    %v746 = vunpack.c.h.b16 %v118
    %v747 = vunpack.c.l.b16 %v119
    %v748 = vunpack.c.h.b16 %v119
    %v749 = vunpack.c.l.b16 %v120
    %v750 = vunpack.c.h.b16 %v120
    %v751 = vunpack.c.l.b16 %v121
    %v752 = vunpack.c.h.b16 %v121
    %v753 = vunpack.c.l.b16 %v122
    %v754 = vunpack.c.h.b16 %v122
    %v755 = vunpack.c.l.b16 %v123
    %v756 = vunpack.c.h.b16 %v123
    %v757 = vunpack.c.l.b16 %v124
    %v758 = vunpack.c.h.b16 %v124
    %v759 = vunpack.c.l.b16 %v125
    %v760 = vunpack.c.h.b16 %v125
    %v761 = vunpack.c.l.b16 %v126
    %v762 = vunpack.c.h.b16 %v126
    %v763 = vunpack.c.l.b16 %v127
    %v764 = vunpack.c.h.b16 %v127
    %v765 = vunpack.c.l.b16 %v128
    %v766 = vunpack.c.h.b16 %v128
    %v767 = vunpack.c.l.b16 %v129
    %v768 = vunpack.c.h.b16 %v129
    %v769 = vunpack.c.l.b16 %v130
    %v770 = vunpack.c.h.b16 %v130
    %v771 = vunpack.c.l.b16 %v131
    %v772 = vunpack.c.h.b16 %v131
    %v773 = vunpack.c.l.b16 %v132
    %v774 = vunpack.c.h.b16 %v132
    %v775 = vunpack.c.l.b16 %v133
    %v776 = vunpack.c.h.b16 %v133
    %v777 = vunpack.c.l.b16 %v134
    %v778 = vunpack.c.h.b16 %v134
    %v779 = vunpack.c.l.b16 %v135
    %v780 = vunpack.c.h.b16 %v135
    %v781 = vunpack.c.l.b16 %v136
    %v782 = vunpack.c.h.b16 %v136
    %v783 = vunpack.c.l.b16 %v137
    %v784 = vunpack.c.h.b16 %v137
    %v785 = vunpack.c.l.b16 %v138
    %v786 = vunpack.c.h.b16 %v138
    %v787 = vunpack.c.l.b16 %v139
    %v788 = vunpack.c.h.b16 %v139
    %v789 = vunpack.c.l.b16 %v140
    %v790 = vunpack.c.h.b16 %v140
    %v791 = vunpack.c.l.b16 %v141
    %v792 = vunpack.c.h.b16 %v141
    %v793 = vunpack.c.l.b16 %v142
    %v794 = vunpack.c.h.b16 %v142
    %v795 = vunpack.c.l.b16 %v143
    %v796 = vunpack.c.h.b16 %v143
    %v797 = vunpack.c.l.b16 %v144
    %v798 = vunpack.c.h.b16 %v144
    %v799 = vunpack.c.l.b16 %v145
    %v800 = vunpack.c.h.b16 %v145
    %v801 = vunpack.c.l.b16 %v146
    %v802 = vunpack.c.h.b16 %v146
    %v803 = vunpack.c.l.b16 %v147
    %v804 = vunpack.c.h.b16 %v147
    %v805 = vunpack.c.l.b16 %v148
    %v806 = vunpack.c.h.b16 %v148
    %v807 = vunpack.c.l.b16 %v149
    %v808 = vunpack.c.h.b16 %v149
    %v809 = vunpack.c.l.b16 %v150
    %v810 = vunpack.c.h.b16 %v150
    %v811 = vunpack.c.l.b16 %v151
    %v812 = vunpack.c.h.b16 %v151
    %v813 = vunpack.c.l.b16 %v152
    %v814 = vunpack.c.h.b16 %v152
    %v815 = vunpack.c.l.b16 %v153
    %v816 = vunpack.c.h.b16 %v153
    %v817 = vunpack.c.l.b16 %v154
    %v818 = vunpack.c.h.b16 %v154
    %v819 = vunpack.c.l.b16 %v155
    %v820 = vunpack.c.h.b16 %v155
    %v821 = vunpack.c.l.b16 %v156
    %v822 = vunpack.c.h.b16 %v156
    %v823 = vunpack.c.l.b16 %v157
    %v824 = vunpack.c.h.b16 %v157
    %v825 = vunpack.c.l.b16 %v158
    %v826 = vunpack.c.h.b16 %v158
    %v827 = vunpack.c.l.b16 %v159
    %v828 = vunpack.c.h.b16 %v159
    %v829 = vunpack.c.l.b16 %v160
    %v830 = vunpack.c.h.b16 %v160
    %v831 = vunpack.c.l.b16 %v161
    %v832 = vunpack.c.h.b16 %v161
    %v833 = vunpack.c.l.b16 %v162
    %v834 = vunpack.c.h.b16 %v162
    %v835 = vunpack.c.l.b16 %v163
    %v836 = vunpack.c.h.b16 %v163
    %v837 = vunpack.c.l.b16 %v164
    %v838 = vunpack.c.h.b16 %v164
    %v839 = vunpack.c.l.b16 %v165
    %v840 = vunpack.c.h.b16 %v165
    %v841 = vunpack.c.l.b16 %v166
    %v842 = vunpack.c.h.b16 %v166
    %v843 = vunpack.c.l.b16 %v167
    %v844 = vunpack.c.h.b16 %v167
    %v845 = vunpack.c.l.b16 %v168
    %v846 = vunpack.c.h.b16 %v168
    %v847 = vunpack.c.l.b16 %v169
    %v848 = vunpack.c.h.b16 %v169
    %v849 = vunpack.c.l.b16 %v170
    %v850 = vunpack.c.h.b16 %v170
    %v851 = vunpack.c.l.b16 %v171
    %v852 = vunpack.c.h.b16 %v171
    %v853 = vunpack.c.l.b16 %v172
    %v854 = vunpack.c.h.b16 %v172
    %v855 = vunpack.c.l.b16 %v173
    %v856 = vunpack.c.h.b16 %v173
    %v857 = vunpack.c.l.b16 %v174
    %v858 = vunpack.c.h.b16 %v174
    %v859 = vunpack.c.l.b16 %v175
    %v860 = vunpack.c.h.b16 %v175
    %v861 = vunpack.c.l.b16 %v176
    %v862 = vunpack.c.h.b16 %v176
    %v863 = vunpack.c.l.b16 %v177
    %v864 = vunpack.c.h.b16 %v177
    %v865 = vunpack.c.l.b16 %v178
    %v866 = vunpack.c.h.b16 %v178
    %v867 = vunpack.c.l.b16 %v179
    %v868 = vunpack.c.h.b16 %v179
    %v869 = vunpack.c.l.b16 %v180
    %v870 = vunpack.c.h.b16 %v180
    %v871 = vunpack.c.l.b16 %v181
    %v872 = vunpack.c.h.b16 %v181
    %v873 = vunpack.c.l.b16 %v182
    %v874 = vunpack.c.h.b16 %v182
    %v875 = vunpack.c.l.b16 %v183
    %v876 = vunpack.c.h.b16 %v183
    %v877 = vunpack.c.l.b16 %v184
    %v878 = vunpack.c.h.b16 %v184
    %v879 = vunpack.c.l.b16 %v185
    %v880 = vunpack.c.h.b16 %v185
    %v881 = vunpack.c.l.b16 %v186
    %v882 = vunpack.c.h.b16 %v186
    %v883 = vunpack.c.l.b16 %v187
    %v884 = vunpack.c.h.b16 %v187
    %v885 = vunpack.c.l.b16 %v188
    %v886 = vunpack.c.h.b16 %v188
    %v887 = vunpack.c.l.b16 %v189
    %v888 = vunpack.c.h.b16 %v189
    %v889 = vunpack.c.l.b16 %v190
    %v890 = vunpack.c.h.b16 %v190
    %v891 = vunpack.c.l.b16 %v191
    %v892 = vunpack.c.h.b16 %v191
    %v893 = vunpack.c.l.b16 %v192
    %v894 = vunpack.c.h.b16 %v192
    %v895 = vunpack.c.l.b16 %v193
    %v896 = vunpack.c.h.b16 %v193
    %v897 = vunpack.c.l.b16 %v194
    %v898 = vunpack.c.h.b16 %v194
    %v899 = vunpack.c.l.b16 %v195
    %v900 = vunpack.c.h.b16 %v195
    %v901 = vunpack.c.l.b16 %v196
    %v902 = vunpack.c.h.b16 %v196
    %v903 = vunpack.c.l.b16 %v197
    %v904 = vunpack.c.h.b16 %v197
    %v905 = vunpack.c.l.b16 %v198
    %v906 = vunpack.c.h.b16 %v198
    %v907 = vunpack.c.l.b16 %v199
    %v908 = vunpack.c.h.b16 %v199
    %v909 = vunpack.c.l.b16 %v200
    %v910 = vunpack.c.h.b16 %v200
    %v911 = vunpack.c.l.b16 %v201
    %v912 = vunpack.c.h.b16 %v201
    %v913 = vunpack.c.l.b16 %v202
    %v914 = vunpack.c.h.b16 %v202
    %v915 = vunpack.c.l.b16 %v203
    %v916 = vunpack.c.h.b16 %v203
    %v917 = vunpack.c.l.b16 %v204
    %v918 = vunpack.c.h.b16 %v204
    %v919 = vunpack.c.l.b16 %v205
    %v920 = vunpack.c.h.b16 %v205
    %v921 = vunpack.c.l.b16 %v206
    %v922 = vunpack.c.h.b16 %v206
    %v923 = vunpack.c.l.b16 %v207
    %v924 = vunpack.c.h.b16 %v207
    %v925 = vunpack.c.l.b16 %v208
    %v926 = vunpack.c.h.b16 %v208
    %v927 = vunpack.c.l.b16 %v209
    %v928 = vunpack.c.h.b16 %v209
    %v929 = vunpack.c.l.b16 %v210
    %v930 = vunpack.c.h.b16 %v210
    %v931 = vunpack.c.l.b16 %v211
    %v932 = vunpack.c.h.b16 %v211
    %v933 = vunpack.c.l.b16 %v212
    %v934 = vunpack.c.h.b16 %v212
    %v935 = vunpack.c.l.b16 %v213
    %v936 = vunpack.c.h.b16 %v213
    %v937 = vunpack.c.l.b16 %v214
    %v938 = vunpack.c.h.b16 %v214
    %v939 = vunpack.c.l.b16 %v215
    %v940 = vunpack.c.h.b16 %v215
    %v941 = vunpack.c.l.b16 %v216
    %v942 = vunpack.c.h.b16 %v216
    %v943 = vunpack.c.l.b16 %v217
    %v944 = vunpack.c.h.b16 %v217
    %v945 = vunpack.c.l.b16 %v218
    %v946 = vunpack.c.h.b16 %v218
    %v947 = vunpack.c.l.b16 %v219
    %v948 = vunpack.c.h.b16 %v219
    %v949 = vunpack.c.l.b16 %v220
    %v950 = vunpack.c.h.b16 %v220
    %v951 = vunpack.c.l.b16 %v221
    %v952 = vunpack.c.h.b16 %v221
    %v953 = vunpack.c.l.b16 %v222
    %v954 = vunpack.c.h.b16 %v222
    %v955 = vunpack.c.l.b16 %v223
    %v956 = vunpack.c.h.b16 %v223
    %v957 = vunpack.c.l.b16 %v224
    %v958 = vunpack.c.h.b16 %v224
    %v959 = vunpack.c.l.b16 %v225
    %v960 = vunpack.c.h.b16 %v225
    %v961 = vunpack.c.l.b16 %v226
    %v962 = vunpack.c.h.b16 %v226
    %v963 = vunpack.c.l.b16 %v227
    %v964 = vunpack.c.h.b16 %v227
    %v965 = vunpack.c.l.b16 %v228
    %v966 = vunpack.c.h.b16 %v228
    %v967 = vunpack.c.l.b16 %v229
    %v968 = vunpack.c.h.b16 %v229
    %v969 = vunpack.c.l.b16 %v230
    %v970 = vunpack.c.h.b16 %v230
    %v971 = vunpack.c.l.b16 %v231
    %v972 = vunpack.c.h.b16 %v231
    %v973 = vunpack.c.l.b16 %v232
    %v974 = vunpack.c.h.b16 %v232
    %v975 = vunpack.c.l.b16 %v233
    %v976 = vunpack.c.h.b16 %v233
    %v977 = vunpack.c.l.b16 %v234
    %v978 = vunpack.c.h.b16 %v234
    %v979 = vunpack.c.l.b16 %v235
    %v980 = vunpack.c.h.b16 %v235
    %v981 = vunpack.c.l.b16 %v236
    %v982 = vunpack.c.h.b16 %v236
    %v983 = vunpack.c.l.b16 %v237
    %v984 = vunpack.c.h.b16 %v237
    %v985 = vunpack.c.l.b16 %v238
    %v986 = vunpack.c.h.b16 %v238
    %v987 = vunpack.c.l.b16 %v239
    %v988 = vunpack.c.h.b16 %v239
    %v989 = vunpack.c.l.b16 %v240
    %v990 = vunpack.c.h.b16 %v240
    %v991 = vunpack.c.l.b16 %v241
    %v992 = vunpack.c.h.b16 %v241
    %v993 = vunpack.c.l.b16 %v242
    %v994 = vunpack.c.h.b16 %v242
    %v995 = vunpack.c.l.b16 %v243
    %v996 = vunpack.c.h.b16 %v243
    %v997 = vunpack.c.l.b16 %v244
    %v998 = vunpack.c.h.b16 %v244
    %v999 = vunpack.c.l.b16 %v245
    %v1000 = vunpack.c.h.b16 %v245
    %v1001 = vunpack.c.l.b16 %v246
    %v1002 = vunpack.c.h.b16 %v246
    %v1003 = vunpack.c.l.b16 %v247
    %v1004 = vunpack.c.h.b16 %v247
    %v1005 = vunpack.c.l.b16 %v248
    %v1006 = vunpack.c.h.b16 %v248
    %v1007 = vunpack.c.l.b16 %v249
    %v1008 = vunpack.c.h.b16 %v249
    %v1009 = vunpack.c.l.b16 %v250
    %v1010 = vunpack.c.h.b16 %v250
    %v1011 = vunpack.c.l.b16 %v251
    %v1012 = vunpack.c.h.b16 %v251
    %v1013 = vunpack.c.l.b16 %v252
    %v1014 = vunpack.c.h.b16 %v252
    %v1015 = vunpack.c.l.b16 %v253
    %v1016 = vunpack.c.h.b16 %v253
    %v1017 = vunpack.c.l.b16 %v254
    %v1018 = vunpack.c.h.b16 %v254
    %v1019 = vunpack.c.l.b16 %v255
    %v1020 = vunpack.c.h.b16 %v255
    %v1021 = vunpack.c.l.b16 %v256
    %v1022 = vunpack.c.h.b16 %v256
    %v1023 = vunpack.c.l.b16 %v257
    %v1024 = vunpack.c.h.b16 %v257
    %v1025 = vunpack.c.l.b16 %v258
    %v1026 = vunpack.c.h.b16 %v258
    %v1027 = vunpack.c.l.b16 %v259
    %v1028 = vunpack.c.h.b16 %v259
    %v1029 = vunpack.c.l.b16 %v260
    %v1030 = vunpack.c.h.b16 %v260
    %v1031 = vunpack.c.l.b16 %v261
    %v1032 = vunpack.c.h.b16 %v261
    %v1033 = vunpack.c.l.b16 %v262
    %v1034 = vunpack.c.h.b16 %v262
    %v1035 = vunpack.c.l.b16 %v263
    %v1036 = vunpack.c.h.b16 %v263
    %v1037 = vunpack.c.l.b16 %v264
    %v1038 = vunpack.c.h.b16 %v264
    %v1039 = vunpack.c.l.b16 %v265
    %v1040 = vunpack.c.h.b16 %v265
    %v1041 = vunpack.c.l.b16 %v266
    %v1042 = vunpack.c.h.b16 %v266
    %v1043 = vunpack.c.l.b16 %v267
    %v1044 = vunpack.c.h.b16 %v267
    %v1045 = vunpack.c.l.b16 %v268
    %v1046 = vunpack.c.h.b16 %v268
    %v1047 = vunpack.c.l.b16 %v269
    %v1048 = vunpack.c.h.b16 %v269
    %v1049 = vunpack.c.l.b16 %v270
    %v1050 = vunpack.c.h.b16 %v270
    %v1051 = vunpack.c.l.b16 %v271
    %v1052 = vunpack.c.h.b16 %v271
    %v1053 = vunpack.c.l.b16 %v272
    %v1054 = vunpack.c.h.b16 %v272
    %v1055 = vunpack.c.l.b16 %v273
    %v1056 = vunpack.c.h.b16 %v273
    %v1057 = vunpack.c.l.b16 %v274
    %v1058 = vunpack.c.h.b16 %v274
    %v1059 = vunpack.c.l.b16 %v275
    %v1060 = vunpack.c.h.b16 %v275
    %v1061 = vunpack.c.l.b16 %v276
    %v1062 = vunpack.c.h.b16 %v276
    %v1063 = vunpack.c.l.b16 %v277
    %v1064 = vunpack.c.h.b16 %v277
    %v1065 = vunpack.c.l.b16 %v278
    %v1066 = vunpack.c.h.b16 %v278
    %v1067 = vunpack.c.l.b16 %v279
    %v1068 = vunpack.c.h.b16 %v279
    %v1069 = vunpack.c.l.b16 %v280
    %v1070 = vunpack.c.h.b16 %v280
    %v1071 = vunpack.c.l.b16 %v281
    %v1072 = vunpack.c.h.b16 %v281
    %v1073 = vunpack.c.l.b16 %v282
    %v1074 = vunpack.c.h.b16 %v282
    %v1075 = vunpack.c.l.b16 %v283
    %v1076 = vunpack.c.h.b16 %v283
    %v1077 = vunpack.c.l.b16 %v284
    %v1078 = vunpack.c.h.b16 %v284
    %v1079 = vunpack.c.l.b16 %v285
    %v1080 = vunpack.c.h.b16 %v285
    %v1081 = vunpack.c.l.b16 %v286
    %v1082 = vunpack.c.h.b16 %v286
    %v1083 = vunpack.c.l.b16 %v287
    %v1084 = vunpack.c.h.b16 %v287
    %v1085 = vunpack.c.l.b16 %v288
    %v1086 = vunpack.c.h.b16 %v288
    %v1087 = vunpack.c.l.b16 %v289
    %v1088 = vunpack.c.h.b16 %v289
    %v1089 = vunpack.c.l.b16 %v290
    %v1090 = vunpack.c.h.b16 %v290
    %v1091 = vunpack.c.l.b16 %v291
    %v1092 = vunpack.c.h.b16 %v291
    %v1093 = vunpack.c.l.b16 %v292
    %v1094 = vunpack.c.h.b16 %v292
    %v1095 = vunpack.c.l.b16 %v293
    %v1096 = vunpack.c.h.b16 %v293
    %v1097 = vunpack.c.l.b16 %v294
    %v1098 = vunpack.c.h.b16 %v294
    %v1099 = vunpack.c.l.b16 %v295
    %v1100 = vunpack.c.h.b16 %v295
    %v1101 = vunpack.c.l.b16 %v296
    %v1102 = vunpack.c.h.b16 %v296
    %v1103 = vunpack.c.l.b16 %v297
    %v1104 = vunpack.c.h.b16 %v297
    %v1105 = vunpack.c.l.b16 %v298
    %v1106 = vunpack.c.h.b16 %v298
    %v1107 = vunpack.c.l.b16 %v299
    %v1108 = vunpack.c.h.b16 %v299
    %v1109 = vunpack.c.l.b16 %v300
    %v1110 = vunpack.c.h.b16 %v300
    %v1111 = vunpack.c.l.b16 %v301
    %v1112 = vunpack.c.h.b16 %v301
    %v1113 = vunpack.c.l.b16 %v302
    %v1114 = vunpack.c.h.b16 %v302
    %v1115 = vunpack.c.l.b16 %v303
    %v1116 = vunpack.c.h.b16 %v303
    %v1117 = vunpack.c.l.b16 %v304
    %v1118 = vunpack.c.h.b16 %v304
    %v1119 = vunpack.c.l.b16 %v305
    %v1120 = vunpack.c.h.b16 %v305
    %v1121 = vunpack.c.l.b16 %v306
    %v1122 = vunpack.c.h.b16 %v306
    %v1123 = vunpack.c.l.b16 %v307
    %v1124 = vunpack.c.h.b16 %v307
    %v1125 = vunpack.c.l.b16 %v308
    %v1126 = vunpack.c.h.b16 %v308
    %v1127 = vunpack.c.l.b16 %v309
    %v1128 = vunpack.c.h.b16 %v309
    %v1129 = vunpack.c.l.b16 %v310
    %v1130 = vunpack.c.h.b16 %v310
    %v1131 = vunpack.c.l.b16 %v311
    %v1132 = vunpack.c.h.b16 %v311
    %v1133 = vunpack.c.l.b16 %v312
    %v1134 = vunpack.c.h.b16 %v312
    %v1135 = vunpack.c.l.b16 %v313
    %v1136 = vunpack.c.h.b16 %v313
    %v1137 = vunpack.c.l.b16 %v314
    %v1138 = vunpack.c.h.b16 %v314
    %v1139 = vunpack.c.l.b16 %v315
    %v1140 = vunpack.c.h.b16 %v315
    %v1141 = vunpack.c.l.b16 %v316
    %v1142 = vunpack.c.h.b16 %v316
    %v1143 = vunpack.c.l.b16 %v317
    %v1144 = vunpack.c.h.b16 %v317
    %v1145 = vunpack.c.l.b16 %v318
    %v1146 = vunpack.c.h.b16 %v318
    %v1147 = vunpack.c.l.b16 %v319
    %v1148 = vunpack.c.h.b16 %v319
    %v1149 = vunpack.c.l.b16 %v320
    %v1150 = vunpack.c.h.b16 %v320
    %v1151 = vunpack.c.l.b16 %v321
    %v1152 = vunpack.c.h.b16 %v321
    %v1153 = vunpack.c.l.b16 %v322
    %v1154 = vunpack.c.h.b16 %v322
    %v1155 = vunpack.c.l.b16 %v323
    %v1156 = vunpack.c.h.b16 %v323
    %v1157 = vunpack.c.l.b16 %v324
    %v1158 = vunpack.c.h.b16 %v324
    %v1159 = vunpack.c.l.b16 %v325
    %v1160 = vunpack.c.h.b16 %v325
    %v1161 = vunpack.c.l.b16 %v326
    %v1162 = vunpack.c.h.b16 %v326
    %v1163 = vunpack.c.l.b16 %v327
    %v1164 = vunpack.c.h.b16 %v327
    %v1165 = vunpack.c.l.b16 %v328
    %v1166 = vunpack.c.h.b16 %v328
    %v1167 = vunpack.c.l.b16 %v329
    %v1168 = vunpack.c.h.b16 %v329
    %v1169 = vunpack.c.l.b16 %v330
    %v1170 = vunpack.c.h.b16 %v330
    %v1171 = vunpack.c.l.b16 %v331
    %v1172 = vunpack.c.h.b16 %v331
    %v1173 = vunpack.c.l.b16 %v332
    %v1174 = vunpack.c.h.b16 %v332
    %v1175 = vunpack.c.l.b16 %v333
    %v1176 = vunpack.c.h.b16 %v333
    %v1177 = vunpack.c.l.b16 %v334
    %v1178 = vunpack.c.h.b16 %v334
    %v1179 = vunpack.c.l.b16 %v335
    %v1180 = vunpack.c.h.b16 %v335
    %v1181 = vunpack.c.l.b16 %v336
    %v1182 = vunpack.c.h.b16 %v336
    %v1183 = vunpack.c.l.b16 %v337
    %v1184 = vunpack.c.h.b16 %v337
    %v1185 = vunpack.c.l.b16 %v338
    %v1186 = vunpack.c.h.b16 %v338
    %v1187 = vpack.c.b16 %v679, %v675
    %v1188 = vpack.c.b16 %v680, %v676
    %v1189 = vpack.c.b16 %v681, %v677
    %v1190 = vpack.c.b16 %v682, %v678
    %v1191 = vpack.c.b16 %v687, %v683
    %v1192 = vpack.c.b16 %v688, %v684
    %v1193 = vpack.c.b16 %v689, %v685
    %v1194 = vpack.c.b16 %v690, %v686
    %v1195 = vpack.c.b16 %v695, %v691
    %v1196 = vpack.c.b16 %v696, %v692
    %v1197 = vpack.c.b16 %v697, %v693
    %v1198 = vpack.c.b16 %v698, %v694
    %v1199 = vpack.c.b16 %v703, %v699
    %v1200 = vpack.c.b16 %v704, %v700
    %v1201 = vpack.c.b16 %v705, %v701
    %v1202 = vpack.c.b16 %v706, %v702
    %v1203 = vpack.c.b16 %v711, %v707
    %v1204 = vpack.c.b16 %v712, %v708
    %v1205 = vpack.c.b16 %v713, %v709
    %v1206 = vpack.c.b16 %v714, %v710
    %v1207 = vpack.c.b16 %v719, %v715
    %v1208 = vpack.c.b16 %v720, %v716
    %v1209 = vpack.c.b16 %v721, %v717
    %v1210 = vpack.c.b16 %v722, %v718
    %v1211 = vpack.c.b16 %v727, %v723
    %v1212 = vpack.c.b16 %v728, %v724
    %v1213 = vpack.c.b16 %v729, %v725
    %v1214 = vpack.c.b16 %v730, %v726
    %v1215 = vpack.c.b16 %v735, %v731
    %v1216 = vpack.c.b16 %v736, %v732
    %v1217 = vpack.c.b16 %v737, %v733
    %v1218 = vpack.c.b16 %v738, %v734
    %v1219 = vpack.c.b16 %v743, %v739
    %v1220 = vpack.c.b16 %v744, %v740
    %v1221 = vpack.c.b16 %v745, %v741
    %v1222 = vpack.c.b16 %v746, %v742
    %v1223 = vpack.c.b16 %v751, %v747
    %v1224 = vpack.c.b16 %v752, %v748
    %v1225 = vpack.c.b16 %v753, %v749
    %v1226 = vpack.c.b16 %v754, %v750
    %v1227 = vpack.c.b16 %v759, %v755
    %v1228 = vpack.c.b16 %v760, %v756
    %v1229 = vpack.c.b16 %v761, %v757
    %v1230 = vpack.c.b16 %v762, %v758
    %v1231 = vpack.c.b16 %v767, %v763
    %v1232 = vpack.c.b16 %v768, %v764
    %v1233 = vpack.c.b16 %v769, %v765
    %v1234 = vpack.c.b16 %v770, %v766
    %v1235 = vpack.c.b16 %v775, %v771
    %v1236 = vpack.c.b16 %v776, %v772
    %v1237 = vpack.c.b16 %v777, %v773
    %v1238 = vpack.c.b16 %v778, %v774
    %v1239 = vpack.c.b16 %v783, %v779
    %v1240 = vpack.c.b16 %v784, %v780
    %v1241 = vpack.c.b16 %v785, %v781
    %v1242 = vpack.c.b16 %v786, %v782
    %v1243 = vpack.c.b16 %v791, %v787
    %v1244 = vpack.c.b16 %v792, %v788
    %v1245 = vpack.c.b16 %v793, %v789
    %v1246 = vpack.c.b16 %v794, %v790
    %v1247 = vpack.c.b16 %v799, %v795
    %v1248 = vpack.c.b16 %v800, %v796
    %v1249 = vpack.c.b16 %v801, %v797
    %v1250 = vpack.c.b16 %v802, %v798
    %v1251 = vpack.c.b16 %v807, %v803
    %v1252 = vpack.c.b16 %v808, %v804
    %v1253 = vpack.c.b16 %v809, %v805
    %v1254 = vpack.c.b16 %v810, %v806
    %v1255 = vpack.c.b16 %v815, %v811
    %v1256 = vpack.c.b16 %v816, %v812
    %v1257 = vpack.c.b16 %v817, %v813
    %v1258 = vpack.c.b16 %v818, %v814
    %v1259 = vpack.c.b16 %v823, %v819
    %v1260 = vpack.c.b16 %v824, %v820
    %v1261 = vpack.c.b16 %v825, %v821
    %v1262 = vpack.c.b16 %v826, %v822
    %v1263 = vpack.c.b16 %v831, %v827
    %v1264 = vpack.c.b16 %v832, %v828
    %v1265 = vpack.c.b16 %v833, %v829
    %v1266 = vpack.c.b16 %v834, %v830
    %v1267 = vpack.c.b16 %v839, %v835
    %v1268 = vpack.c.b16 %v840, %v836
    %v1269 = vpack.c.b16 %v841, %v837
    %v1270 = vpack.c.b16 %v842, %v838
    %v1271 = vpack.c.b16 %v847, %v843
    %v1272 = vpack.c.b16 %v848, %v844
    %v1273 = vpack.c.b16 %v849, %v845
    %v1274 = vpack.c.b16 %v850, %v846
    %v1275 = vpack.c.b16 %v855, %v851
    %v1276 = vpack.c.b16 %v856, %v852
    %v1277 = vpack.c.b16 %v857, %v853
    %v1278 = vpack.c.b16 %v858, %v854
    %v1279 = vpack.c.b16 %v863, %v859
    %v1280 = vpack.c.b16 %v864, %v860
    %v1281 = vpack.c.b16 %v865, %v861
    %v1282 = vpack.c.b16 %v866, %v862
    %v1283 = vpack.c.b16 %v871, %v867
    %v1284 = vpack.c.b16 %v872, %v868
    %v1285 = vpack.c.b16 %v873, %v869
    %v1286 = vpack.c.b16 %v874, %v870
    %v1287 = vpack.c.b16 %v879, %v875
    %v1288 = vpack.c.b16 %v880, %v876
    %v1289 = vpack.c.b16 %v881, %v877
    %v1290 = vpack.c.b16 %v882, %v878
    %v1291 = vpack.c.b16 %v887, %v883
    %v1292 = vpack.c.b16 %v888, %v884
    %v1293 = vpack.c.b16 %v889, %v885
    %v1294 = vpack.c.b16 %v890, %v886
    %v1295 = vpack.c.b16 %v895, %v891
    %v1296 = vpack.c.b16 %v896, %v892
    %v1297 = vpack.c.b16 %v897, %v893
    %v1298 = vpack.c.b16 %v898, %v894
    %v1299 = vpack.c.b16 %v903, %v899
    %v1300 = vpack.c.b16 %v904, %v900
    %v1301 = vpack.c.b16 %v905, %v901
    %v1302 = vpack.c.b16 %v906, %v902
    %v1303 = vpack.c.b16 %v911, %v907
    %v1304 = vpack.c.b16 %v912, %v908
    %v1305 = vpack.c.b16 %v913, %v909
    %v1306 = vpack.c.b16 %v914, %v910
    %v1307 = vpack.c.b16 %v919, %v915
    %v1308 = vpack.c.b16 %v920, %v916
    %v1309 = vpack.c.b16 %v921, %v917
    %v1310 = vpack.c.b16 %v922, %v918
    %v1311 = vpack.c.b16 %v927, %v923
    %v1312 = vpack.c.b16 %v928, %v924
    %v1313 = vpack.c.b16 %v929, %v925
    %v1314 = vpack.c.b16 %v930, %v926
    %v1315 = vpack.c.b16 %v935, %v931
    %v1316 = vpack.c.b16 %v936, %v932
    %v1317 = vpack.c.b16 %v937, %v933
    %v1318 = vpack.c.b16 %v938, %v934
    %v1319 = vpack.c.b16 %v943, %v939
    %v1320 = vpack.c.b16 %v944, %v940
    %v1321 = vpack.c.b16 %v945, %v941
    %v1322 = vpack.c.b16 %v946, %v942
    %v1323 = vpack.c.b16 %v951, %v947
    %v1324 = vpack.c.b16 %v952, %v948
    %v1325 = vpack.c.b16 %v953, %v949
    %v1326 = vpack.c.b16 %v954, %v950
    %v1327 = vpack.c.b16 %v959, %v955
    %v1328 = vpack.c.b16 %v960, %v956
    %v1329 = vpack.c.b16 %v961, %v957
    %v1330 = vpack.c.b16 %v962, %v958
    %v1331 = vpack.c.b16 %v967, %v963
    %v1332 = vpack.c.b16 %v968, %v964
    %v1333 = vpack.c.b16 %v969, %v965
    %v1334 = vpack.c.b16 %v970, %v966
    %v1335 = vpack.c.b16 %v975, %v971
    %v1336 = vpack.c.b16 %v976, %v972
    %v1337 = vpack.c.b16 %v977, %v973
    %v1338 = vpack.c.b16 %v978, %v974
    %v1339 = vpack.c.b16 %v983, %v979
    %v1340 = vpack.c.b16 %v984, %v980
    %v1341 = vpack.c.b16 %v985, %v981
    %v1342 = vpack.c.b16 %v986, %v982
    %v1343 = vpack.c.b16 %v991, %v987
    %v1344 = vpack.c.b16 %v992, %v988
    %v1345 = vpack.c.b16 %v993, %v989
    %v1346 = vpack.c.b16 %v994, %v990
    %v1347 = vpack.c.b16 %v999, %v995
    %v1348 = vpack.c.b16 %v1000, %v996
    %v1349 = vpack.c.b16 %v1001, %v997
    %v1350 = vpack.c.b16 %v1002, %v998
    %v1351 = vpack.c.b16 %v1007, %v1003
    %v1352 = vpack.c.b16 %v1008, %v1004
    %v1353 = vpack.c.b16 %v1009, %v1005
    %v1354 = vpack.c.b16 %v1010, %v1006
    %v1355 = vpack.c.b16 %v1015, %v1011
    %v1356 = vpack.c.b16 %v1016, %v1012
    %v1357 = vpack.c.b16 %v1017, %v1013
    %v1358 = vpack.c.b16 %v1018, %v1014
    %v1359 = vpack.c.b16 %v1023, %v1019
    %v1360 = vpack.c.b16 %v1024, %v1020
    %v1361 = vpack.c.b16 %v1025, %v1021
    %v1362 = vpack.c.b16 %v1026, %v1022
    %v1363 = vpack.c.b16 %v1031, %v1027
    %v1364 = vpack.c.b16 %v1032, %v1028
    %v1365 = vpack.c.b16 %v1033, %v1029
    %v1366 = vpack.c.b16 %v1034, %v1030
    %v1367 = vpack.c.b16 %v1039, %v1035
    %v1368 = vpack.c.b16 %v1040, %v1036
    %v1369 = vpack.c.b16 %v1041, %v1037
    %v1370 = vpack.c.b16 %v1042, %v1038
    %v1371 = vpack.c.b16 %v1047, %v1043
    %v1372 = vpack.c.b16 %v1048, %v1044
    %v1373 = vpack.c.b16 %v1049, %v1045
    %v1374 = vpack.c.b16 %v1050, %v1046
    %v1375 = vpack.c.b16 %v1055, %v1051
    %v1376 = vpack.c.b16 %v1056, %v1052
    %v1377 = vpack.c.b16 %v1057, %v1053
    %v1378 = vpack.c.b16 %v1058, %v1054
    %v1379 = vpack.c.b16 %v1063, %v1059
    %v1380 = vpack.c.b16 %v1064, %v1060
    %v1381 = vpack.c.b16 %v1065, %v1061
    %v1382 = vpack.c.b16 %v1066, %v1062
    %v1383 = vpack.c.b16 %v1071, %v1067
    %v1384 = vpack.c.b16 %v1072, %v1068
    %v1385 = vpack.c.b16 %v1073, %v1069
    %v1386 = vpack.c.b16 %v1074, %v1070
    %v1387 = vpack.c.b16 %v1079, %v1075
    %v1388 = vpack.c.b16 %v1080, %v1076
    %v1389 = vpack.c.b16 %v1081, %v1077
    %v1390 = vpack.c.b16 %v1082, %v1078
    %v1391 = vpack.c.b16 %v1087, %v1083
    %v1392 = vpack.c.b16 %v1088, %v1084
    %v1393 = vpack.c.b16 %v1089, %v1085
    %v1394 = vpack.c.b16 %v1090, %v1086
    %v1395 = vpack.c.b16 %v1095, %v1091
    %v1396 = vpack.c.b16 %v1096, %v1092
    %v1397 = vpack.c.b16 %v1097, %v1093
    %v1398 = vpack.c.b16 %v1098, %v1094
    %v1399 = vpack.c.b16 %v1103, %v1099
    %v1400 = vpack.c.b16 %v1104, %v1100
    %v1401 = vpack.c.b16 %v1105, %v1101
    %v1402 = vpack.c.b16 %v1106, %v1102
    %v1403 = vpack.c.b16 %v1111, %v1107
    %v1404 = vpack.c.b16 %v1112, %v1108
    %v1405 = vpack.c.b16 %v1113, %v1109
    %v1406 = vpack.c.b16 %v1114, %v1110
    %v1407 = vpack.c.b16 %v1119, %v1115
    %v1408 = vpack.c.b16 %v1120, %v1116
    %v1409 = vpack.c.b16 %v1121, %v1117
    %v1410 = vpack.c.b16 %v1122, %v1118
    %v1411 = vpack.c.b16 %v1127, %v1123
    %v1412 = vpack.c.b16 %v1128, %v1124
    %v1413 = vpack.c.b16 %v1129, %v1125
    %v1414 = vpack.c.b16 %v1130, %v1126
    %v1415 = vpack.c.b16 %v1135, %v1131
    %v1416 = vpack.c.b16 %v1136, %v1132
    %v1417 = vpack.c.b16 %v1137, %v1133
    %v1418 = vpack.c.b16 %v1138, %v1134
    %v1419 = vpack.c.b16 %v1143, %v1139
    %v1420 = vpack.c.b16 %v1144, %v1140
    %v1421 = vpack.c.b16 %v1145, %v1141
    %v1422 = vpack.c.b16 %v1146, %v1142
    %v1423 = vpack.c.b16 %v1151, %v1147
    %v1424 = vpack.c.b16 %v1152, %v1148
    %v1425 = vpack.c.b16 %v1153, %v1149
    %v1426 = vpack.c.b16 %v1154, %v1150
    %v1427 = vpack.c.b16 %v1159, %v1155
    %v1428 = vpack.c.b16 %v1160, %v1156
    %v1429 = vpack.c.b16 %v1161, %v1157
    %v1430 = vpack.c.b16 %v1162, %v1158
    %v1431 = vpack.c.b16 %v1167, %v1163
    %v1432 = vpack.c.b16 %v1168, %v1164
    %v1433 = vpack.c.b16 %v1169, %v1165
    %v1434 = vpack.c.b16 %v1170, %v1166
    %v1435 = vpack.c.b16 %v1175, %v1171
    %v1436 = vpack.c.b16 %v1176, %v1172
    %v1437 = vpack.c.b16 %v1177, %v1173
    %v1438 = vpack.c.b16 %v1178, %v1174
    %v1439 = vpack.c.b16 %v1183, %v1179
    %v1440 = vpack.c.b16 %v1184, %v1180
    %v1441 = vpack.c.b16 %v1185, %v1181
    %v1442 = vpack.c.b16 %v1186, %v1182
    %1699 = vmatprep.subr.bf16.mxu0 %v1188
    %1700 = vmatpush1.bf16.msra.mxu0 %v1187
    %1701 = vmatprep.subr.bf16.mxu0 %v1192
    %1702 = vmatpush1.bf16.msra.mxu0 %v1191
    %1703 = vmatprep.subr.bf16.mxu0 %v1196
    %1704 = vmatpush1.bf16.msra.mxu0 %v1195
    %1705 = vmatprep.subr.bf16.mxu0 %v1200
    %1706 = vmatpush1.bf16.msra.mxu0 %v1199
    %1707 = vmatprep.subr.bf16.mxu0 %v1204
    %1708 = vmatpush1.bf16.msra.mxu0 %v1203
    %1709 = vmatprep.subr.bf16.mxu0 %v1208
    %1710 = vmatpush1.bf16.msra.mxu0 %v1207
    %1711 = vmatprep.subr.bf16.mxu0 %v1212
    %1712 = vmatpush1.bf16.msra.mxu0 %v1211
    %1713 = vmatprep.subr.bf16.mxu0 %v1216
    %1714 = vmatpush1.bf16.msra.mxu0 %v1215
    %1715 = vmatprep.subr.bf16.mxu0 %v1220
    %1716 = vmatpush1.bf16.msra.mxu0 %v1219
    %1717 = vmatprep.subr.bf16.mxu0 %v1224
    %1718 = vmatpush1.bf16.msra.mxu0 %v1223
    %1719 = vmatprep.subr.bf16.mxu0 %v1228
    %1720 = vmatpush1.bf16.msra.mxu0 %v1227
    %1721 = vmatprep.subr.bf16.mxu0 %v1232
    %1722 = vmatpush1.bf16.msra.mxu0 %v1231
    %1723 = vmatprep.subr.bf16.mxu0 %v1236
    %1724 = vmatpush1.bf16.msra.mxu0 %v1235
    %1725 = vmatprep.subr.bf16.mxu0 %v1240
    %1726 = vmatpush1.bf16.msra.mxu0 %v1239
    %1727 = vmatprep.subr.bf16.mxu0 %v1244
    %1728 = vmatpush1.bf16.msra.mxu0 %v1243
    %1729 = vmatprep.subr.bf16.mxu0 %v1248
    %1730 = vmatpush1.bf16.msra.mxu0 %v1247
    %1731 = vmatprep.mubr.bf16.mxu0 %v399
    %1732 = vmatmul.mubr.bf16.gmra.mrb[0].mxu0 %v385
    %v1733 = vpop.f32.mrb[0].mxu0
    %v1734 = vadd.f32 %v344, %v1733
    %v1735 = vpop.f32.mrb[0].mxu0
    %v1736 = vadd.f32 %v348, %v1735
    %v1737 = vpop.f32.mrb[0].mxu0
    %v1738 = vpop.f32.mrb[0].mxu0
    %1739 = vdwg.mxu0
    %1740 = vmatprep.subr.bf16.mxu0 %v1252
    %1741 = vmatpush1.bf16.msra.mxu0 %v1251
    %1742 = vmatprep.subr.bf16.mxu0 %v1256
    %1743 = vmatpush1.bf16.msra.mxu0 %v1255
    %1744 = vmatprep.subr.bf16.mxu0 %v1260
    %1745 = vmatpush1.bf16.msra.mxu0 %v1259
    %1746 = vmatprep.subr.bf16.mxu0 %v1264
    %1747 = vmatpush1.bf16.msra.mxu0 %v1263
    %1748 = vmatprep.subr.bf16.mxu0 %v1268
    %1749 = vmatpush1.bf16.msra.mxu0 %v1267
    %1750 = vmatprep.subr.bf16.mxu0 %v1272
    %1751 = vmatpush1.bf16.msra.mxu0 %v1271
    %1752 = vmatprep.subr.bf16.mxu0 %v1276
    %1753 = vmatpush1.bf16.msra.mxu0 %v1275
    %1754 = vmatprep.subr.bf16.mxu0 %v1280
    %1755 = vmatpush1.bf16.msra.mxu0 %v1279
    %1756 = vmatprep.subr.bf16.mxu0 %v1284
    %1757 = vmatpush1.bf16.msra.mxu0 %v1283
    %1758 = vmatprep.subr.bf16.mxu0 %v1288
    %1759 = vmatpush1.bf16.msra.mxu0 %v1287
    %1760 = vmatprep.subr.bf16.mxu0 %v1292
    %1761 = vmatpush1.bf16.msra.mxu0 %v1291
    %1762 = vmatprep.subr.bf16.mxu0 %v1296
    %1763 = vmatpush1.bf16.msra.mxu0 %v1295
    %1764 = vmatprep.subr.bf16.mxu0 %v1300
    %1765 = vmatpush1.bf16.msra.mxu0 %v1299
    %1766 = vmatprep.subr.bf16.mxu0 %v1304
    %1767 = vmatpush1.bf16.msra.mxu0 %v1303
    %1768 = vmatprep.subr.bf16.mxu0 %v1308
    %1769 = vmatpush1.bf16.msra.mxu0 %v1307
    %1770 = vmatprep.subr.bf16.mxu0 %v1312
    %1771 = vmatpush1.bf16.msra.mxu0 %v1311
    %1772 = vmatprep.mubr.bf16.mxu0 %v409
    %1773 = vmatmul.mubr.bf16.gmra.mrb[0].mxu0 %v407
    %v1774 = vpop.f32.mrb[0].mxu0
    %v1775 = vadd.f32 %v1734, %v1774
    %v1776 = vpop.f32.mrb[0].mxu0
    %v1777 = vadd.f32 %v1736, %v1776
    %v1778 = vpop.f32.mrb[0].mxu0
    %v1779 = vpop.f32.mrb[0].mxu0
    %1780 = vdwg.mxu0
    %1781 = vmatprep.subr.bf16.mxu0 %v1316
    %1782 = vmatpush1.bf16.msra.mxu0 %v1315
    %1783 = vmatprep.subr.bf16.mxu0 %v1320
    %1784 = vmatpush1.bf16.msra.mxu0 %v1319
    %1785 = vmatprep.subr.bf16.mxu0 %v1324
    %1786 = vmatpush1.bf16.msra.mxu0 %v1323
    %1787 = vmatprep.subr.bf16.mxu0 %v1328
    %1788 = vmatpush1.bf16.msra.mxu0 %v1327
    %1789 = vmatprep.subr.bf16.mxu0 %v1332
    %1790 = vmatpush1.bf16.msra.mxu0 %v1331
    %1791 = vmatprep.subr.bf16.mxu0 %v1336
    %1792 = vmatpush1.bf16.msra.mxu0 %v1335
    %1793 = vmatprep.subr.bf16.mxu0 %v1340
    %1794 = vmatpush1.bf16.msra.mxu0 %v1339
    %1795 = vmatprep.subr.bf16.mxu0 %v1344
    %1796 = vmatpush1.bf16.msra.mxu0 %v1343
    %1797 = vmatprep.subr.bf16.mxu0 %v1348
    %1798 = vmatpush1.bf16.msra.mxu0 %v1347
    %1799 = vmatprep.subr.bf16.mxu0 %v1352
    %1800 = vmatpush1.bf16.msra.mxu0 %v1351
    %1801 = vmatprep.subr.bf16.mxu0 %v1356
    %1802 = vmatpush1.bf16.msra.mxu0 %v1355
    %1803 = vmatprep.subr.bf16.mxu0 %v1360
    %1804 = vmatpush1.bf16.msra.mxu0 %v1359
    %1805 = vmatprep.subr.bf16.mxu0 %v1364
    %1806 = vmatpush1.bf16.msra.mxu0 %v1363
    %1807 = vmatprep.subr.bf16.mxu0 %v1368
    %1808 = vmatpush1.bf16.msra.mxu0 %v1367
    %1809 = vmatprep.subr.bf16.mxu0 %v1372
    %1810 = vmatpush1.bf16.msra.mxu0 %v1371
    %1811 = vmatprep.subr.bf16.mxu0 %v1376
    %1812 = vmatpush1.bf16.msra.mxu0 %v1375
    %1813 = vmatprep.mubr.bf16.mxu0 %v406
    %1814 = vmatmul.mubr.bf16.gmra.mrb[0].mxu0 %v392
    %v1815 = vpop.f32.mrb[0].mxu0
    %v1816 = vadd.f32 %v1775, %v1815
    %v1817 = vpop.f32.mrb[0].mxu0
    %v1818 = vadd.f32 %v1777, %v1817
    %v1819 = vpop.f32.mrb[0].mxu0
    %v1820 = vpop.f32.mrb[0].mxu0
    %1821 = vdwg.mxu0
    %1822 = vmatprep.subr.bf16.mxu0 %v1380
    %1823 = vmatpush1.bf16.msra.mxu0 %v1379
    %1824 = vmatprep.subr.bf16.mxu0 %v1384
    %1825 = vmatpush1.bf16.msra.mxu0 %v1383
    %1826 = vmatprep.subr.bf16.mxu0 %v1388
    %1827 = vmatpush1.bf16.msra.mxu0 %v1387
    %1828 = vmatprep.subr.bf16.mxu0 %v1392
    %1829 = vmatpush1.bf16.msra.mxu0 %v1391
    %1830 = vmatprep.subr.bf16.mxu0 %v1396
    %1831 = vmatpush1.bf16.msra.mxu0 %v1395
    %1832 = vmatprep.subr.bf16.mxu0 %v1400
    %1833 = vmatpush1.bf16.msra.mxu0 %v1399
    %1834 = vmatprep.subr.bf16.mxu0 %v1404
    %1835 = vmatpush1.bf16.msra.mxu0 %v1403
    %1836 = vmatprep.subr.bf16.mxu0 %v1408
    %1837 = vmatpush1.bf16.msra.mxu0 %v1407
    %1838 = vmatprep.subr.bf16.mxu0 %v1412
    %1839 = vmatpush1.bf16.msra.mxu0 %v1411
    %1840 = vmatprep.subr.bf16.mxu0 %v1416
    %1841 = vmatpush1.bf16.msra.mxu0 %v1415
    %1842 = vmatprep.subr.bf16.mxu0 %v1420
    %1843 = vmatpush1.bf16.msra.mxu0 %v1419
    %1844 = vmatprep.subr.bf16.mxu0 %v1424
    %1845 = vmatpush1.bf16.msra.mxu0 %v1423
    %1846 = vmatprep.subr.bf16.mxu0 %v1428
    %1847 = vmatpush1.bf16.msra.mxu0 %v1427
    %1848 = vmatprep.subr.bf16.mxu0 %v1432
    %1849 = vmatpush1.bf16.msra.mxu0 %v1431
    %1850 = vmatprep.subr.bf16.mxu0 %v1436
    %1851 = vmatpush1.bf16.msra.mxu0 %v1435
    %1852 = vmatprep.subr.bf16.mxu0 %v1440
    %1853 = vmatpush1.bf16.msra.mxu0 %v1439
    %1854 = vmatprep.mubr.bf16.mxu0 %v410
    %1855 = vmatmul.mubr.bf16.gmra.mrb[0].mxu0 %v408
    %v1856 = vpop.f32.mrb[0].mxu0
    %v1857 = vadd.f32 %v1816, %v1856
    %v1858 = vpop.f32.mrb[0].mxu0
    %v1859 = vadd.f32 %v1818, %v1858
    %v1860 = vpop.f32.mrb[0].mxu0
    %v1861 = vpop.f32.mrb[0].mxu0
    %1862 = vdwg.mxu0
    %1863 = vmatprep.subr.bf16.mxu0 %v1190
    %1864 = vmatpush1.bf16.msra.mxu0 %v1189
    %1865 = vmatprep.subr.bf16.mxu0 %v1194
    %1866 = vmatpush1.bf16.msra.mxu0 %v1193
    %1867 = vmatprep.subr.bf16.mxu0 %v1198
    %1868 = vmatpush1.bf16.msra.mxu0 %v1197
    %1869 = vmatprep.subr.bf16.mxu0 %v1202
    %1870 = vmatpush1.bf16.msra.mxu0 %v1201
    %1871 = vmatprep.subr.bf16.mxu0 %v1206
    %1872 = vmatpush1.bf16.msra.mxu0 %v1205
    %1873 = vmatprep.subr.bf16.mxu0 %v1210
    %1874 = vmatpush1.bf16.msra.mxu0 %v1209
    %1875 = vmatprep.subr.bf16.mxu0 %v1214
    %1876 = vmatpush1.bf16.msra.mxu0 %v1213
    %1877 = vmatprep.subr.bf16.mxu0 %v1218
    %1878 = vmatpush1.bf16.msra.mxu0 %v1217
    %1879 = vmatprep.subr.bf16.mxu0 %v1222
    %1880 = vmatpush1.bf16.msra.mxu0 %v1221
    %1881 = vmatprep.subr.bf16.mxu0 %v1226
    %1882 = vmatpush1.bf16.msra.mxu0 %v1225
    %1883 = vmatprep.subr.bf16.mxu0 %v1230
    %1884 = vmatpush1.bf16.msra.mxu0 %v1229
    %1885 = vmatprep.subr.bf16.mxu0 %v1234
    %1886 = vmatpush1.bf16.msra.mxu0 %v1233
    %1887 = vmatprep.subr.bf16.mxu0 %v1238
    %1888 = vmatpush1.bf16.msra.mxu0 %v1237
    %1889 = vmatprep.subr.bf16.mxu0 %v1242
    %1890 = vmatpush1.bf16.msra.mxu0 %v1241
    %1891 = vmatprep.subr.bf16.mxu0 %v1246
    %1892 = vmatpush1.bf16.msra.mxu0 %v1245
    %1893 = vmatprep.subr.bf16.mxu0 %v1250
    %1894 = vmatpush1.bf16.msra.mxu0 %v1249
    %1895 = vmatprep.mubr.bf16.mxu0 %v399
    %1896 = vmatmul.mubr.bf16.gmra.mrb[0].mxu0 %v385
    %v1897 = vpop.f32.mrb[0].mxu0
    %v1898 = vadd.f32 %v352, %v1897
    %v1899 = vpop.f32.mrb[0].mxu0
    %v1900 = vadd.f32 %v356, %v1899
    %v1901 = vpop.f32.mrb[0].mxu0
    %v1902 = vpop.f32.mrb[0].mxu0
    %1903 = vdwg.mxu0
    %1904 = vmatprep.subr.bf16.mxu0 %v1254
    %1905 = vmatpush1.bf16.msra.mxu0 %v1253
    %1906 = vmatprep.subr.bf16.mxu0 %v1258
    %1907 = vmatpush1.bf16.msra.mxu0 %v1257
    %1908 = vmatprep.subr.bf16.mxu0 %v1262
    %1909 = vmatpush1.bf16.msra.mxu0 %v1261
    %1910 = vmatprep.subr.bf16.mxu0 %v1266
    %1911 = vmatpush1.bf16.msra.mxu0 %v1265
    %1912 = vmatprep.subr.bf16.mxu0 %v1270
    %1913 = vmatpush1.bf16.msra.mxu0 %v1269
    %1914 = vmatprep.subr.bf16.mxu0 %v1274
    %1915 = vmatpush1.bf16.msra.mxu0 %v1273
    %1916 = vmatprep.subr.bf16.mxu0 %v1278
    %1917 = vmatpush1.bf16.msra.mxu0 %v1277
    %1918 = vmatprep.subr.bf16.mxu0 %v1282
    %1919 = vmatpush1.bf16.msra.mxu0 %v1281
    %1920 = vmatprep.subr.bf16.mxu0 %v1286
    %1921 = vmatpush1.bf16.msra.mxu0 %v1285
    %1922 = vmatprep.subr.bf16.mxu0 %v1290
    %1923 = vmatpush1.bf16.msra.mxu0 %v1289
    %1924 = vmatprep.subr.bf16.mxu0 %v1294
    %1925 = vmatpush1.bf16.msra.mxu0 %v1293
    %1926 = vmatprep.subr.bf16.mxu0 %v1298
    %1927 = vmatpush1.bf16.msra.mxu0 %v1297
    %1928 = vmatprep.subr.bf16.mxu0 %v1302
    %1929 = vmatpush1.bf16.msra.mxu0 %v1301
    %1930 = vmatprep.subr.bf16.mxu0 %v1306
    %1931 = vmatpush1.bf16.msra.mxu0 %v1305
    %1932 = vmatprep.subr.bf16.mxu0 %v1310
    %1933 = vmatpush1.bf16.msra.mxu0 %v1309
    %1934 = vmatprep.subr.bf16.mxu0 %v1314
    %1935 = vmatpush1.bf16.msra.mxu0 %v1313
    %1936 = vmatprep.mubr.bf16.mxu0 %v409
    %1937 = vmatmul.mubr.bf16.gmra.mrb[0].mxu0 %v407
    %v1938 = vpop.f32.mrb[0].mxu0
    %v1939 = vadd.f32 %v1898, %v1938
    %v1940 = vpop.f32.mrb[0].mxu0
    %v1941 = vadd.f32 %v1900, %v1940
    %v1942 = vpop.f32.mrb[0].mxu0
    %v1943 = vpop.f32.mrb[0].mxu0
    %1944 = vdwg.mxu0
    %1945 = vmatprep.subr.bf16.mxu0 %v1318
    %1946 = vmatpush1.bf16.msra.mxu0 %v1317
    %1947 = vmatprep.subr.bf16.mxu0 %v1322
    %1948 = vmatpush1.bf16.msra.mxu0 %v1321
    %1949 = vmatprep.subr.bf16.mxu0 %v1326
    %1950 = vmatpush1.bf16.msra.mxu0 %v1325
    %1951 = vmatprep.subr.bf16.mxu0 %v1330
    %1952 = vmatpush1.bf16.msra.mxu0 %v1329
    %1953 = vmatprep.subr.bf16.mxu0 %v1334
    %1954 = vmatpush1.bf16.msra.mxu0 %v1333
    %1955 = vmatprep.subr.bf16.mxu0 %v1338
    %1956 = vmatpush1.bf16.msra.mxu0 %v1337
    %1957 = vmatprep.subr.bf16.mxu0 %v1342
    %1958 = vmatpush1.bf16.msra.mxu0 %v1341
    %1959 = vmatprep.subr.bf16.mxu0 %v1346
    %1960 = vmatpush1.bf16.msra.mxu0 %v1345
    %1961 = vmatprep.subr.bf16.mxu0 %v1350
    %1962 = vmatpush1.bf16.msra.mxu0 %v1349
    %1963 = vmatprep.subr.bf16.mxu0 %v1354
    %1964 = vmatpush1.bf16.msra.mxu0 %v1353
    %1965 = vmatprep.subr.bf16.mxu0 %v1358
    %1966 = vmatpush1.bf16.msra.mxu0 %v1357
    %1967 = vmatprep.subr.bf16.mxu0 %v1362
    %1968 = vmatpush1.bf16.msra.mxu0 %v1361
    %1969 = vmatprep.subr.bf16.mxu0 %v1366
    %1970 = vmatpush1.bf16.msra.mxu0 %v1365
    %1971 = vmatprep.subr.bf16.mxu0 %v1370
    %1972 = vmatpush1.bf16.msra.mxu0 %v1369
    %1973 = vmatprep.subr.bf16.mxu0 %v1374
    %1974 = vmatpush1.bf16.msra.mxu0 %v1373
    %1975 = vmatprep.subr.bf16.mxu0 %v1378
    %1976 = vmatpush1.bf16.msra.mxu0 %v1377
    %1977 = vmatprep.mubr.bf16.mxu0 %v406
    %1978 = vmatmul.mubr.bf16.gmra.mrb[0].mxu0 %v392
    %v1979 = vpop.f32.mrb[0].mxu0
    %v1980 = vadd.f32 %v1939, %v1979
    %v1981 = vpop.f32.mrb[0].mxu0
    %v1982 = vadd.f32 %v1941, %v1981
    %v1983 = vpop.f32.mrb[0].mxu0
    %v1984 = vpop.f32.mrb[0].mxu0
    %1985 = vdwg.mxu0
    %1986 = vmatprep.subr.bf16.mxu0 %v1382
    %1987 = vmatpush1.bf16.msra.mxu0 %v1381
    %1988 = vmatprep.subr.bf16.mxu0 %v1386
    %1989 = vmatpush1.bf16.msra.mxu0 %v1385
    %1990 = vmatprep.subr.bf16.mxu0 %v1390
    %1991 = vmatpush1.bf16.msra.mxu0 %v1389
    %1992 = vmatprep.subr.bf16.mxu0 %v1394
    %1993 = vmatpush1.bf16.msra.mxu0 %v1393
    %1994 = vmatprep.subr.bf16.mxu0 %v1398
    %1995 = vmatpush1.bf16.msra.mxu0 %v1397
    %1996 = vmatprep.subr.bf16.mxu0 %v1402
    %1997 = vmatpush1.bf16.msra.mxu0 %v1401
    %1998 = vmatprep.subr.bf16.mxu0 %v1406
    %1999 = vmatpush1.bf16.msra.mxu0 %v1405
    %2000 = vmatprep.subr.bf16.mxu0 %v1410
    %2001 = vmatpush1.bf16.msra.mxu0 %v1409
    %2002 = vmatprep.subr.bf16.mxu0 %v1414
    %2003 = vmatpush1.bf16.msra.mxu0 %v1413
    %2004 = vmatprep.subr.bf16.mxu0 %v1418
    %2005 = vmatpush1.bf16.msra.mxu0 %v1417
    %2006 = vmatprep.subr.bf16.mxu0 %v1422
    %2007 = vmatpush1.bf16.msra.mxu0 %v1421
    %2008 = vmatprep.subr.bf16.mxu0 %v1426
    %2009 = vmatpush1.bf16.msra.mxu0 %v1425
    %2010 = vmatprep.subr.bf16.mxu0 %v1430
    %2011 = vmatpush1.bf16.msra.mxu0 %v1429
    %2012 = vmatprep.subr.bf16.mxu0 %v1434
    %2013 = vmatpush1.bf16.msra.mxu0 %v1433
    %2014 = vmatprep.subr.bf16.mxu0 %v1438
    %2015 = vmatpush1.bf16.msra.mxu0 %v1437
    %2016 = vmatprep.subr.bf16.mxu0 %v1442
    %2017 = vmatpush1.bf16.msra.mxu0 %v1441
    %2018 = vmatprep.mubr.bf16.mxu0 %v410
    %2019 = vmatmul.mubr.bf16.gmra.mrb[0].mxu0 %v408
    %v2020 = vpop.f32.mrb[0].mxu0
    %v2021 = vadd.f32 %v1980, %v2020
    %v2022 = vpop.f32.mrb[0].mxu0
    %v2023 = vadd.f32 %v1982, %v2022
    %v2024 = vpop.f32.mrb[0].mxu0
    %v2025 = vpop.f32.mrb[0].mxu0
    %2026 = vdwg.mxu0
    %vm2027 = vcmp.gt.f32.partialorder %v1857, 0.0
    %vm2028 = vcmp.gt.f32.partialorder %v1859, 0.0
    %vm2029 = vcmp.gt.f32.partialorder %v2021, 0.0
    %vm2030 = vcmp.gt.f32.partialorder %v2023, 0.0
    %v2031 = vmul.f32 %v1857, 0.2
    %v2032 = vmul.f32 %v1859, 0.2
    %v2033 = vmul.f32 %v2021, 0.2
    %v2034 = vmul.f32 %v2023, 0.2
    %v2035 = vsel %vm2027, %v1857, %v2031
    %v2036 = vsel %vm2028, %v1859, %v2032
    %v2037 = vsel %vm2029, %v2021, %v2033
    %v2038 = vsel %vm2030, %v2023, %v2034
    %v2039 = vpack.c.bf16 %v2035, %v2035
    %v2040 = vpack.c.bf16 %v2036, %v2036
    %v2041 = vpack.c.bf16 %v2037, %v2037
    %v2042 = vpack.c.bf16 %v2038, %v2038
    %v2043 = vld [vmem:[%s3] sm:$0xff]
    %v2044 = vld [vmem:[%s3 + $0x8] sm:$0xff]
    %v2045 = vld [vmem:[%s3 + $0x10] sm:$0xff]
    %v2046 = vld [vmem:[%s3 + $0x18] sm:$0xff]
    %v2047 = vld [vmem:[%s3 + $0x20] sm:$0xff]
    %v2048 = vld [vmem:[%s3 + $0x28] sm:$0xff]
    %v2049 = vld [vmem:[%s3 + $0x30] sm:$0xff]
    %v2050 = vld [vmem:[%s3 + $0x38] sm:$0xff]
    %v2051 = vld [vmem:[%s3 + $0x40] sm:$0xff]
    %v2052 = vld [vmem:[%s3 + $0x48] sm:$0xff]
    %v2053 = vld [vmem:[%s3 + $0x50] sm:$0xff]
    %v2054 = vld [vmem:[%s3 + $0x58] sm:$0xff]
    %v2055 = vld [vmem:[%s3 + $0x60] sm:$0xff]
    %v2056 = vld [vmem:[%s3 + $0x68] sm:$0xff]
    %v2057 = vld [vmem:[%s3 + $0x70] sm:$0xff]
    %v2058 = vld [vmem:[%s3 + $0x78] sm:$0xff]
    %v2059 = vld [vmem:[%s3 + $0x80] sm:$0xff]
    %v2060 = vld [vmem:[%s3 + $0x88] sm:$0xff]
    %v2061 = vld [vmem:[%s3 + $0x90] sm:$0xff]
    %v2062 = vld [vmem:[%s3 + $0x98] sm:$0xff]
    %v2063 = vld [vmem:[%s3 + $0xa0] sm:$0xff]
    %v2064 = vld [vmem:[%s3 + $0xa8] sm:$0xff]
    %v2065 = vld [vmem:[%s3 + $0xb0] sm:$0xff]
    %v2066 = vld [vmem:[%s3 + $0xb8] sm:$0xff]
    %v2067 = vld [vmem:[%s3 + $0xc0] sm:$0xff]
    %v2068 = vld [vmem:[%s3 + $0xc8] sm:$0xff]
    %v2069 = vld [vmem:[%s3 + $0xd0] sm:$0xff]
    %v2070 = vld [vmem:[%s3 + $0xd8] sm:$0xff]
    %v2071 = vld [vmem:[%s3 + $0xe0] sm:$0xff]
    %v2072 = vld [vmem:[%s3 + $0xe8] sm:$0xff]
    %v2073 = vld [vmem:[%s3 + $0xf0] sm:$0xff]
    %v2074 = vld [vmem:[%s3 + $0xf8] sm:$0xff]
    %v2075 = vld [vmem:[%s3 + $0x100] sm:$0xff]
    %v2076 = vld [vmem:[%s3 + $0x108] sm:$0xff]
    %v2077 = vld [vmem:[%s3 + $0x110] sm:$0xff]
    %v2078 = vld [vmem:[%s3 + $0x118] sm:$0xff]
    %v2079 = vld [vmem:[%s3 + $0x120] sm:$0xff]
    %v2080 = vld [vmem:[%s3 + $0x128] sm:$0xff]
    %v2081 = vld [vmem:[%s3 + $0x130] sm:$0xff]
    %v2082 = vld [vmem:[%s3 + $0x138] sm:$0xff]
    %v2083 = vld [vmem:[%s3 + $0x140] sm:$0xff]
    %v2084 = vld [vmem:[%s3 + $0x148] sm:$0xff]
    %v2085 = vld [vmem:[%s3 + $0x150] sm:$0xff]
    %v2086 = vld [vmem:[%s3 + $0x158] sm:$0xff]
    %v2087 = vld [vmem:[%s3 + $0x160] sm:$0xff]
    %v2088 = vld [vmem:[%s3 + $0x168] sm:$0xff]
    %v2089 = vld [vmem:[%s3 + $0x170] sm:$0xff]
    %v2090 = vld [vmem:[%s3 + $0x178] sm:$0xff]
    %v2091 = vld [vmem:[%s3 + $0x180] sm:$0xff]
    %v2092 = vld [vmem:[%s3 + $0x188] sm:$0xff]
    %v2093 = vld [vmem:[%s3 + $0x190] sm:$0xff]
    %v2094 = vld [vmem:[%s3 + $0x198] sm:$0xff]
    %v2095 = vld [vmem:[%s3 + $0x1a0] sm:$0xff]
    %v2096 = vld [vmem:[%s3 + $0x1a8] sm:$0xff]
    %v2097 = vld [vmem:[%s3 + $0x1b0] sm:$0xff]
    %v2098 = vld [vmem:[%s3 + $0x1b8] sm:$0xff]
    %v2099 = vld [vmem:[%s3 + $0x1c0] sm:$0xff]
    %v2100 = vld [vmem:[%s3 + $0x1c8] sm:$0xff]
    %v2101 = vld [vmem:[%s3 + $0x1d0] sm:$0xff]
    %v2102 = vld [vmem:[%s3 + $0x1d8] sm:$0xff]
    %v2103 = vld [vmem:[%s3 + $0x1e0] sm:$0xff]
    %v2104 = vld [vmem:[%s3 + $0x1e8] sm:$0xff]
    %v2105 = vld [vmem:[%s3 + $0x1f0] sm:$0xff]
    %v2106 = vld [vmem:[%s3 + $0x1f8] sm:$0xff]
    %v2171 = vunpack.c.l.b16 %v2043
    %v2172 = vunpack.c.h.b16 %v2043
    %v2173 = vunpack.c.l.b16 %v2044
    %v2174 = vunpack.c.h.b16 %v2044
    %v2175 = vunpack.c.l.b16 %v2045
    %v2176 = vunpack.c.h.b16 %v2045
    %v2177 = vunpack.c.l.b16 %v2046
    %v2178 = vunpack.c.h.b16 %v2046
    %v2179 = vunpack.c.l.b16 %v2047
    %v2180 = vunpack.c.h.b16 %v2047
    %v2181 = vunpack.c.l.b16 %v2048
    %v2182 = vunpack.c.h.b16 %v2048
    %v2183 = vunpack.c.l.b16 %v2049
    %v2184 = vunpack.c.h.b16 %v2049
    %v2185 = vunpack.c.l.b16 %v2050
    %v2186 = vunpack.c.h.b16 %v2050
    %v2187 = vunpack.c.l.b16 %v2051
    %v2188 = vunpack.c.h.b16 %v2051
    %v2189 = vunpack.c.l.b16 %v2052
    %v2190 = vunpack.c.h.b16 %v2052
    %v2191 = vunpack.c.l.b16 %v2053
    %v2192 = vunpack.c.h.b16 %v2053
    %v2193 = vunpack.c.l.b16 %v2054
    %v2194 = vunpack.c.h.b16 %v2054
    %v2195 = vunpack.c.l.b16 %v2055
    %v2196 = vunpack.c.h.b16 %v2055
    %v2197 = vunpack.c.l.b16 %v2056
    %v2198 = vunpack.c.h.b16 %v2056
    %v2199 = vunpack.c.l.b16 %v2057
    %v2200 = vunpack.c.h.b16 %v2057
    %v2201 = vunpack.c.l.b16 %v2058
    %v2202 = vunpack.c.h.b16 %v2058
    %v2203 = vunpack.c.l.b16 %v2059
    %v2204 = vunpack.c.h.b16 %v2059
    %v2205 = vunpack.c.l.b16 %v2060
    %v2206 = vunpack.c.h.b16 %v2060
    %v2207 = vunpack.c.l.b16 %v2061
    %v2208 = vunpack.c.h.b16 %v2061
    %v2209 = vunpack.c.l.b16 %v2062
    %v2210 = vunpack.c.h.b16 %v2062
    %v2211 = vunpack.c.l.b16 %v2063
    %v2212 = vunpack.c.h.b16 %v2063
    %v2213 = vunpack.c.l.b16 %v2064
    %v2214 = vunpack.c.h.b16 %v2064
    %v2215 = vunpack.c.l.b16 %v2065
    %v2216 = vunpack.c.h.b16 %v2065
    %v2217 = vunpack.c.l.b16 %v2066
    %v2218 = vunpack.c.h.b16 %v2066
    %v2219 = vunpack.c.l.b16 %v2067
    %v2220 = vunpack.c.h.b16 %v2067
    %v2221 = vunpack.c.l.b16 %v2068
    %v2222 = vunpack.c.h.b16 %v2068
    %v2223 = vunpack.c.l.b16 %v2069
    %v2224 = vunpack.c.h.b16 %v2069
    %v2225 = vunpack.c.l.b16 %v2070
    %v2226 = vunpack.c.h.b16 %v2070
    %v2227 = vunpack.c.l.b16 %v2071
    %v2228 = vunpack.c.h.b16 %v2071
    %v2229 = vunpack.c.l.b16 %v2072
    %v2230 = vunpack.c.h.b16 %v2072
    %v2231 = vunpack.c.l.b16 %v2073
    %v2232 = vunpack.c.h.b16 %v2073
    %v2233 = vunpack.c.l.b16 %v2074
    %v2234 = vunpack.c.h.b16 %v2074
    %v2235 = vunpack.c.l.b16 %v2075
    %v2236 = vunpack.c.h.b16 %v2075
    %v2237 = vunpack.c.l.b16 %v2076
    %v2238 = vunpack.c.h.b16 %v2076
    %v2239 = vunpack.c.l.b16 %v2077
    %v2240 = vunpack.c.h.b16 %v2077
    %v2241 = vunpack.c.l.b16 %v2078
    %v2242 = vunpack.c.h.b16 %v2078
    %v2243 = vunpack.c.l.b16 %v2079
    %v2244 = vunpack.c.h.b16 %v2079
    %v2245 = vunpack.c.l.b16 %v2080
    %v2246 = vunpack.c.h.b16 %v2080
    %v2247 = vunpack.c.l.b16 %v2081
    %v2248 = vunpack.c.h.b16 %v2081
    %v2249 = vunpack.c.l.b16 %v2082
    %v2250 = vunpack.c.h.b16 %v2082
    %v2251 = vunpack.c.l.b16 %v2083
    %v2252 = vunpack.c.h.b16 %v2083
    %v2253 = vunpack.c.l.b16 %v2084
    %v2254 = vunpack.c.h.b16 %v2084
    %v2255 = vunpack.c.l.b16 %v2085
    %v2256 = vunpack.c.h.b16 %v2085
    %v2257 = vunpack.c.l.b16 %v2086
    %v2258 = vunpack.c.h.b16 %v2086
    %v2259 = vunpack.c.l.b16 %v2087
    %v2260 = vunpack.c.h.b16 %v2087
    %v2261 = vunpack.c.l.b16 %v2088
    %v2262 = vunpack.c.h.b16 %v2088
    %v2263 = vunpack.c.l.b16 %v2089
    %v2264 = vunpack.c.h.b16 %v2089
    %v2265 = vunpack.c.l.b16 %v2090
    %v2266 = vunpack.c.h.b16 %v2090
    %v2267 = vunpack.c.l.b16 %v2091
    %v2268 = vunpack.c.h.b16 %v2091
    %v2269 = vunpack.c.l.b16 %v2092
    %v2270 = vunpack.c.h.b16 %v2092
    %v2271 = vunpack.c.l.b16 %v2093
    %v2272 = vunpack.c.h.b16 %v2093
    %v2273 = vunpack.c.l.b16 %v2094
    %v2274 = vunpack.c.h.b16 %v2094
    %v2275 = vunpack.c.l.b16 %v2095
    %v2276 = vunpack.c.h.b16 %v2095
    %v2277 = vunpack.c.l.b16 %v2096
    %v2278 = vunpack.c.h.b16 %v2096
    %v2279 = vunpack.c.l.b16 %v2097
    %v2280 = vunpack.c.h.b16 %v2097
    %v2281 = vunpack.c.l.b16 %v2098
    %v2282 = vunpack.c.h.b16 %v2098
    %v2283 = vunpack.c.l.b16 %v2099
    %v2284 = vunpack.c.h.b16 %v2099
    %v2285 = vunpack.c.l.b16 %v2100
    %v2286 = vunpack.c.h.b16 %v2100
    %v2287 = vunpack.c.l.b16 %v2101
    %v2288 = vunpack.c.h.b16 %v2101
    %v2289 = vunpack.c.l.b16 %v2102
    %v2290 = vunpack.c.h.b16 %v2102
    %v2291 = vunpack.c.l.b16 %v2103
    %v2292 = vunpack.c.h.b16 %v2103
    %v2293 = vunpack.c.l.b16 %v2104
    %v2294 = vunpack.c.h.b16 %v2104
    %v2295 = vunpack.c.l.b16 %v2105
    %v2296 = vunpack.c.h.b16 %v2105
    %v2297 = vunpack.c.l.b16 %v2106
    %v2298 = vunpack.c.h.b16 %v2106
    %v2299 = vpack.c.b16 %v2173, %v2171
    %v2300 = vpack.c.b16 %v2174, %v2172
    %v2301 = vpack.c.b16 %v2177, %v2175
    %v2302 = vpack.c.b16 %v2178, %v2176
    %v2303 = vpack.c.b16 %v2181, %v2179
    %v2304 = vpack.c.b16 %v2182, %v2180
    %v2305 = vpack.c.b16 %v2185, %v2183
    %v2306 = vpack.c.b16 %v2186, %v2184
    %v2307 = vpack.c.b16 %v2189, %v2187
    %v2308 = vpack.c.b16 %v2190, %v2188
    %v2309 = vpack.c.b16 %v2193, %v2191
    %v2310 = vpack.c.b16 %v2194, %v2192
    %v2311 = vpack.c.b16 %v2197, %v2195
    %v2312 = vpack.c.b16 %v2198, %v2196
    %v2313 = vpack.c.b16 %v2201, %v2199
    %v2314 = vpack.c.b16 %v2202, %v2200
    %v2315 = vpack.c.b16 %v2205, %v2203
    %v2316 = vpack.c.b16 %v2206, %v2204
    %v2317 = vpack.c.b16 %v2209, %v2207
    %v2318 = vpack.c.b16 %v2210, %v2208
    %v2319 = vpack.c.b16 %v2213, %v2211
    %v2320 = vpack.c.b16 %v2214, %v2212
    %v2321 = vpack.c.b16 %v2217, %v2215
    %v2322 = vpack.c.b16 %v2218, %v2216
    %v2323 = vpack.c.b16 %v2221, %v2219
    %v2324 = vpack.c.b16 %v2222, %v2220
    %v2325 = vpack.c.b16 %v2225, %v2223
    %v2326 = vpack.c.b16 %v2226, %v2224
    %v2327 = vpack.c.b16 %v2229, %v2227
    %v2328 = vpack.c.b16 %v2230, %v2228
    %v2329 = vpack.c.b16 %v2233, %v2231
    %v2330 = vpack.c.b16 %v2234, %v2232
    %v2331 = vpack.c.b16 %v2237, %v2235
    %v2332 = vpack.c.b16 %v2238, %v2236
    %v2333 = vpack.c.b16 %v2241, %v2239
    %v2334 = vpack.c.b16 %v2242, %v2240
    %v2335 = vpack.c.b16 %v2245, %v2243
    %v2336 = vpack.c.b16 %v2246, %v2244
    %v2337 = vpack.c.b16 %v2249, %v2247
    %v2338 = vpack.c.b16 %v2250, %v2248
    %v2339 = vpack.c.b16 %v2253, %v2251
    %v2340 = vpack.c.b16 %v2254, %v2252
    %v2341 = vpack.c.b16 %v2257, %v2255
    %v2342 = vpack.c.b16 %v2258, %v2256
    %v2343 = vpack.c.b16 %v2261, %v2259
    %v2344 = vpack.c.b16 %v2262, %v2260
    %v2345 = vpack.c.b16 %v2265, %v2263
    %v2346 = vpack.c.b16 %v2266, %v2264
    %v2347 = vpack.c.b16 %v2269, %v2267
    %v2348 = vpack.c.b16 %v2270, %v2268
    %v2349 = vpack.c.b16 %v2273, %v2271
    %v2350 = vpack.c.b16 %v2274, %v2272
    %v2351 = vpack.c.b16 %v2277, %v2275
    %v2352 = vpack.c.b16 %v2278, %v2276
    %v2353 = vpack.c.b16 %v2281, %v2279
    %v2354 = vpack.c.b16 %v2282, %v2280
    %v2355 = vpack.c.b16 %v2285, %v2283
    %v2356 = vpack.c.b16 %v2286, %v2284
    %v2357 = vpack.c.b16 %v2289, %v2287
    %v2358 = vpack.c.b16 %v2290, %v2288
    %v2359 = vpack.c.b16 %v2293, %v2291
    %v2360 = vpack.c.b16 %v2294, %v2292
    %v2361 = vpack.c.b16 %v2297, %v2295
    %v2362 = vpack.c.b16 %v2298, %v2296
    %2427 = vmatprep.subr.bf16.mxu0 %v2300
    %2428 = vmatpush1.bf16.msra.mxu0 %v2299
    %2429 = vmatprep.subr.bf16.mxu0 %v2302
    %2430 = vmatpush1.bf16.msra.mxu0 %v2301
    %2431 = vmatprep.subr.bf16.mxu0 %v2304
    %2432 = vmatpush1.bf16.msra.mxu0 %v2303
    %2433 = vmatprep.subr.bf16.mxu0 %v2306
    %2434 = vmatpush1.bf16.msra.mxu0 %v2305
    %2435 = vmatprep.subr.bf16.mxu0 %v2308
    %2436 = vmatpush1.bf16.msra.mxu0 %v2307
    %2437 = vmatprep.subr.bf16.mxu0 %v2310
    %2438 = vmatpush1.bf16.msra.mxu0 %v2309
    %2439 = vmatprep.subr.bf16.mxu0 %v2312
    %2440 = vmatpush1.bf16.msra.mxu0 %v2311
    %2441 = vmatprep.subr.bf16.mxu0 %v2314
    %2442 = vmatpush1.bf16.msra.mxu0 %v2313
    %2443 = vmatprep.subr.bf16.mxu0 %v2316
    %2444 = vmatpush1.bf16.msra.mxu0 %v2315
    %2445 = vmatprep.subr.bf16.mxu0 %v2318
    %2446 = vmatpush1.bf16.msra.mxu0 %v2317
    %2447 = vmatprep.subr.bf16.mxu0 %v2320
    %2448 = vmatpush1.bf16.msra.mxu0 %v2319
    %2449 = vmatprep.subr.bf16.mxu0 %v2322
    %2450 = vmatpush1.bf16.msra.mxu0 %v2321
    %2451 = vmatprep.subr.bf16.mxu0 %v2324
    %2452 = vmatpush1.bf16.msra.mxu0 %v2323
    %2453 = vmatprep.subr.bf16.mxu0 %v2326
    %2454 = vmatpush1.bf16.msra.mxu0 %v2325
    %2455 = vmatprep.subr.bf16.mxu0 %v2328
    %2456 = vmatpush1.bf16.msra.mxu0 %v2327
    %2457 = vmatprep.subr.bf16.mxu0 %v2330
    %2458 = vmatpush1.bf16.msra.mxu0 %v2329
    %2459 = vmatprep.mubr.bf16.mxu0 %v2040
    %2460 = vmatmul.mubr.bf16.gmra.mrb[0].mxu0 %v2039
    %v2461 = vpop.f32.mrb[0].mxu0
    %v2462 = vadd.f32 0.0, %v2461
    %v2463 = vpop.f32.mrb[0].mxu0
    %v2464 = vadd.f32 0.0, %v2463
    %v2465 = vpop.f32.mrb[0].mxu0
    %v2466 = vpop.f32.mrb[0].mxu0
    %2467 = vdwg.mxu0
    %2468 = vmatprep.subr.bf16.mxu0 %v2332
    %2469 = vmatpush1.bf16.msra.mxu0 %v2331
    %2470 = vmatprep.subr.bf16.mxu0 %v2334
    %2471 = vmatpush1.bf16.msra.mxu0 %v2333
    %2472 = vmatprep.subr.bf16.mxu0 %v2336
    %2473 = vmatpush1.bf16.msra.mxu0 %v2335
    %2474 = vmatprep.subr.bf16.mxu0 %v2338
    %2475 = vmatpush1.bf16.msra.mxu0 %v2337
    %2476 = vmatprep.subr.bf16.mxu0 %v2340
    %2477 = vmatpush1.bf16.msra.mxu0 %v2339
    %2478 = vmatprep.subr.bf16.mxu0 %v2342
    %2479 = vmatpush1.bf16.msra.mxu0 %v2341
    %2480 = vmatprep.subr.bf16.mxu0 %v2344
    %2481 = vmatpush1.bf16.msra.mxu0 %v2343
    %2482 = vmatprep.subr.bf16.mxu0 %v2346
    %2483 = vmatpush1.bf16.msra.mxu0 %v2345
    %2484 = vmatprep.subr.bf16.mxu0 %v2348
    %2485 = vmatpush1.bf16.msra.mxu0 %v2347
    %2486 = vmatprep.subr.bf16.mxu0 %v2350
    %2487 = vmatpush1.bf16.msra.mxu0 %v2349
    %2488 = vmatprep.subr.bf16.mxu0 %v2352
    %2489 = vmatpush1.bf16.msra.mxu0 %v2351
    %2490 = vmatprep.subr.bf16.mxu0 %v2354
    %2491 = vmatpush1.bf16.msra.mxu0 %v2353
    %2492 = vmatprep.subr.bf16.mxu0 %v2356
    %2493 = vmatpush1.bf16.msra.mxu0 %v2355
    %2494 = vmatprep.subr.bf16.mxu0 %v2358
    %2495 = vmatpush1.bf16.msra.mxu0 %v2357
    %2496 = vmatprep.subr.bf16.mxu0 %v2360
    %2497 = vmatpush1.bf16.msra.mxu0 %v2359
    %2498 = vmatprep.subr.bf16.mxu0 %v2362
    %2499 = vmatpush1.bf16.msra.mxu0 %v2361
    %2500 = vmatprep.mubr.bf16.mxu0 %v2042
    %2501 = vmatmul.mubr.bf16.gmra.mrb[0].mxu0 %v2041
    %v2502 = vpop.f32.mrb[0].mxu0
    %v2503 = vadd.f32 %v2462, %v2502
    %v2504 = vpop.f32.mrb[0].mxu0
    %v2505 = vadd.f32 %v2464, %v2504
    %v2506 = vpop.f32.mrb[0].mxu0
    %v2507 = vpop.f32.mrb[0].mxu0
    %2508 = vdwg.mxu0
    %v2509 = vld [vmem:[%s6] sm:$0xff]
    %v2510 = vld [vmem:[%s6 + $0x8] sm:$0xff]
    %v2511 = vld [vmem:[%s6 + $0x10] sm:$0xff]
    %v2512 = vld [vmem:[%s6 + $0x18] sm:$0xff]
    %v2513 = vld [vmem:[%s6 + $0x20] sm:$0xff]
    %v2514 = vld [vmem:[%s6 + $0x28] sm:$0xff]
    %v2515 = vld [vmem:[%s6 + $0x30] sm:$0xff]
    %v2516 = vld [vmem:[%s6 + $0x38] sm:$0xff]
    %v2517 = vld [vmem:[%s6 + $0x40] sm:$0xff]
    %v2518 = vld [vmem:[%s6 + $0x48] sm:$0xff]
    %v2519 = vld [vmem:[%s6 + $0x50] sm:$0xff]
    %v2520 = vld [vmem:[%s6 + $0x58] sm:$0xff]
    %v2521 = vld [vmem:[%s6 + $0x60] sm:$0xff]
    %v2522 = vld [vmem:[%s6 + $0x68] sm:$0xff]
    %v2523 = vld [vmem:[%s6 + $0x70] sm:$0xff]
    %v2524 = vld [vmem:[%s6 + $0x78] sm:$0xff]
    %v2525 = vld [vmem:[%s6 + $0x80] sm:$0xff]
    %v2526 = vld [vmem:[%s6 + $0x88] sm:$0xff]
    %v2527 = vld [vmem:[%s6 + $0x90] sm:$0xff]
    %v2528 = vld [vmem:[%s6 + $0x98] sm:$0xff]
    %v2529 = vld [vmem:[%s6 + $0xa0] sm:$0xff]
    %v2530 = vld [vmem:[%s6 + $0xa8] sm:$0xff]
    %v2531 = vld [vmem:[%s6 + $0xb0] sm:$0xff]
    %v2532 = vld [vmem:[%s6 + $0xb8] sm:$0xff]
    %v2533 = vld [vmem:[%s6 + $0xc0] sm:$0xff]
    %v2534 = vld [vmem:[%s6 + $0xc8] sm:$0xff]
    %v2535 = vld [vmem:[%s6 + $0xd0] sm:$0xff]
    %v2536 = vld [vmem:[%s6 + $0xd8] sm:$0xff]
    %v2537 = vld [vmem:[%s6 + $0xe0] sm:$0xff]
    %v2538 = vld [vmem:[%s6 + $0xe8] sm:$0xff]
    %v2539 = vld [vmem:[%s6 + $0xf0] sm:$0xff]
    %v2540 = vld [vmem:[%s6 + $0xf8] sm:$0xff]
    %v2541 = vld [vmem:[%s7] sm:$0xff]
    %v2542 = vld [vmem:[%s7 + $0x8] sm:$0xff]
    %v2543 = vld [vmem:[%s7 + $0x10] sm:$0xff]
    %v2544 = vld [vmem:[%s7 + $0x18] sm:$0xff]
    %2545 = vmatprep.subr.mxu0 0.0
    %2546 = vmatpush1.msra.mxu0 %v2509
    %2547 = vmatprep.subr.mxu0 0.0
    %2548 = vmatpush1.msra.mxu0 %v2510
    %2549 = vmatprep.subr.mxu0 0.0
    %2550 = vmatpush1.msra.mxu0 %v2511
    %2551 = vmatprep.subr.mxu0 0.0
    %2552 = vmatpush1.msra.mxu0 %v2512
    %2553 = vmatprep.subr.mxu0 0.0
    %2554 = vmatpush1.msra.mxu0 %v2513
    %2555 = vmatprep.subr.mxu0 0.0
    %2556 = vmatpush1.msra.mxu0 %v2514
    %2557 = vmatprep.subr.mxu0 0.0
    %2558 = vmatpush1.msra.mxu0 %v2515
    %2559 = vmatprep.subr.mxu0 0.0
    %2560 = vmatpush1.msra.mxu0 %v2516
    %2561 = vmatprep.subr.mxu0 0.0
    %2562 = vmatpush1.msra.mxu0 %v2517
    %2563 = vmatprep.subr.mxu0 0.0
    %2564 = vmatpush1.msra.mxu0 %v2518
    %2565 = vmatprep.subr.mxu0 0.0
    %2566 = vmatpush1.msra.mxu0 %v2519
    %2567 = vmatprep.subr.mxu0 0.0
    %2568 = vmatpush1.msra.mxu0 %v2520
    %2569 = vmatprep.subr.mxu0 0.0
    %2570 = vmatpush1.msra.mxu0 %v2521
    %2571 = vmatprep.subr.mxu0 0.0
    %2572 = vmatpush1.msra.mxu0 %v2522
    %2573 = vmatprep.subr.mxu0 0.0
    %2574 = vmatpush1.msra.mxu0 %v2523
    %2575 = vmatprep.subr.mxu0 0.0
    %2576 = vmatpush1.msra.mxu0 %v2524
    %2577 = vmatprep.subr.mxu0 0.0
    %2578 = vmatpush1.msra.mxu0 %v2525
    %2579 = vmatprep.subr.mxu0 0.0
    %2580 = vmatpush1.msra.mxu0 %v2526
    %2581 = vmatprep.subr.mxu0 0.0
    %2582 = vmatpush1.msra.mxu0 %v2527
    %2583 = vmatprep.subr.mxu0 0.0
    %2584 = vmatpush1.msra.mxu0 %v2528
    %2585 = vmatprep.subr.mxu0 0.0
    %2586 = vmatpush1.msra.mxu0 %v2529
    %2587 = vmatprep.subr.mxu0 0.0
    %2588 = vmatpush1.msra.mxu0 %v2530
    %2589 = vmatprep.subr.mxu0 0.0
    %2590 = vmatpush1.msra.mxu0 %v2531
    %2591 = vmatprep.subr.mxu0 0.0
    %2592 = vmatpush1.msra.mxu0 %v2532
    %2593 = vmatprep.subr.mxu0 0.0
    %2594 = vmatpush1.msra.mxu0 %v2533
    %2595 = vmatprep.subr.mxu0 0.0
    %2596 = vmatpush1.msra.mxu0 %v2534
    %2597 = vmatprep.subr.mxu0 0.0
    %2598 = vmatpush1.msra.mxu0 %v2535
    %2599 = vmatprep.subr.mxu0 0.0
    %2600 = vmatpush1.msra.mxu0 %v2536
    %2601 = vmatprep.subr.mxu0 0.0
    %2602 = vmatpush1.msra.mxu0 %v2537
    %2603 = vmatprep.subr.mxu0 0.0
    %2604 = vmatpush1.msra.mxu0 %v2538
    %2605 = vmatprep.subr.mxu0 0.0
    %2606 = vmatpush1.msra.mxu0 %v2539
    %2607 = vmatprep.subr.mxu0 0.0
    %2608 = vmatpush1.msra.mxu0 %v2540
    %2609 = vmatprep.mubr.f32.mxu0 %v2505
    %2610 = vmatmul.mubr.f32.gmra.mrb[0].mxu0 %v2503
    %v2611 = vpop.f32.mrb[0].mxu0
    %v2612 = vadd.f32 0.0, %v2611
    %v2613 = vpop.f32.mrb[0].mxu0
    %2614 = vdwg.mxu0
    %vm2615 = vcmask 123904
    %v2616 = vsel %vm2615, %v2612, 0.0
    %v2617 = vrot.slane %v2616, 4
    %v2618 = vadd.f32 %v2616, %v2617
    %v2619 = vrot.slane %v2618, 2
    %v2620 = vadd.f32 %v2618, %v2619
    %v2621 = vrot.slane %v2620, 1
    %v2622 = vadd.f32 %v2620, %v2621
    %v2623 = vrcp.pop 32.0
    %v2624 = vmul.f32 %v2622, %v2623
    %vm2625 = vcmask 130048
    %v2627 = vsel %vm2625, %v2624, 0
    %2629 = vmatprep.subr.mxu0 %v2542
    %2630 = vmatpush1.msra.mxu0 %v2541
    %2631 = vmatprep.subr.mxu0 %v2544
    %2632 = vmatpush1.msra.mxu0 %v2543
    %2633 = vmatprep.subr.mxu0 0.0
    %2634 = vmatpush1.msra.mxu0 0.0
    %2635 = vmatprep.subr.mxu0 0.0
    %2636 = vmatpush1.msra.mxu0 0.0
    %2637 = vmatprep.subr.mxu0 0.0
    %2638 = vmatpush1.msra.mxu0 0.0
    %2639 = vmatprep.subr.mxu0 0.0
    %2640 = vmatpush1.msra.mxu0 0.0
    %2641 = vmatprep.subr.mxu0 0.0
    %2642 = vmatpush1.msra.mxu0 0.0
    %2643 = vmatprep.subr.mxu0 0.0
    %2644 = vmatpush1.msra.mxu0 0.0
    %2645 = vmatprep.subr.mxu0 0.0
    %2646 = vmatpush1.msra.mxu0 0.0
    %2647 = vmatprep.subr.mxu0 0.0
    %2648 = vmatpush1.msra.mxu0 0.0
    %2649 = vmatprep.subr.mxu0 0.0
    %2650 = vmatpush1.msra.mxu0 0.0
    %2651 = vmatprep.subr.mxu0 0.0
    %2652 = vmatpush1.msra.mxu0 0.0
    %2653 = vmatprep.subr.mxu0 0.0
    %2654 = vmatpush1.msra.mxu0 0.0
    %2655 = vmatprep.subr.mxu0 0.0
    %2656 = vmatpush1.msra.mxu0 0.0
    %2657 = vmatprep.subr.mxu0 0.0
    %2658 = vmatpush1.msra.mxu0 0.0
    %2659 = vmatprep.subr.mxu0 0.0
    %2660 = vmatpush1.msra.mxu0 0.0
    %2661 = vmatprep.subr.mxu0 0.0
    %2662 = vmatpush1.msra.mxu0 0.0
    %2663 = vmatprep.subr.mxu0 0.0
    %2664 = vmatpush1.msra.mxu0 0.0
    %2665 = vmatprep.subr.mxu0 0.0
    %2666 = vmatpush1.msra.mxu0 0.0
    %2667 = vmatprep.subr.mxu0 0.0
    %2668 = vmatpush1.msra.mxu0 0.0
    %2669 = vmatprep.subr.mxu0 0.0
    %2670 = vmatpush1.msra.mxu0 0.0
    %2671 = vmatprep.subr.mxu0 0.0
    %2672 = vmatpush1.msra.mxu0 0.0
    %2673 = vmatprep.subr.mxu0 0.0
    %2674 = vmatpush1.msra.mxu0 0.0
    %2675 = vmatprep.subr.mxu0 0.0
    %2676 = vmatpush1.msra.mxu0 0.0
    %2677 = vmatprep.subr.mxu0 0.0
    %2678 = vmatpush1.msra.mxu0 0.0
    %2679 = vmatprep.subr.mxu0 0.0
    %2680 = vmatpush1.msra.mxu0 0.0
    %2681 = vmatprep.subr.mxu0 0.0
    %2682 = vmatpush1.msra.mxu0 0.0
    %2683 = vmatprep.subr.mxu0 0.0
    %2684 = vmatpush1.msra.mxu0 0.0
    %2685 = vmatprep.subr.mxu0 0.0
    %2686 = vmatpush1.msra.mxu0 0.0
    %2687 = vmatprep.subr.mxu0 0.0
    %2688 = vmatpush1.msra.mxu0 0.0
    %2689 = vmatprep.subr.mxu0 0.0
    %2690 = vmatpush1.msra.mxu0 0.0
    %2691 = vmatprep.subr.mxu0 0.0
    %2692 = vmatpush1.msra.mxu0 0.0
    %2693 = vmatprep.mubr.f32.mxu0 0.0
    %2694 = vmatmul.mubr.f32.gmra.mrb[0].mxu0 %v2627
    %v2695 = vpop.f32.mrb[0].mxu0
    %v2696 = vadd.f32 0.0, %v2695
    %v2697 = vpop.f32.mrb[0].mxu0
    %v2698 = vadd.f32 0.0, %v2697
    %2699 = vdwg.mxu0
    %v2700 = vlaneseq
    %v2701 = vshrl.u32 %v2700, 7
    %v2702 = vsub.s32 0, %v2701
    %v2703 = vrot.slane %v2696, %v2702
    %v2704 = vlaneseq
    %v2705 = vshrl.u32 %v2704, 7
    %v2706 = vsub.s32 0, %v2705
    %v2707 = vrot.slane %v2698, %v2706
    %v2708 = vsub.f32 %v2503, %v2703
    %v2709 = vsub.f32 %v2505, %v2707
    %v2710 = vmul.f32 %v2708, %v2708
    %v2711 = vmul.f32 %v2709, %v2709
    %2712 = vmatprep.subr.mxu0 0.0
    %2713 = vmatpush1.msra.mxu0 %v2509
    %2714 = vmatprep.subr.mxu0 0.0
    %2715 = vmatpush1.msra.mxu0 %v2510
    %2716 = vmatprep.subr.mxu0 0.0
    %2717 = vmatpush1.msra.mxu0 %v2511
    %2718 = vmatprep.subr.mxu0 0.0
    %2719 = vmatpush1.msra.mxu0 %v2512
    %2720 = vmatprep.subr.mxu0 0.0
    %2721 = vmatpush1.msra.mxu0 %v2513
    %2722 = vmatprep.subr.mxu0 0.0
    %2723 = vmatpush1.msra.mxu0 %v2514
    %2724 = vmatprep.subr.mxu0 0.0
    %2725 = vmatpush1.msra.mxu0 %v2515
    %2726 = vmatprep.subr.mxu0 0.0
    %2727 = vmatpush1.msra.mxu0 %v2516
    %2728 = vmatprep.subr.mxu0 0.0
    %2729 = vmatpush1.msra.mxu0 %v2517
    %2730 = vmatprep.subr.mxu0 0.0
    %2731 = vmatpush1.msra.mxu0 %v2518
    %2732 = vmatprep.subr.mxu0 0.0
    %2733 = vmatpush1.msra.mxu0 %v2519
    %2734 = vmatprep.subr.mxu0 0.0
    %2735 = vmatpush1.msra.mxu0 %v2520
    %2736 = vmatprep.subr.mxu0 0.0
    %2737 = vmatpush1.msra.mxu0 %v2521
    %2738 = vmatprep.subr.mxu0 0.0
    %2739 = vmatpush1.msra.mxu0 %v2522
    %2740 = vmatprep.subr.mxu0 0.0
    %2741 = vmatpush1.msra.mxu0 %v2523
    %2742 = vmatprep.subr.mxu0 0.0
    %2743 = vmatpush1.msra.mxu0 %v2524
    %2744 = vmatprep.subr.mxu0 0.0
    %2745 = vmatpush1.msra.mxu0 %v2525
    %2746 = vmatprep.subr.mxu0 0.0
    %2747 = vmatpush1.msra.mxu0 %v2526
    %2748 = vmatprep.subr.mxu0 0.0
    %2749 = vmatpush1.msra.mxu0 %v2527
    %2750 = vmatprep.subr.mxu0 0.0
    %2751 = vmatpush1.msra.mxu0 %v2528
    %2752 = vmatprep.subr.mxu0 0.0
    %2753 = vmatpush1.msra.mxu0 %v2529
    %2754 = vmatprep.subr.mxu0 0.0
    %2755 = vmatpush1.msra.mxu0 %v2530
    %2756 = vmatprep.subr.mxu0 0.0
    %2757 = vmatpush1.msra.mxu0 %v2531
    %2758 = vmatprep.subr.mxu0 0.0
    %2759 = vmatpush1.msra.mxu0 %v2532
    %2760 = vmatprep.subr.mxu0 0.0
    %2761 = vmatpush1.msra.mxu0 %v2533
    %2762 = vmatprep.subr.mxu0 0.0
    %2763 = vmatpush1.msra.mxu0 %v2534
    %2764 = vmatprep.subr.mxu0 0.0
    %2765 = vmatpush1.msra.mxu0 %v2535
    %2766 = vmatprep.subr.mxu0 0.0
    %2767 = vmatpush1.msra.mxu0 %v2536
    %2768 = vmatprep.subr.mxu0 0.0
    %2769 = vmatpush1.msra.mxu0 %v2537
    %2770 = vmatprep.subr.mxu0 0.0
    %2771 = vmatpush1.msra.mxu0 %v2538
    %2772 = vmatprep.subr.mxu0 0.0
    %2773 = vmatpush1.msra.mxu0 %v2539
    %2774 = vmatprep.subr.mxu0 0.0
    %2775 = vmatpush1.msra.mxu0 %v2540
    %2776 = vmatprep.mubr.f32.mxu0 %v2711
    %2777 = vmatmul.mubr.f32.gmra.mrb[0].mxu0 %v2710
    %v2778 = vpop.f32.mrb[0].mxu0
    %v2779 = vadd.f32 0.0, %v2778
    %v2780 = vpop.f32.mrb[0].mxu0
    %2781 = vdwg.mxu0
    %v2782 = vsel %vm2615, %v2779, 0.0
    %v2783 = vrot.slane %v2782, 4
    %v2784 = vadd.f32 %v2782, %v2783
    %v2785 = vrot.slane %v2784, 2
    %v2786 = vadd.f32 %v2784, %v2785
    %v2787 = vrot.slane %v2786, 1
    %v2788 = vadd.f32 %v2786, %v2787
    %v2789 = vmul.f32 %v2788, %v2623
    %v2790 = vld [vmem:[%s4] sm:$0x1]
    %v2791 = vadd.f32 %v2789, 1e-05
    %v2792 = vrsqrt.pop %v2791
    %v2793 = vmul.f32 %v2790, %v2792
    %v2795 = vsel %vm2625, %v2793, 0
    %2797 = vmatprep.subr.mxu0 %v2542
    %2798 = vmatpush1.msra.mxu0 %v2541
    %2799 = vmatprep.subr.mxu0 %v2544
    %2800 = vmatpush1.msra.mxu0 %v2543
    %2801 = vmatprep.subr.mxu0 0.0
    %2802 = vmatpush1.msra.mxu0 0.0
    %2803 = vmatprep.subr.mxu0 0.0
    %2804 = vmatpush1.msra.mxu0 0.0
    %2805 = vmatprep.subr.mxu0 0.0
    %2806 = vmatpush1.msra.mxu0 0.0
    %2807 = vmatprep.subr.mxu0 0.0
    %2808 = vmatpush1.msra.mxu0 0.0
    %2809 = vmatprep.subr.mxu0 0.0
    %2810 = vmatpush1.msra.mxu0 0.0
    %2811 = vmatprep.subr.mxu0 0.0
    %2812 = vmatpush1.msra.mxu0 0.0
    %2813 = vmatprep.subr.mxu0 0.0
    %2814 = vmatpush1.msra.mxu0 0.0
    %2815 = vmatprep.subr.mxu0 0.0
    %2816 = vmatpush1.msra.mxu0 0.0
    %2817 = vmatprep.subr.mxu0 0.0
    %2818 = vmatpush1.msra.mxu0 0.0
    %2819 = vmatprep.subr.mxu0 0.0
    %2820 = vmatpush1.msra.mxu0 0.0
    %2821 = vmatprep.subr.mxu0 0.0
    %2822 = vmatpush1.msra.mxu0 0.0
    %2823 = vmatprep.subr.mxu0 0.0
    %2824 = vmatpush1.msra.mxu0 0.0
    %2825 = vmatprep.subr.mxu0 0.0
    %2826 = vmatpush1.msra.mxu0 0.0
    %2827 = vmatprep.subr.mxu0 0.0
    %2828 = vmatpush1.msra.mxu0 0.0
    %2829 = vmatprep.subr.mxu0 0.0
    %2830 = vmatpush1.msra.mxu0 0.0
    %2831 = vmatprep.subr.mxu0 0.0
    %2832 = vmatpush1.msra.mxu0 0.0
    %2833 = vmatprep.subr.mxu0 0.0
    %2834 = vmatpush1.msra.mxu0 0.0
    %2835 = vmatprep.subr.mxu0 0.0
    %2836 = vmatpush1.msra.mxu0 0.0
    %2837 = vmatprep.subr.mxu0 0.0
    %2838 = vmatpush1.msra.mxu0 0.0
    %2839 = vmatprep.subr.mxu0 0.0
    %2840 = vmatpush1.msra.mxu0 0.0
    %2841 = vmatprep.subr.mxu0 0.0
    %2842 = vmatpush1.msra.mxu0 0.0
    %2843 = vmatprep.subr.mxu0 0.0
    %2844 = vmatpush1.msra.mxu0 0.0
    %2845 = vmatprep.subr.mxu0 0.0
    %2846 = vmatpush1.msra.mxu0 0.0
    %2847 = vmatprep.subr.mxu0 0.0
    %2848 = vmatpush1.msra.mxu0 0.0
    %2849 = vmatprep.subr.mxu0 0.0
    %2850 = vmatpush1.msra.mxu0 0.0
    %2851 = vmatprep.subr.mxu0 0.0
    %2852 = vmatpush1.msra.mxu0 0.0
    %2853 = vmatprep.subr.mxu0 0.0
    %2854 = vmatpush1.msra.mxu0 0.0
    %2855 = vmatprep.subr.mxu0 0.0
    %2856 = vmatpush1.msra.mxu0 0.0
    %2857 = vmatprep.subr.mxu0 0.0
    %2858 = vmatpush1.msra.mxu0 0.0
    %2859 = vmatprep.subr.mxu0 0.0
    %2860 = vmatpush1.msra.mxu0 0.0
    %2861 = vmatprep.mubr.f32.mxu0 0.0
    %2862 = vmatmul.mubr.f32.gmra.mrb[0].mxu0 %v2795
    %v2863 = vpop.f32.mrb[0].mxu0
    %v2864 = vadd.f32 0.0, %v2863
    %v2865 = vpop.f32.mrb[0].mxu0
    %v2866 = vadd.f32 0.0, %v2865
    %2867 = vdwg.mxu0
    %v2868 = vlaneseq
    %v2869 = vshrl.u32 %v2868, 7
    %v2870 = vsub.s32 0, %v2869
    %v2871 = vrot.slane %v2864, %v2870
    %v2872 = vlaneseq
    %v2873 = vshrl.u32 %v2872, 7
    %v2874 = vsub.s32 0, %v2873
    %v2875 = vrot.slane %v2866, %v2874
    %v2876 = vmul.f32 %v2708, %v2871
    %v2877 = vmul.f32 %v2709, %v2875
    %v2878 = vld [vmem:[%s5] sm:$0x1]
    %v2880 = vsel %vm2625, %v2878, 0
    %2882 = vmatprep.subr.mxu0 %v2542
    %2883 = vmatpush1.msra.mxu0 %v2541
    %2884 = vmatprep.subr.mxu0 %v2544
    %2885 = vmatpush1.msra.mxu0 %v2543
    %2886 = vmatprep.subr.mxu0 0.0
    %2887 = vmatpush1.msra.mxu0 0.0
    %2888 = vmatprep.subr.mxu0 0.0
    %2889 = vmatpush1.msra.mxu0 0.0
    %2890 = vmatprep.subr.mxu0 0.0
    %2891 = vmatpush1.msra.mxu0 0.0
    %2892 = vmatprep.subr.mxu0 0.0
    %2893 = vmatpush1.msra.mxu0 0.0
    %2894 = vmatprep.subr.mxu0 0.0
    %2895 = vmatpush1.msra.mxu0 0.0
    %2896 = vmatprep.subr.mxu0 0.0
    %2897 = vmatpush1.msra.mxu0 0.0
    %2898 = vmatprep.subr.mxu0 0.0
    %2899 = vmatpush1.msra.mxu0 0.0
    %2900 = vmatprep.subr.mxu0 0.0
    %2901 = vmatpush1.msra.mxu0 0.0
    %2902 = vmatprep.subr.mxu0 0.0
    %2903 = vmatpush1.msra.mxu0 0.0
    %2904 = vmatprep.subr.mxu0 0.0
    %2905 = vmatpush1.msra.mxu0 0.0
    %2906 = vmatprep.subr.mxu0 0.0
    %2907 = vmatpush1.msra.mxu0 0.0
    %2908 = vmatprep.subr.mxu0 0.0
    %2909 = vmatpush1.msra.mxu0 0.0
    %2910 = vmatprep.subr.mxu0 0.0
    %2911 = vmatpush1.msra.mxu0 0.0
    %2912 = vmatprep.subr.mxu0 0.0
    %2913 = vmatpush1.msra.mxu0 0.0
    %2914 = vmatprep.subr.mxu0 0.0
    %2915 = vmatpush1.msra.mxu0 0.0
    %2916 = vmatprep.subr.mxu0 0.0
    %2917 = vmatpush1.msra.mxu0 0.0
    %2918 = vmatprep.subr.mxu0 0.0
    %2919 = vmatpush1.msra.mxu0 0.0
    %2920 = vmatprep.subr.mxu0 0.0
    %2921 = vmatpush1.msra.mxu0 0.0
    %2922 = vmatprep.subr.mxu0 0.0
    %2923 = vmatpush1.msra.mxu0 0.0
    %2924 = vmatprep.subr.mxu0 0.0
    %2925 = vmatpush1.msra.mxu0 0.0
    %2926 = vmatprep.subr.mxu0 0.0
    %2927 = vmatpush1.msra.mxu0 0.0
    %2928 = vmatprep.subr.mxu0 0.0
    %2929 = vmatpush1.msra.mxu0 0.0
    %2930 = vmatprep.subr.mxu0 0.0
    %2931 = vmatpush1.msra.mxu0 0.0
    %2932 = vmatprep.subr.mxu0 0.0
    %2933 = vmatpush1.msra.mxu0 0.0
    %2934 = vmatprep.subr.mxu0 0.0
    %2935 = vmatpush1.msra.mxu0 0.0
    %2936 = vmatprep.subr.mxu0 0.0
    %2937 = vmatpush1.msra.mxu0 0.0
    %2938 = vmatprep.subr.mxu0 0.0
    %2939 = vmatpush1.msra.mxu0 0.0
    %2940 = vmatprep.subr.mxu0 0.0
    %2941 = vmatpush1.msra.mxu0 0.0
    %2942 = vmatprep.subr.mxu0 0.0
    %2943 = vmatpush1.msra.mxu0 0.0
    %2944 = vmatprep.subr.mxu0 0.0
    %2945 = vmatpush1.msra.mxu0 0.0
    %2946 = vmatprep.mubr.f32.mxu0 0.0
    %2947 = vmatmul.mubr.f32.gmra.mrb[0].mxu0 %v2880
    %v2948 = vpop.f32.mrb[0].mxu0
    %v2949 = vadd.f32 0.0, %v2948
    %v2950 = vpop.f32.mrb[0].mxu0
    %v2951 = vadd.f32 0.0, %v2950
    %2952 = vdwg.mxu0
    %v2953 = vlaneseq
    %v2954 = vshrl.u32 %v2953, 7
    %v2955 = vsub.s32 0, %v2954
    %v2956 = vrot.slane %v2949, %v2955
    %v2957 = vlaneseq
    %v2958 = vshrl.u32 %v2957, 7
    %v2959 = vsub.s32 0, %v2958
    %v2960 = vrot.slane %v2951, %v2959
    %v2961 = vadd.f32 %v2876, %v2956
    %v2962 = vadd.f32 %v2877, %v2960
    %vm2963 = vcmp.gt.f32.partialorder %v2961, 0.0
    %vm2964 = vcmp.gt.f32.partialorder %v2962, 0.0
    %v2965 = vmul.f32 %v2961, 0.2
    %v2966 = vmul.f32 %v2962, 0.2
    %v2967 = vsel %vm2963, %v2961, %v2965
    %v2968 = vsel %vm2964, %v2962, %v2966
    %v2969 = vpack.c.bf16 %v2967, %v2967
    %v2970 = vpack.c.bf16 %v2968, %v2968
    %v2971 = vld [vmem:[%s8] sm:$0xf]
    %v2972 = vld [vmem:[%s8 + $0x4] sm:$0xf]
    %v2973 = vld [vmem:[%s8 + $0x8] sm:$0xf]
    %v2974 = vld [vmem:[%s8 + $0xc] sm:$0xf]
    %v2975 = vld [vmem:[%s8 + $0x10] sm:$0xf]
    %v2976 = vld [vmem:[%s8 + $0x14] sm:$0xf]
    %v2977 = vld [vmem:[%s8 + $0x18] sm:$0xf]
    %v2978 = vld [vmem:[%s8 + $0x1c] sm:$0xf]
    %v2979 = vld [vmem:[%s8 + $0x20] sm:$0xf]
    %v2980 = vld [vmem:[%s8 + $0x24] sm:$0xf]
    %v2981 = vld [vmem:[%s8 + $0x28] sm:$0xf]
    %v2982 = vld [vmem:[%s8 + $0x2c] sm:$0xf]
    %v2983 = vld [vmem:[%s8 + $0x30] sm:$0xf]
    %v2984 = vld [vmem:[%s8 + $0x34] sm:$0xf]
    %v2985 = vld [vmem:[%s8 + $0x38] sm:$0xf]
    %v2986 = vld [vmem:[%s8 + $0x3c] sm:$0xf]
    %v2987 = vld [vmem:[%s8 + $0x40] sm:$0xf]
    %v2988 = vld [vmem:[%s8 + $0x44] sm:$0xf]
    %v2989 = vld [vmem:[%s8 + $0x48] sm:$0xf]
    %v2990 = vld [vmem:[%s8 + $0x4c] sm:$0xf]
    %v2991 = vld [vmem:[%s8 + $0x50] sm:$0xf]
    %v2992 = vld [vmem:[%s8 + $0x54] sm:$0xf]
    %v2993 = vld [vmem:[%s8 + $0x58] sm:$0xf]
    %v2994 = vld [vmem:[%s8 + $0x5c] sm:$0xf]
    %v2995 = vld [vmem:[%s8 + $0x60] sm:$0xf]
    %v2996 = vld [vmem:[%s8 + $0x64] sm:$0xf]
    %v2997 = vld [vmem:[%s8 + $0x68] sm:$0xf]
    %v2998 = vld [vmem:[%s8 + $0x6c] sm:$0xf]
    %v2999 = vld [vmem:[%s8 + $0x70] sm:$0xf]
    %v3000 = vld [vmem:[%s8 + $0x74] sm:$0xf]
    %v3001 = vld [vmem:[%s8 + $0x78] sm:$0xf]
    %v3002 = vld [vmem:[%s8 + $0x7c] sm:$0xf]
    %v3035 = vunpack.c.l.b16 %v2971
    %v3036 = vunpack.c.l.b16 %v2972
    %v3037 = vunpack.c.l.b16 %v2973
    %v3038 = vunpack.c.l.b16 %v2974
    %v3039 = vunpack.c.l.b16 %v2975
    %v3040 = vunpack.c.l.b16 %v2976
    %v3041 = vunpack.c.l.b16 %v2977
    %v3042 = vunpack.c.l.b16 %v2978
    %v3043 = vunpack.c.l.b16 %v2979
    %v3044 = vunpack.c.l.b16 %v2980
    %v3045 = vunpack.c.l.b16 %v2981
    %v3046 = vunpack.c.l.b16 %v2982
    %v3047 = vunpack.c.l.b16 %v2983
    %v3048 = vunpack.c.l.b16 %v2984
    %v3049 = vunpack.c.l.b16 %v2985
    %v3050 = vunpack.c.l.b16 %v2986
    %v3051 = vunpack.c.l.b16 %v2987
    %v3052 = vunpack.c.l.b16 %v2988
    %v3053 = vunpack.c.l.b16 %v2989
    %v3054 = vunpack.c.l.b16 %v2990
    %v3055 = vunpack.c.l.b16 %v2991
    %v3056 = vunpack.c.l.b16 %v2992
    %v3057 = vunpack.c.l.b16 %v2993
    %v3058 = vunpack.c.l.b16 %v2994
    %v3059 = vunpack.c.l.b16 %v2995
    %v3060 = vunpack.c.l.b16 %v2996
    %v3061 = vunpack.c.l.b16 %v2997
    %v3062 = vunpack.c.l.b16 %v2998
    %v3063 = vunpack.c.l.b16 %v2999
    %v3064 = vunpack.c.l.b16 %v3000
    %v3065 = vunpack.c.l.b16 %v3001
    %v3066 = vunpack.c.l.b16 %v3002
    %v3067 = vpack.c.b16 %v3036, %v3035
    %v3068 = vpack.c.b16 %v3038, %v3037
    %v3069 = vpack.c.b16 %v3040, %v3039
    %v3070 = vpack.c.b16 %v3042, %v3041
    %v3071 = vpack.c.b16 %v3044, %v3043
    %v3072 = vpack.c.b16 %v3046, %v3045
    %v3073 = vpack.c.b16 %v3048, %v3047
    %v3074 = vpack.c.b16 %v3050, %v3049
    %v3075 = vpack.c.b16 %v3052, %v3051
    %v3076 = vpack.c.b16 %v3054, %v3053
    %v3077 = vpack.c.b16 %v3056, %v3055
    %v3078 = vpack.c.b16 %v3058, %v3057
    %v3079 = vpack.c.b16 %v3060, %v3059
    %v3080 = vpack.c.b16 %v3062, %v3061
    %v3081 = vpack.c.b16 %v3064, %v3063
    %v3082 = vpack.c.b16 %v3066, %v3065
    %3099 = vmatprep.subr.bf16.mxu0 0
    %3100 = vmatpush1.bf16.msra.mxu0 %v3067
    %3101 = vmatprep.subr.bf16.mxu0 0
    %3102 = vmatpush1.bf16.msra.mxu0 %v3068
    %3103 = vmatprep.subr.bf16.mxu0 0
    %3104 = vmatpush1.bf16.msra.mxu0 %v3069
    %3105 = vmatprep.subr.bf16.mxu0 0
    %3106 = vmatpush1.bf16.msra.mxu0 %v3070
    %3107 = vmatprep.subr.bf16.mxu0 0
    %3108 = vmatpush1.bf16.msra.mxu0 %v3071
    %3109 = vmatprep.subr.bf16.mxu0 0
    %3110 = vmatpush1.bf16.msra.mxu0 %v3072
    %3111 = vmatprep.subr.bf16.mxu0 0
    %3112 = vmatpush1.bf16.msra.mxu0 %v3073
    %3113 = vmatprep.subr.bf16.mxu0 0
    %3114 = vmatpush1.bf16.msra.mxu0 %v3074
    %3115 = vmatprep.subr.bf16.mxu0 0
    %3116 = vmatpush1.bf16.msra.mxu0 %v3075
    %3117 = vmatprep.subr.bf16.mxu0 0
    %3118 = vmatpush1.bf16.msra.mxu0 %v3076
    %3119 = vmatprep.subr.bf16.mxu0 0
    %3120 = vmatpush1.bf16.msra.mxu0 %v3077
    %3121 = vmatprep.subr.bf16.mxu0 0
    %3122 = vmatpush1.bf16.msra.mxu0 %v3078
    %3123 = vmatprep.subr.bf16.mxu0 0
    %3124 = vmatpush1.bf16.msra.mxu0 %v3079
    %3125 = vmatprep.subr.bf16.mxu0 0
    %3126 = vmatpush1.bf16.msra.mxu0 %v3080
    %3127 = vmatprep.subr.bf16.mxu0 0
    %3128 = vmatpush1.bf16.msra.mxu0 %v3081
    %3129 = vmatprep.subr.bf16.mxu0 0
    %3130 = vmatpush1.bf16.msra.mxu0 %v3082
    %3131 = vmatprep.mubr.bf16.mxu0 %v2970
    %3132 = vmatmul.mubr.bf16.gmra.mrb[0].mxu0 %v2969
    %v3133 = vpop.f32.mrb[0].mxu0
    %v3134 = vadd.f32 0.0, %v3133
    %v3135 = vpop.f32.mrb[0].mxu0
    %v3136 = vpop.f32.mrb[0].mxu0
    %v3137 = vpop.f32.mrb[0].mxu0
    %3138 = vdwg.mxu0
    %v3139 = vld [vmem:[%s11] sm:$0xff]
    %v3140 = vld [vmem:[%s11 + $0x8] sm:$0xff]
    %v3141 = vld [vmem:[%s11 + $0x10] sm:$0xff]
    %v3142 = vld [vmem:[%s11 + $0x18] sm:$0xff]
    %v3143 = vld [vmem:[%s11 + $0x20] sm:$0xff]
    %v3144 = vld [vmem:[%s11 + $0x28] sm:$0xff]
    %v3145 = vld [vmem:[%s11 + $0x30] sm:$0xff]
    %v3146 = vld [vmem:[%s11 + $0x38] sm:$0xff]
    %v3147 = vld [vmem:[%s11 + $0x40] sm:$0xff]
    %v3148 = vld [vmem:[%s11 + $0x48] sm:$0xff]
    %v3149 = vld [vmem:[%s11 + $0x50] sm:$0xff]
    %v3150 = vld [vmem:[%s11 + $0x58] sm:$0xff]
    %v3151 = vld [vmem:[%s11 + $0x60] sm:$0xff]
    %v3152 = vld [vmem:[%s11 + $0x68] sm:$0xff]
    %v3153 = vld [vmem:[%s11 + $0x70] sm:$0xff]
    %v3154 = vld [vmem:[%s11 + $0x78] sm:$0xff]
    %v3155 = vld [vmem:[%s12] sm:$0xff]
    %v3156 = vld [vmem:[%s12 + $0x8] sm:$0xff]
    %v3157 = vld [vmem:[%s12 + $0x10] sm:$0xff]
    %v3158 = vld [vmem:[%s12 + $0x18] sm:$0xff]
    %3159 = vmatprep.subr.mxu0 0.0
    %3160 = vmatpush1.msra.mxu0 %v3139
    %3161 = vmatprep.subr.mxu0 0.0
    %3162 = vmatpush1.msra.mxu0 %v3140
    %3163 = vmatprep.subr.mxu0 0.0
    %3164 = vmatpush1.msra.mxu0 %v3141
    %3165 = vmatprep.subr.mxu0 0.0
    %3166 = vmatpush1.msra.mxu0 %v3142
    %3167 = vmatprep.subr.mxu0 0.0
    %3168 = vmatpush1.msra.mxu0 %v3143
    %3169 = vmatprep.subr.mxu0 0.0
    %3170 = vmatpush1.msra.mxu0 %v3144
    %3171 = vmatprep.subr.mxu0 0.0
    %3172 = vmatpush1.msra.mxu0 %v3145
    %3173 = vmatprep.subr.mxu0 0.0
    %3174 = vmatpush1.msra.mxu0 %v3146
    %3175 = vmatprep.subr.mxu0 0.0
    %3176 = vmatpush1.msra.mxu0 %v3147
    %3177 = vmatprep.subr.mxu0 0.0
    %3178 = vmatpush1.msra.mxu0 %v3148
    %3179 = vmatprep.subr.mxu0 0.0
    %3180 = vmatpush1.msra.mxu0 %v3149
    %3181 = vmatprep.subr.mxu0 0.0
    %3182 = vmatpush1.msra.mxu0 %v3150
    %3183 = vmatprep.subr.mxu0 0.0
    %3184 = vmatpush1.msra.mxu0 %v3151
    %3185 = vmatprep.subr.mxu0 0.0
    %3186 = vmatpush1.msra.mxu0 %v3152
    %3187 = vmatprep.subr.mxu0 0.0
    %3188 = vmatpush1.msra.mxu0 %v3153
    %3189 = vmatprep.subr.mxu0 0.0
    %3190 = vmatpush1.msra.mxu0 %v3154
    %3191 = vmatprep.subr.mxu0 0.0
    %3192 = vmatpush1.msra.mxu0 0.0
    %3193 = vmatprep.subr.mxu0 0.0
    %3194 = vmatpush1.msra.mxu0 0.0
    %3195 = vmatprep.subr.mxu0 0.0
    %3196 = vmatpush1.msra.mxu0 0.0
    %3197 = vmatprep.subr.mxu0 0.0
    %3198 = vmatpush1.msra.mxu0 0.0
    %3199 = vmatprep.subr.mxu0 0.0
    %3200 = vmatpush1.msra.mxu0 0.0
    %3201 = vmatprep.subr.mxu0 0.0
    %3202 = vmatpush1.msra.mxu0 0.0
    %3203 = vmatprep.subr.mxu0 0.0
    %3204 = vmatpush1.msra.mxu0 0.0
    %3205 = vmatprep.subr.mxu0 0.0
    %3206 = vmatpush1.msra.mxu0 0.0
    %3207 = vmatprep.subr.mxu0 0.0
    %3208 = vmatpush1.msra.mxu0 0.0
    %3209 = vmatprep.subr.mxu0 0.0
    %3210 = vmatpush1.msra.mxu0 0.0
    %3211 = vmatprep.subr.mxu0 0.0
    %3212 = vmatpush1.msra.mxu0 0.0
    %3213 = vmatprep.subr.mxu0 0.0
    %3214 = vmatpush1.msra.mxu0 0.0
    %3215 = vmatprep.subr.mxu0 0.0
    %3216 = vmatpush1.msra.mxu0 0.0
    %3217 = vmatprep.subr.mxu0 0.0
    %3218 = vmatpush1.msra.mxu0 0.0
    %3219 = vmatprep.subr.mxu0 0.0
    %3220 = vmatpush1.msra.mxu0 0.0
    %3221 = vmatprep.subr.mxu0 0.0
    %3222 = vmatpush1.msra.mxu0 0.0
    %3223 = vmatprep.mubr.f32.mxu0 0.0
    %3224 = vmatmul.mubr.f32.gmra.mrb[0].mxu0 %v3134
    %v3225 = vpop.f32.mrb[0].mxu0
    %v3226 = vadd.f32 0.0, %v3225
    %v3227 = vpop.f32.mrb[0].mxu0
    %3228 = vdwg.mxu0
    %vm3229 = vcmask 254976
    %v3230 = vsel %vm3229, %v3226, 0.0
    %v3231 = vrot.slane %v3230, 4
    %v3232 = vadd.f32 %v3230, %v3231
    %v3233 = vrot.slane %v3232, 2
    %v3234 = vadd.f32 %v3232, %v3233
    %v3235 = vrot.slane %v3234, 1
    %v3236 = vadd.f32 %v3234, %v3235
    %v3237 = vrcp.pop 8.0
    %v3238 = vmul.f32 %v3236, %v3237
    %vm3239 = vcmask 261120
    %v3241 = vsel %vm3239, %v3238, 0
    %3243 = vmatprep.subr.mxu0 0.0
    %3244 = vmatpush1.msra.mxu0 %v3155
    %3245 = vmatprep.subr.mxu0 0.0
    %3246 = vmatpush1.msra.mxu0 %v3156
    %3247 = vmatprep.subr.mxu0 0.0
    %3248 = vmatpush1.msra.mxu0 %v3157
    %3249 = vmatprep.subr.mxu0 0.0
    %3250 = vmatpush1.msra.mxu0 %v3158
    %3251 = vmatprep.subr.mxu0 0.0
    %3252 = vmatpush1.msra.mxu0 0.0
    %3253 = vmatprep.subr.mxu0 0.0
    %3254 = vmatpush1.msra.mxu0 0.0
    %3255 = vmatprep.subr.mxu0 0.0
    %3256 = vmatpush1.msra.mxu0 0.0
    %3257 = vmatprep.subr.mxu0 0.0
    %3258 = vmatpush1.msra.mxu0 0.0
    %3259 = vmatprep.subr.mxu0 0.0
    %3260 = vmatpush1.msra.mxu0 0.0
    %3261 = vmatprep.subr.mxu0 0.0
    %3262 = vmatpush1.msra.mxu0 0.0
    %3263 = vmatprep.subr.mxu0 0.0
    %3264 = vmatpush1.msra.mxu0 0.0
    %3265 = vmatprep.subr.mxu0 0.0
    %3266 = vmatpush1.msra.mxu0 0.0
    %3267 = vmatprep.subr.mxu0 0.0
    %3268 = vmatpush1.msra.mxu0 0.0
    %3269 = vmatprep.subr.mxu0 0.0
    %3270 = vmatpush1.msra.mxu0 0.0
    %3271 = vmatprep.subr.mxu0 0.0
    %3272 = vmatpush1.msra.mxu0 0.0
    %3273 = vmatprep.subr.mxu0 0.0
    %3274 = vmatpush1.msra.mxu0 0.0
    %3275 = vmatprep.subr.mxu0 0.0
    %3276 = vmatpush1.msra.mxu0 0.0
    %3277 = vmatprep.subr.mxu0 0.0
    %3278 = vmatpush1.msra.mxu0 0.0
    %3279 = vmatprep.subr.mxu0 0.0
    %3280 = vmatpush1.msra.mxu0 0.0
    %3281 = vmatprep.subr.mxu0 0.0
    %3282 = vmatpush1.msra.mxu0 0.0
    %3283 = vmatprep.subr.mxu0 0.0
    %3284 = vmatpush1.msra.mxu0 0.0
    %3285 = vmatprep.subr.mxu0 0.0
    %3286 = vmatpush1.msra.mxu0 0.0
    %3287 = vmatprep.subr.mxu0 0.0
    %3288 = vmatpush1.msra.mxu0 0.0
    %3289 = vmatprep.subr.mxu0 0.0
    %3290 = vmatpush1.msra.mxu0 0.0
    %3291 = vmatprep.subr.mxu0 0.0
    %3292 = vmatpush1.msra.mxu0 0.0
    %3293 = vmatprep.subr.mxu0 0.0
    %3294 = vmatpush1.msra.mxu0 0.0
    %3295 = vmatprep.subr.mxu0 0.0
    %3296 = vmatpush1.msra.mxu0 0.0
    %3297 = vmatprep.subr.mxu0 0.0
    %3298 = vmatpush1.msra.mxu0 0.0
    %3299 = vmatprep.subr.mxu0 0.0
    %3300 = vmatpush1.msra.mxu0 0.0
    %3301 = vmatprep.subr.mxu0 0.0
    %3302 = vmatpush1.msra.mxu0 0.0
    %3303 = vmatprep.subr.mxu0 0.0
    %3304 = vmatpush1.msra.mxu0 0.0
    %3305 = vmatprep.subr.mxu0 0.0
    %3306 = vmatpush1.msra.mxu0 0.0
    %3307 = vmatprep.mubr.f32.mxu0 0.0
    %3308 = vmatmul.mubr.f32.gmra.mrb[0].mxu0 %v3241
    %v3309 = vpop.f32.mrb[0].mxu0
    %v3310 = vadd.f32 0.0, %v3309
    %v3311 = vpop.f32.mrb[0].mxu0
    %3312 = vdwg.mxu0
    %v3313 = vlaneseq
    %v3314 = vshrl.u32 %v3313, 7
    %v3315 = vsub.s32 0, %v3314
    %v3316 = vrot.slane %v3310, %v3315
    %v3317 = vsub.f32 %v3134, %v3316
    %v3318 = vmul.f32 %v3317, %v3317
    %3319 = vmatprep.subr.mxu0 0.0
    %3320 = vmatpush1.msra.mxu0 %v3139
    %3321 = vmatprep.subr.mxu0 0.0
    %3322 = vmatpush1.msra.mxu0 %v3140
    %3323 = vmatprep.subr.mxu0 0.0
    %3324 = vmatpush1.msra.mxu0 %v3141
    %3325 = vmatprep.subr.mxu0 0.0
    %3326 = vmatpush1.msra.mxu0 %v3142
    %3327 = vmatprep.subr.mxu0 0.0
    %3328 = vmatpush1.msra.mxu0 %v3143
    %3329 = vmatprep.subr.mxu0 0.0
    %3330 = vmatpush1.msra.mxu0 %v3144
    %3331 = vmatprep.subr.mxu0 0.0
    %3332 = vmatpush1.msra.mxu0 %v3145
    %3333 = vmatprep.subr.mxu0 0.0
    %3334 = vmatpush1.msra.mxu0 %v3146
    %3335 = vmatprep.subr.mxu0 0.0
    %3336 = vmatpush1.msra.mxu0 %v3147
    %3337 = vmatprep.subr.mxu0 0.0
    %3338 = vmatpush1.msra.mxu0 %v3148
    %3339 = vmatprep.subr.mxu0 0.0
    %3340 = vmatpush1.msra.mxu0 %v3149
    %3341 = vmatprep.subr.mxu0 0.0
    %3342 = vmatpush1.msra.mxu0 %v3150
    %3343 = vmatprep.subr.mxu0 0.0
    %3344 = vmatpush1.msra.mxu0 %v3151
    %3345 = vmatprep.subr.mxu0 0.0
    %3346 = vmatpush1.msra.mxu0 %v3152
    %3347 = vmatprep.subr.mxu0 0.0
    %3348 = vmatpush1.msra.mxu0 %v3153
    %3349 = vmatprep.subr.mxu0 0.0
    %3350 = vmatpush1.msra.mxu0 %v3154
    %3351 = vmatprep.subr.mxu0 0.0
    %3352 = vmatpush1.msra.mxu0 0.0
    %3353 = vmatprep.subr.mxu0 0.0
    %3354 = vmatpush1.msra.mxu0 0.0
    %3355 = vmatprep.subr.mxu0 0.0
    %3356 = vmatpush1.msra.mxu0 0.0
    %3357 = vmatprep.subr.mxu0 0.0
    %3358 = vmatpush1.msra.mxu0 0.0
    %3359 = vmatprep.subr.mxu0 0.0
    %3360 = vmatpush1.msra.mxu0 0.0
    %3361 = vmatprep.subr.mxu0 0.0
    %3362 = vmatpush1.msra.mxu0 0.0
    %3363 = vmatprep.subr.mxu0 0.0
    %3364 = vmatpush1.msra.mxu0 0.0
    %3365 = vmatprep.subr.mxu0 0.0
    %3366 = vmatpush1.msra.mxu0 0.0
    %3367 = vmatprep.subr.mxu0 0.0
    %3368 = vmatpush1.msra.mxu0 0.0
    %3369 = vmatprep.subr.mxu0 0.0
    %3370 = vmatpush1.msra.mxu0 0.0
    %3371 = vmatprep.subr.mxu0 0.0
    %3372 = vmatpush1.msra.mxu0 0.0
    %3373 = vmatprep.subr.mxu0 0.0
    %3374 = vmatpush1.msra.mxu0 0.0
    %3375 = vmatprep.subr.mxu0 0.0
    %3376 = vmatpush1.msra.mxu0 0.0
    %3377 = vmatprep.subr.mxu0 0.0
    %3378 = vmatpush1.msra.mxu0 0.0
    %3379 = vmatprep.subr.mxu0 0.0
    %3380 = vmatpush1.msra.mxu0 0.0
    %3381 = vmatprep.subr.mxu0 0.0
    %3382 = vmatpush1.msra.mxu0 0.0
    %3383 = vmatprep.mubr.f32.mxu0 0.0
    %3384 = vmatmul.mubr.f32.gmra.mrb[0].mxu0 %v3318
    %v3385 = vpop.f32.mrb[0].mxu0
    %v3386 = vadd.f32 0.0, %v3385
    %v3387 = vpop.f32.mrb[0].mxu0
    %3388 = vdwg.mxu0
    %v3389 = vsel %vm3229, %v3386, 0.0
    %v3390 = vrot.slane %v3389, 4
    %v3391 = vadd.f32 %v3389, %v3390
    %v3392 = vrot.slane %v3391, 2
    %v3393 = vadd.f32 %v3391, %v3392
    %v3394 = vrot.slane %v3393, 1
    %v3395 = vadd.f32 %v3393, %v3394
    %v3396 = vmul.f32 %v3395, %v3237
    %v3397 = vld [vmem:[%s9] sm:$0x1]
    %v3398 = vadd.f32 %v3396, 1e-05
    %v3399 = vrsqrt.pop %v3398
    %v3400 = vmul.f32 %v3397, %v3399
    %v3402 = vsel %vm3239, %v3400, 0
    %3404 = vmatprep.subr.mxu0 0.0
    %3405 = vmatpush1.msra.mxu0 %v3155
    %3406 = vmatprep.subr.mxu0 0.0
    %3407 = vmatpush1.msra.mxu0 %v3156
    %3408 = vmatprep.subr.mxu0 0.0
    %3409 = vmatpush1.msra.mxu0 %v3157
    %3410 = vmatprep.subr.mxu0 0.0
    %3411 = vmatpush1.msra.mxu0 %v3158
    %3412 = vmatprep.subr.mxu0 0.0
    %3413 = vmatpush1.msra.mxu0 0.0
    %3414 = vmatprep.subr.mxu0 0.0
    %3415 = vmatpush1.msra.mxu0 0.0
    %3416 = vmatprep.subr.mxu0 0.0
    %3417 = vmatpush1.msra.mxu0 0.0
    %3418 = vmatprep.subr.mxu0 0.0
    %3419 = vmatpush1.msra.mxu0 0.0
    %3420 = vmatprep.subr.mxu0 0.0
    %3421 = vmatpush1.msra.mxu0 0.0
    %3422 = vmatprep.subr.mxu0 0.0
    %3423 = vmatpush1.msra.mxu0 0.0
    %3424 = vmatprep.subr.mxu0 0.0
    %3425 = vmatpush1.msra.mxu0 0.0
    %3426 = vmatprep.subr.mxu0 0.0
    %3427 = vmatpush1.msra.mxu0 0.0
    %3428 = vmatprep.subr.mxu0 0.0
    %3429 = vmatpush1.msra.mxu0 0.0
    %3430 = vmatprep.subr.mxu0 0.0
    %3431 = vmatpush1.msra.mxu0 0.0
    %3432 = vmatprep.subr.mxu0 0.0
    %3433 = vmatpush1.msra.mxu0 0.0
    %3434 = vmatprep.subr.mxu0 0.0
    %3435 = vmatpush1.msra.mxu0 0.0
    %3436 = vmatprep.subr.mxu0 0.0
    %3437 = vmatpush1.msra.mxu0 0.0
    %3438 = vmatprep.subr.mxu0 0.0
    %3439 = vmatpush1.msra.mxu0 0.0
    %3440 = vmatprep.subr.mxu0 0.0
    %3441 = vmatpush1.msra.mxu0 0.0
    %3442 = vmatprep.subr.mxu0 0.0
    %3443 = vmatpush1.msra.mxu0 0.0
    %3444 = vmatprep.subr.mxu0 0.0
    %3445 = vmatpush1.msra.mxu0 0.0
    %3446 = vmatprep.subr.mxu0 0.0
    %3447 = vmatpush1.msra.mxu0 0.0
    %3448 = vmatprep.subr.mxu0 0.0
    %3449 = vmatpush1.msra.mxu0 0.0
    %3450 = vmatprep.subr.mxu0 0.0
    %3451 = vmatpush1.msra.mxu0 0.0
    %3452 = vmatprep.subr.mxu0 0.0
    %3453 = vmatpush1.msra.mxu0 0.0
    %3454 = vmatprep.subr.mxu0 0.0
    %3455 = vmatpush1.msra.mxu0 0.0
    %3456 = vmatprep.subr.mxu0 0.0
    %3457 = vmatpush1.msra.mxu0 0.0
    %3458 = vmatprep.subr.mxu0 0.0
    %3459 = vmatpush1.msra.mxu0 0.0
    %3460 = vmatprep.subr.mxu0 0.0
    %3461 = vmatpush1.msra.mxu0 0.0
    %3462 = vmatprep.subr.mxu0 0.0
    %3463 = vmatpush1.msra.mxu0 0.0
    %3464 = vmatprep.subr.mxu0 0.0
    %3465 = vmatpush1.msra.mxu0 0.0
    %3466 = vmatprep.subr.mxu0 0.0
    %3467 = vmatpush1.msra.mxu0 0.0
    %3468 = vmatprep.mubr.f32.mxu0 0.0
    %3469 = vmatmul.mubr.f32.gmra.mrb[0].mxu0 %v3402
    %v3470 = vpop.f32.mrb[0].mxu0
    %v3471 = vadd.f32 0.0, %v3470
    %v3472 = vpop.f32.mrb[0].mxu0
    %3473 = vdwg.mxu0
    %v3474 = vlaneseq
    %v3475 = vshrl.u32 %v3474, 7
    %v3476 = vsub.s32 0, %v3475
    %v3477 = vrot.slane %v3471, %v3476
    %v3478 = vmul.f32 %v3317, %v3477
    %v3479 = vld [vmem:[%s10] sm:$0x1]
    %v3481 = vsel %vm3239, %v3479, 0
    %3483 = vmatprep.subr.mxu0 0.0
    %3484 = vmatpush1.msra.mxu0 %v3155
    %3485 = vmatprep.subr.mxu0 0.0
    %3486 = vmatpush1.msra.mxu0 %v3156
    %3487 = vmatprep.subr.mxu0 0.0
    %3488 = vmatpush1.msra.mxu0 %v3157
    %3489 = vmatprep.subr.mxu0 0.0
    %3490 = vmatpush1.msra.mxu0 %v3158
    %3491 = vmatprep.subr.mxu0 0.0
    %3492 = vmatpush1.msra.mxu0 0.0
    %3493 = vmatprep.subr.mxu0 0.0
    %3494 = vmatpush1.msra.mxu0 0.0
    %3495 = vmatprep.subr.mxu0 0.0
    %3496 = vmatpush1.msra.mxu0 0.0
    %3497 = vmatprep.subr.mxu0 0.0
    %3498 = vmatpush1.msra.mxu0 0.0
    %3499 = vmatprep.subr.mxu0 0.0
    %3500 = vmatpush1.msra.mxu0 0.0
    %3501 = vmatprep.subr.mxu0 0.0
    %3502 = vmatpush1.msra.mxu0 0.0
    %3503 = vmatprep.subr.mxu0 0.0
    %3504 = vmatpush1.msra.mxu0 0.0
    %3505 = vmatprep.subr.mxu0 0.0
    %3506 = vmatpush1.msra.mxu0 0.0
    %3507 = vmatprep.subr.mxu0 0.0
    %3508 = vmatpush1.msra.mxu0 0.0
    %3509 = vmatprep.subr.mxu0 0.0
    %3510 = vmatpush1.msra.mxu0 0.0
    %3511 = vmatprep.subr.mxu0 0.0
    %3512 = vmatpush1.msra.mxu0 0.0
    %3513 = vmatprep.subr.mxu0 0.0
    %3514 = vmatpush1.msra.mxu0 0.0
    %3515 = vmatprep.subr.mxu0 0.0
    %3516 = vmatpush1.msra.mxu0 0.0
    %3517 = vmatprep.subr.mxu0 0.0
    %3518 = vmatpush1.msra.mxu0 0.0
    %3519 = vmatprep.subr.mxu0 0.0
    %3520 = vmatpush1.msra.mxu0 0.0
    %3521 = vmatprep.subr.mxu0 0.0
    %3522 = vmatpush1.msra.mxu0 0.0
    %3523 = vmatprep.subr.mxu0 0.0
    %3524 = vmatpush1.msra.mxu0 0.0
    %3525 = vmatprep.subr.mxu0 0.0
    %3526 = vmatpush1.msra.mxu0 0.0
    %3527 = vmatprep.subr.mxu0 0.0
    %3528 = vmatpush1.msra.mxu0 0.0
    %3529 = vmatprep.subr.mxu0 0.0
    %3530 = vmatpush1.msra.mxu0 0.0
    %3531 = vmatprep.subr.mxu0 0.0
    %3532 = vmatpush1.msra.mxu0 0.0
    %3533 = vmatprep.subr.mxu0 0.0
    %3534 = vmatpush1.msra.mxu0 0.0
    %3535 = vmatprep.subr.mxu0 0.0
    %3536 = vmatpush1.msra.mxu0 0.0
    %3537 = vmatprep.subr.mxu0 0.0
    %3538 = vmatpush1.msra.mxu0 0.0
    %3539 = vmatprep.subr.mxu0 0.0
    %3540 = vmatpush1.msra.mxu0 0.0
    %3541 = vmatprep.subr.mxu0 0.0
    %3542 = vmatpush1.msra.mxu0 0.0
    %3543 = vmatprep.subr.mxu0 0.0
    %3544 = vmatpush1.msra.mxu0 0.0
    %3545 = vmatprep.subr.mxu0 0.0
    %3546 = vmatpush1.msra.mxu0 0.0
    %3547 = vmatprep.mubr.f32.mxu0 0.0
    %3548 = vmatmul.mubr.f32.gmra.mrb[0].mxu0 %v3481
    %v3549 = vpop.f32.mrb[0].mxu0
    %v3550 = vadd.f32 0.0, %v3549
    %v3551 = vpop.f32.mrb[0].mxu0
    %3552 = vdwg.mxu0
    %v3553 = vlaneseq
    %v3554 = vshrl.u32 %v3553, 7
    %v3555 = vsub.s32 0, %v3554
    %v3556 = vrot.slane %v3550, %v3555
    %v3557 = vadd.f32 %v3478, %v3556
    %vm3558 = vcmp.gt.f32.partialorder %v3557, 0.0
    %v3559 = vmul.f32 %v3557, 0.2
    %v3560 = vsel %vm3558, %v3557, %v3559
    %v3561 = vpack.c.bf16 %v3560, %v3560
    %v3562 = vld [vmem:[%s13] sm:$0xf]
    %v3563 = vld [vmem:[%s13 + $0x4] sm:$0xf]
    %v3564 = vld [vmem:[%s13 + $0x8] sm:$0xf]
    %v3565 = vld [vmem:[%s13 + $0xc] sm:$0xf]
    %v3566 = vld [vmem:[%s13 + $0x10] sm:$0xf]
    %v3567 = vld [vmem:[%s13 + $0x14] sm:$0xf]
    %v3568 = vld [vmem:[%s13 + $0x18] sm:$0xf]
    %v3569 = vld [vmem:[%s13 + $0x1c] sm:$0xf]
    %v3570 = vld [vmem:[%s13 + $0x20] sm:$0xf]
    %v3571 = vld [vmem:[%s13 + $0x24] sm:$0xf]
    %v3572 = vld [vmem:[%s13 + $0x28] sm:$0xf]
    %v3573 = vld [vmem:[%s13 + $0x2c] sm:$0xf]
    %v3574 = vld [vmem:[%s13 + $0x30] sm:$0xf]
    %v3575 = vld [vmem:[%s13 + $0x34] sm:$0xf]
    %v3576 = vld [vmem:[%s13 + $0x38] sm:$0xf]
    %v3577 = vld [vmem:[%s13 + $0x3c] sm:$0xf]
    %v3594 = vunpack.c.l.b16 %v3562
    %v3595 = vunpack.c.l.b16 %v3563
    %v3596 = vunpack.c.l.b16 %v3564
    %v3597 = vunpack.c.l.b16 %v3565
    %v3598 = vunpack.c.l.b16 %v3566
    %v3599 = vunpack.c.l.b16 %v3567
    %v3600 = vunpack.c.l.b16 %v3568
    %v3601 = vunpack.c.l.b16 %v3569
    %v3602 = vunpack.c.l.b16 %v3570
    %v3603 = vunpack.c.l.b16 %v3571
    %v3604 = vunpack.c.l.b16 %v3572
    %v3605 = vunpack.c.l.b16 %v3573
    %v3606 = vunpack.c.l.b16 %v3574
    %v3607 = vunpack.c.l.b16 %v3575
    %v3608 = vunpack.c.l.b16 %v3576
    %v3609 = vunpack.c.l.b16 %v3577
    %v3610 = vpack.c.b16 %v3595, %v3594
    %v3611 = vpack.c.b16 %v3597, %v3596
    %v3612 = vpack.c.b16 %v3599, %v3598
    %v3613 = vpack.c.b16 %v3601, %v3600
    %v3614 = vpack.c.b16 %v3603, %v3602
    %v3615 = vpack.c.b16 %v3605, %v3604
    %v3616 = vpack.c.b16 %v3607, %v3606
    %v3617 = vpack.c.b16 %v3609, %v3608
    %3626 = vmatprep.subr.bf16.mxu0 0
    %3627 = vmatpush1.bf16.msra.mxu0 %v3610
    %3628 = vmatprep.subr.bf16.mxu0 0
    %3629 = vmatpush1.bf16.msra.mxu0 %v3611
    %3630 = vmatprep.subr.bf16.mxu0 0
    %3631 = vmatpush1.bf16.msra.mxu0 %v3612
    %3632 = vmatprep.subr.bf16.mxu0 0
    %3633 = vmatpush1.bf16.msra.mxu0 %v3613
    %3634 = vmatprep.subr.bf16.mxu0 0
    %3635 = vmatpush1.bf16.msra.mxu0 %v3614
    %3636 = vmatprep.subr.bf16.mxu0 0
    %3637 = vmatpush1.bf16.msra.mxu0 %v3615
    %3638 = vmatprep.subr.bf16.mxu0 0
    %3639 = vmatpush1.bf16.msra.mxu0 %v3616
    %3640 = vmatprep.subr.bf16.mxu0 0
    %3641 = vmatpush1.bf16.msra.mxu0 %v3617
    %3642 = vmatprep.subr.bf16.mxu0 0
    %3643 = vmatpush1.bf16.msra.mxu0 0
    %3644 = vmatprep.subr.bf16.mxu0 0
    %3645 = vmatpush1.bf16.msra.mxu0 0
    %3646 = vmatprep.subr.bf16.mxu0 0
    %3647 = vmatpush1.bf16.msra.mxu0 0
    %3648 = vmatprep.subr.bf16.mxu0 0
    %3649 = vmatpush1.bf16.msra.mxu0 0
    %3650 = vmatprep.subr.bf16.mxu0 0
    %3651 = vmatpush1.bf16.msra.mxu0 0
    %3652 = vmatprep.subr.bf16.mxu0 0
    %3653 = vmatpush1.bf16.msra.mxu0 0
    %3654 = vmatprep.subr.bf16.mxu0 0
    %3655 = vmatpush1.bf16.msra.mxu0 0
    %3656 = vmatprep.subr.bf16.mxu0 0
    %3657 = vmatpush1.bf16.msra.mxu0 0
    %3658 = vmatprep.mubr.bf16.mxu0 0
    %3659 = vmatmul.mubr.bf16.gmra.mrb[0].mxu0 %v3561
    %v3660 = vpop.f32.mrb[0].mxu0
    %v3661 = vadd.f32 0.0, %v3660
    %v3662 = vpop.f32.mrb[0].mxu0
    %v3663 = vpop.f32.mrb[0].mxu0
    %v3664 = vpop.f32.mrb[0].mxu0
    %3665 = vdwg.mxu0
    %v3666 = vld [vmem:[%s16] sm:$0xff]
    %v3667 = vld [vmem:[%s16 + $0x8] sm:$0xff]
    %v3668 = vld [vmem:[%s16 + $0x10] sm:$0xff]
    %v3669 = vld [vmem:[%s16 + $0x18] sm:$0xff]
    %v3670 = vld [vmem:[%s16 + $0x20] sm:$0xff]
    %v3671 = vld [vmem:[%s16 + $0x28] sm:$0xff]
    %v3672 = vld [vmem:[%s16 + $0x30] sm:$0xff]
    %v3673 = vld [vmem:[%s16 + $0x38] sm:$0xff]
    %v3674 = vld [vmem:[%s17] sm:$0xff]
    %v3675 = vld [vmem:[%s17 + $0x8] sm:$0xff]
    %v3676 = vld [vmem:[%s17 + $0x10] sm:$0xff]
    %v3677 = vld [vmem:[%s17 + $0x18] sm:$0xff]
    %v3678 = vld [vmem:[%s17 + $0x20] sm:$0xff]
    %v3679 = vld [vmem:[%s17 + $0x28] sm:$0xff]
    %v3680 = vld [vmem:[%s17 + $0x30] sm:$0xff]
    %v3681 = vld [vmem:[%s17 + $0x38] sm:$0xff]
    %vm3682 = vcmask 523264
    %v3684 = vsel %vm3682, %v3661, 0
    %3686 = vmatprep.subr.mxu0 0.0
    %3687 = vmatpush1.msra.mxu0 %v3666
    %3688 = vmatprep.subr.mxu0 0.0
    %3689 = vmatpush1.msra.mxu0 %v3667
    %3690 = vmatprep.subr.mxu0 0.0
    %3691 = vmatpush1.msra.mxu0 %v3668
    %3692 = vmatprep.subr.mxu0 0.0
    %3693 = vmatpush1.msra.mxu0 %v3669
    %3694 = vmatprep.subr.mxu0 0.0
    %3695 = vmatpush1.msra.mxu0 %v3670
    %3696 = vmatprep.subr.mxu0 0.0
    %3697 = vmatpush1.msra.mxu0 %v3671
    %3698 = vmatprep.subr.mxu0 0.0
    %3699 = vmatpush1.msra.mxu0 %v3672
    %3700 = vmatprep.subr.mxu0 0.0
    %3701 = vmatpush1.msra.mxu0 %v3673
    %3702 = vmatprep.subr.mxu0 0.0
    %3703 = vmatpush1.msra.mxu0 0.0
    %3704 = vmatprep.subr.mxu0 0.0
    %3705 = vmatpush1.msra.mxu0 0.0
    %3706 = vmatprep.subr.mxu0 0.0
    %3707 = vmatpush1.msra.mxu0 0.0
    %3708 = vmatprep.subr.mxu0 0.0
    %3709 = vmatpush1.msra.mxu0 0.0
    %3710 = vmatprep.subr.mxu0 0.0
    %3711 = vmatpush1.msra.mxu0 0.0
    %3712 = vmatprep.subr.mxu0 0.0
    %3713 = vmatpush1.msra.mxu0 0.0
    %3714 = vmatprep.subr.mxu0 0.0
    %3715 = vmatpush1.msra.mxu0 0.0
    %3716 = vmatprep.subr.mxu0 0.0
    %3717 = vmatpush1.msra.mxu0 0.0
    %3718 = vmatprep.subr.mxu0 0.0
    %3719 = vmatpush1.msra.mxu0 0.0
    %3720 = vmatprep.subr.mxu0 0.0
    %3721 = vmatpush1.msra.mxu0 0.0
    %3722 = vmatprep.subr.mxu0 0.0
    %3723 = vmatpush1.msra.mxu0 0.0
    %3724 = vmatprep.subr.mxu0 0.0
    %3725 = vmatpush1.msra.mxu0 0.0
    %3726 = vmatprep.subr.mxu0 0.0
    %3727 = vmatpush1.msra.mxu0 0.0
    %3728 = vmatprep.subr.mxu0 0.0
    %3729 = vmatpush1.msra.mxu0 0.0
    %3730 = vmatprep.subr.mxu0 0.0
    %3731 = vmatpush1.msra.mxu0 0.0
    %3732 = vmatprep.subr.mxu0 0.0
    %3733 = vmatpush1.msra.mxu0 0.0
    %3734 = vmatprep.subr.mxu0 0.0
    %3735 = vmatpush1.msra.mxu0 0.0
    %3736 = vmatprep.subr.mxu0 0.0
    %3737 = vmatpush1.msra.mxu0 0.0
    %3738 = vmatprep.subr.mxu0 0.0
    %3739 = vmatpush1.msra.mxu0 0.0
    %3740 = vmatprep.subr.mxu0 0.0
    %3741 = vmatpush1.msra.mxu0 0.0
    %3742 = vmatprep.subr.mxu0 0.0
    %3743 = vmatpush1.msra.mxu0 0.0
    %3744 = vmatprep.subr.mxu0 0.0
    %3745 = vmatpush1.msra.mxu0 0.0
    %3746 = vmatprep.subr.mxu0 0.0
    %3747 = vmatpush1.msra.mxu0 0.0
    %3748 = vmatprep.subr.mxu0 0.0
    %3749 = vmatpush1.msra.mxu0 0.0
    %3750 = vmatprep.mubr.f32.mxu0 0.0
    %3751 = vmatmul.mubr.f32.gmra.mrb[0].mxu0 %v3684
    %v3752 = vpop.f32.mrb[0].mxu0
    %v3753 = vadd.f32 0.0, %v3752
    %v3754 = vpop.f32.mrb[0].mxu0
    %3755 = vdwg.mxu0
    %vm3756 = vcmask 517120
    %v3757 = vsel %vm3756, %v3753, 0.0
    %v3758 = vrot.slane %v3757, 4
    %v3759 = vadd.f32 %v3757, %v3758
    %v3760 = vrot.slane %v3759, 2
    %v3761 = vadd.f32 %v3759, %v3760
    %v3762 = vrot.slane %v3761, 1
    %v3763 = vadd.f32 %v3761, %v3762
    %v3764 = vrcp.pop 2.0
    %v3765 = vmul.f32 %v3763, %v3764
    %v3767 = vsel %vm3682, %v3765, 0
    %3769 = vmatprep.subr.mxu0 0.0
    %3770 = vmatpush1.msra.mxu0 %v3674
    %3771 = vmatprep.subr.mxu0 0.0
    %3772 = vmatpush1.msra.mxu0 %v3675
    %3773 = vmatprep.subr.mxu0 0.0
    %3774 = vmatpush1.msra.mxu0 %v3676
    %3775 = vmatprep.subr.mxu0 0.0
    %3776 = vmatpush1.msra.mxu0 %v3677
    %3777 = vmatprep.subr.mxu0 0.0
    %3778 = vmatpush1.msra.mxu0 %v3678
    %3779 = vmatprep.subr.mxu0 0.0
    %3780 = vmatpush1.msra.mxu0 %v3679
    %3781 = vmatprep.subr.mxu0 0.0
    %3782 = vmatpush1.msra.mxu0 %v3680
    %3783 = vmatprep.subr.mxu0 0.0
    %3784 = vmatpush1.msra.mxu0 %v3681
    %3785 = vmatprep.subr.mxu0 0.0
    %3786 = vmatpush1.msra.mxu0 0.0
    %3787 = vmatprep.subr.mxu0 0.0
    %3788 = vmatpush1.msra.mxu0 0.0
    %3789 = vmatprep.subr.mxu0 0.0
    %3790 = vmatpush1.msra.mxu0 0.0
    %3791 = vmatprep.subr.mxu0 0.0
    %3792 = vmatpush1.msra.mxu0 0.0
    %3793 = vmatprep.subr.mxu0 0.0
    %3794 = vmatpush1.msra.mxu0 0.0
    %3795 = vmatprep.subr.mxu0 0.0
    %3796 = vmatpush1.msra.mxu0 0.0
    %3797 = vmatprep.subr.mxu0 0.0
    %3798 = vmatpush1.msra.mxu0 0.0
    %3799 = vmatprep.subr.mxu0 0.0
    %3800 = vmatpush1.msra.mxu0 0.0
    %3801 = vmatprep.subr.mxu0 0.0
    %3802 = vmatpush1.msra.mxu0 0.0
    %3803 = vmatprep.subr.mxu0 0.0
    %3804 = vmatpush1.msra.mxu0 0.0
    %3805 = vmatprep.subr.mxu0 0.0
    %3806 = vmatpush1.msra.mxu0 0.0
    %3807 = vmatprep.subr.mxu0 0.0
    %3808 = vmatpush1.msra.mxu0 0.0
    %3809 = vmatprep.subr.mxu0 0.0
    %3810 = vmatpush1.msra.mxu0 0.0
    %3811 = vmatprep.subr.mxu0 0.0
    %3812 = vmatpush1.msra.mxu0 0.0
    %3813 = vmatprep.subr.mxu0 0.0
    %3814 = vmatpush1.msra.mxu0 0.0
    %3815 = vmatprep.subr.mxu0 0.0
    %3816 = vmatpush1.msra.mxu0 0.0
    %3817 = vmatprep.subr.mxu0 0.0
    %3818 = vmatpush1.msra.mxu0 0.0
    %3819 = vmatprep.subr.mxu0 0.0
    %3820 = vmatpush1.msra.mxu0 0.0
    %3821 = vmatprep.subr.mxu0 0.0
    %3822 = vmatpush1.msra.mxu0 0.0
    %3823 = vmatprep.subr.mxu0 0.0
    %3824 = vmatpush1.msra.mxu0 0.0
    %3825 = vmatprep.subr.mxu0 0.0
    %3826 = vmatpush1.msra.mxu0 0.0
    %3827 = vmatprep.subr.mxu0 0.0
    %3828 = vmatpush1.msra.mxu0 0.0
    %3829 = vmatprep.subr.mxu0 0.0
    %3830 = vmatpush1.msra.mxu0 0.0
    %3831 = vmatprep.subr.mxu0 0.0
    %3832 = vmatpush1.msra.mxu0 0.0
    %3833 = vmatprep.mubr.f32.mxu0 0.0
    %3834 = vmatmul.mubr.f32.gmra.mrb[0].mxu0 %v3767
    %v3835 = vpop.f32.mrb[0].mxu0
    %v3836 = vadd.f32 0.0, %v3835
    %v3837 = vpop.f32.mrb[0].mxu0
    %3838 = vdwg.mxu0
    %v3839 = vlaneseq
    %v3840 = vshrl.u32 %v3839, 7
    %v3841 = vsub.s32 0, %v3840
    %v3842 = vrot.slane %v3836, %v3841
    %v3843 = vsub.f32 %v3661, %v3842
    %v3844 = vmul.f32 %v3843, %v3843
    %v3846 = vsel %vm3682, %v3844, 0
    %3848 = vmatprep.subr.mxu0 0.0
    %3849 = vmatpush1.msra.mxu0 %v3666
    %3850 = vmatprep.subr.mxu0 0.0
    %3851 = vmatpush1.msra.mxu0 %v3667
    %3852 = vmatprep.subr.mxu0 0.0
    %3853 = vmatpush1.msra.mxu0 %v3668
    %3854 = vmatprep.subr.mxu0 0.0
    %3855 = vmatpush1.msra.mxu0 %v3669
    %3856 = vmatprep.subr.mxu0 0.0
    %3857 = vmatpush1.msra.mxu0 %v3670
    %3858 = vmatprep.subr.mxu0 0.0
    %3859 = vmatpush1.msra.mxu0 %v3671
    %3860 = vmatprep.subr.mxu0 0.0
    %3861 = vmatpush1.msra.mxu0 %v3672
    %3862 = vmatprep.subr.mxu0 0.0
    %3863 = vmatpush1.msra.mxu0 %v3673
    %3864 = vmatprep.subr.mxu0 0.0
    %3865 = vmatpush1.msra.mxu0 0.0
    %3866 = vmatprep.subr.mxu0 0.0
    %3867 = vmatpush1.msra.mxu0 0.0
    %3868 = vmatprep.subr.mxu0 0.0
    %3869 = vmatpush1.msra.mxu0 0.0
    %3870 = vmatprep.subr.mxu0 0.0
    %3871 = vmatpush1.msra.mxu0 0.0
    %3872 = vmatprep.subr.mxu0 0.0
    %3873 = vmatpush1.msra.mxu0 0.0
    %3874 = vmatprep.subr.mxu0 0.0
    %3875 = vmatpush1.msra.mxu0 0.0
    %3876 = vmatprep.subr.mxu0 0.0
    %3877 = vmatpush1.msra.mxu0 0.0
    %3878 = vmatprep.subr.mxu0 0.0
    %3879 = vmatpush1.msra.mxu0 0.0
    %3880 = vmatprep.subr.mxu0 0.0
    %3881 = vmatpush1.msra.mxu0 0.0
    %3882 = vmatprep.subr.mxu0 0.0
    %3883 = vmatpush1.msra.mxu0 0.0
    %3884 = vmatprep.subr.mxu0 0.0
    %3885 = vmatpush1.msra.mxu0 0.0
    %3886 = vmatprep.subr.mxu0 0.0
    %3887 = vmatpush1.msra.mxu0 0.0
    %3888 = vmatprep.subr.mxu0 0.0
    %3889 = vmatpush1.msra.mxu0 0.0
    %3890 = vmatprep.subr.mxu0 0.0
    %3891 = vmatpush1.msra.mxu0 0.0
    %3892 = vmatprep.subr.mxu0 0.0
    %3893 = vmatpush1.msra.mxu0 0.0
    %3894 = vmatprep.subr.mxu0 0.0
    %3895 = vmatpush1.msra.mxu0 0.0
    %3896 = vmatprep.subr.mxu0 0.0
    %3897 = vmatpush1.msra.mxu0 0.0
    %3898 = vmatprep.subr.mxu0 0.0
    %3899 = vmatpush1.msra.mxu0 0.0
    %3900 = vmatprep.subr.mxu0 0.0
    %3901 = vmatpush1.msra.mxu0 0.0
    %3902 = vmatprep.subr.mxu0 0.0
    %3903 = vmatpush1.msra.mxu0 0.0
    %3904 = vmatprep.subr.mxu0 0.0
    %3905 = vmatpush1.msra.mxu0 0.0
    %3906 = vmatprep.subr.mxu0 0.0
    %3907 = vmatpush1.msra.mxu0 0.0
    %3908 = vmatprep.subr.mxu0 0.0
    %3909 = vmatpush1.msra.mxu0 0.0
    %3910 = vmatprep.subr.mxu0 0.0
    %3911 = vmatpush1.msra.mxu0 0.0
    %3912 = vmatprep.mubr.f32.mxu0 0.0
    %3913 = vmatmul.mubr.f32.gmra.mrb[0].mxu0 %v3846
    %v3914 = vpop.f32.mrb[0].mxu0
    %v3915 = vadd.f32 0.0, %v3914
    %v3916 = vpop.f32.mrb[0].mxu0
    %3917 = vdwg.mxu0
    %v3918 = vsel %vm3756, %v3915, 0.0
    %v3919 = vrot.slane %v3918, 4
    %v3920 = vadd.f32 %v3918, %v3919
    %v3921 = vrot.slane %v3920, 2
    %v3922 = vadd.f32 %v3920, %v3921
    %v3923 = vrot.slane %v3922, 1
    %v3924 = vadd.f32 %v3922, %v3923
    %v3925 = vmul.f32 %v3924, %v3764
    %v3926 = vld [vmem:[%s14] sm:$0x1]
    %v3927 = vadd.f32 %v3925, 1e-05
    %v3928 = vrsqrt.pop %v3927
    %v3929 = vmul.f32 %v3926, %v3928
    %v3931 = vsel %vm3682, %v3929, 0
    %3933 = vmatprep.subr.mxu0 0.0
    %3934 = vmatpush1.msra.mxu0 %v3674
    %3935 = vmatprep.subr.mxu0 0.0
    %3936 = vmatpush1.msra.mxu0 %v3675
    %3937 = vmatprep.subr.mxu0 0.0
    %3938 = vmatpush1.msra.mxu0 %v3676
    %3939 = vmatprep.subr.mxu0 0.0
    %3940 = vmatpush1.msra.mxu0 %v3677
    %3941 = vmatprep.subr.mxu0 0.0
    %3942 = vmatpush1.msra.mxu0 %v3678
    %3943 = vmatprep.subr.mxu0 0.0
    %3944 = vmatpush1.msra.mxu0 %v3679
    %3945 = vmatprep.subr.mxu0 0.0
    %3946 = vmatpush1.msra.mxu0 %v3680
    %3947 = vmatprep.subr.mxu0 0.0
    %3948 = vmatpush1.msra.mxu0 %v3681
    %3949 = vmatprep.subr.mxu0 0.0
    %3950 = vmatpush1.msra.mxu0 0.0
    %3951 = vmatprep.subr.mxu0 0.0
    %3952 = vmatpush1.msra.mxu0 0.0
    %3953 = vmatprep.subr.mxu0 0.0
    %3954 = vmatpush1.msra.mxu0 0.0
    %3955 = vmatprep.subr.mxu0 0.0
    %3956 = vmatpush1.msra.mxu0 0.0
    %3957 = vmatprep.subr.mxu0 0.0
    %3958 = vmatpush1.msra.mxu0 0.0
    %3959 = vmatprep.subr.mxu0 0.0
    %3960 = vmatpush1.msra.mxu0 0.0
    %3961 = vmatprep.subr.mxu0 0.0
    %3962 = vmatpush1.msra.mxu0 0.0
    %3963 = vmatprep.subr.mxu0 0.0
    %3964 = vmatpush1.msra.mxu0 0.0
    %3965 = vmatprep.subr.mxu0 0.0
    %3966 = vmatpush1.msra.mxu0 0.0
    %3967 = vmatprep.subr.mxu0 0.0
    %3968 = vmatpush1.msra.mxu0 0.0
    %3969 = vmatprep.subr.mxu0 0.0
    %3970 = vmatpush1.msra.mxu0 0.0
    %3971 = vmatprep.subr.mxu0 0.0
    %3972 = vmatpush1.msra.mxu0 0.0
    %3973 = vmatprep.subr.mxu0 0.0
    %3974 = vmatpush1.msra.mxu0 0.0
    %3975 = vmatprep.subr.mxu0 0.0
    %3976 = vmatpush1.msra.mxu0 0.0
    %3977 = vmatprep.subr.mxu0 0.0
    %3978 = vmatpush1.msra.mxu0 0.0
    %3979 = vmatprep.subr.mxu0 0.0
    %3980 = vmatpush1.msra.mxu0 0.0
    %3981 = vmatprep.subr.mxu0 0.0
    %3982 = vmatpush1.msra.mxu0 0.0
    %3983 = vmatprep.subr.mxu0 0.0
    %3984 = vmatpush1.msra.mxu0 0.0
    %3985 = vmatprep.subr.mxu0 0.0
    %3986 = vmatpush1.msra.mxu0 0.0
    %3987 = vmatprep.subr.mxu0 0.0
    %3988 = vmatpush1.msra.mxu0 0.0
    %3989 = vmatprep.subr.mxu0 0.0
    %3990 = vmatpush1.msra.mxu0 0.0
    %3991 = vmatprep.subr.mxu0 0.0
    %3992 = vmatpush1.msra.mxu0 0.0
    %3993 = vmatprep.subr.mxu0 0.0
    %3994 = vmatpush1.msra.mxu0 0.0
    %3995 = vmatprep.subr.mxu0 0.0
    %3996 = vmatpush1.msra.mxu0 0.0
    %3997 = vmatprep.mubr.f32.mxu0 0.0
    %3998 = vmatmul.mubr.f32.gmra.mrb[0].mxu0 %v3931
    %v3999 = vpop.f32.mrb[0].mxu0
    %v4000 = vadd.f32 0.0, %v3999
    %v4001 = vpop.f32.mrb[0].mxu0
    %4002 = vdwg.mxu0
    %v4003 = vlaneseq
    %v4004 = vshrl.u32 %v4003, 7
    %v4005 = vsub.s32 0, %v4004
    %v4006 = vrot.slane %v4000, %v4005
    %v4007 = vmul.f32 %v3843, %v4006
    %v4008 = vld [vmem:[%s15] sm:$0x1]
    %v4010 = vsel %vm3682, %v4008, 0
    %4012 = vmatprep.subr.mxu0 0.0
    %4013 = vmatpush1.msra.mxu0 %v3674
    %4014 = vmatprep.subr.mxu0 0.0
    %4015 = vmatpush1.msra.mxu0 %v3675
    %4016 = vmatprep.subr.mxu0 0.0
    %4017 = vmatpush1.msra.mxu0 %v3676
    %4018 = vmatprep.subr.mxu0 0.0
    %4019 = vmatpush1.msra.mxu0 %v3677
    %4020 = vmatprep.subr.mxu0 0.0
    %4021 = vmatpush1.msra.mxu0 %v3678
    %4022 = vmatprep.subr.mxu0 0.0
    %4023 = vmatpush1.msra.mxu0 %v3679
    %4024 = vmatprep.subr.mxu0 0.0
    %4025 = vmatpush1.msra.mxu0 %v3680
    %4026 = vmatprep.subr.mxu0 0.0
    %4027 = vmatpush1.msra.mxu0 %v3681
    %4028 = vmatprep.subr.mxu0 0.0
    %4029 = vmatpush1.msra.mxu0 0.0
    %4030 = vmatprep.subr.mxu0 0.0
    %4031 = vmatpush1.msra.mxu0 0.0
    %4032 = vmatprep.subr.mxu0 0.0
    %4033 = vmatpush1.msra.mxu0 0.0
    %4034 = vmatprep.subr.mxu0 0.0
    %4035 = vmatpush1.msra.mxu0 0.0
    %4036 = vmatprep.subr.mxu0 0.0
    %4037 = vmatpush1.msra.mxu0 0.0
    %4038 = vmatprep.subr.mxu0 0.0
    %4039 = vmatpush1.msra.mxu0 0.0
    %4040 = vmatprep.subr.mxu0 0.0
    %4041 = vmatpush1.msra.mxu0 0.0
    %4042 = vmatprep.subr.mxu0 0.0
    %4043 = vmatpush1.msra.mxu0 0.0
    %4044 = vmatprep.subr.mxu0 0.0
    %4045 = vmatpush1.msra.mxu0 0.0
    %4046 = vmatprep.subr.mxu0 0.0
    %4047 = vmatpush1.msra.mxu0 0.0
    %4048 = vmatprep.subr.mxu0 0.0
    %4049 = vmatpush1.msra.mxu0 0.0
    %4050 = vmatprep.subr.mxu0 0.0
    %4051 = vmatpush1.msra.mxu0 0.0
    %4052 = vmatprep.subr.mxu0 0.0
    %4053 = vmatpush1.msra.mxu0 0.0
    %4054 = vmatprep.subr.mxu0 0.0
    %4055 = vmatpush1.msra.mxu0 0.0
    %4056 = vmatprep.subr.mxu0 0.0
    %4057 = vmatpush1.msra.mxu0 0.0
    %4058 = vmatprep.subr.mxu0 0.0
    %4059 = vmatpush1.msra.mxu0 0.0
    %4060 = vmatprep.subr.mxu0 0.0
    %4061 = vmatpush1.msra.mxu0 0.0
    %4062 = vmatprep.subr.mxu0 0.0
    %4063 = vmatpush1.msra.mxu0 0.0
    %4064 = vmatprep.subr.mxu0 0.0
    %4065 = vmatpush1.msra.mxu0 0.0
    %4066 = vmatprep.subr.mxu0 0.0
    %4067 = vmatpush1.msra.mxu0 0.0
    %4068 = vmatprep.subr.mxu0 0.0
    %4069 = vmatpush1.msra.mxu0 0.0
    %4070 = vmatprep.subr.mxu0 0.0
    %4071 = vmatpush1.msra.mxu0 0.0
    %4072 = vmatprep.subr.mxu0 0.0
    %4073 = vmatpush1.msra.mxu0 0.0
    %4074 = vmatprep.subr.mxu0 0.0
    %4075 = vmatpush1.msra.mxu0 0.0
    %4076 = vmatprep.mubr.f32.mxu0 0.0
    %4077 = vmatmul.mubr.f32.gmra.mrb[0].mxu0 %v4010
    %v4078 = vpop.f32.mrb[0].mxu0
    %v4079 = vadd.f32 0.0, %v4078
    %v4080 = vpop.f32.mrb[0].mxu0
    %4081 = vdwg.mxu0
    %v4082 = vlaneseq
    %v4083 = vshrl.u32 %v4082, 7
    %v4084 = vsub.s32 0, %v4083
    %v4085 = vrot.slane %v4079, %v4084
    %v4086 = vadd.f32 %v4007, %v4085
    %vm4087 = vcmp.gt.f32.partialorder %v4086, 0.0
    %v4088 = vmul.f32 %v4086, 0.2
    %v4089 = vsel %vm4087, %v4086, %v4088
    %v4090 = vpack.c.bf16 %v4089, %v4089
    %v4091 = vld [vmem:[%s18] sm:$0xf]
    %v4092 = vld [vmem:[%s18 + $0x4] sm:$0xf]
    %v4093 = vld [vmem:[%s18 + $0x8] sm:$0xf]
    %v4094 = vld [vmem:[%s18 + $0xc] sm:$0xf]
    %v4095 = vld [vmem:[%s18 + $0x10] sm:$0xf]
    %v4096 = vld [vmem:[%s18 + $0x14] sm:$0xf]
    %v4097 = vld [vmem:[%s18 + $0x18] sm:$0xf]
    %v4098 = vld [vmem:[%s18 + $0x1c] sm:$0xf]
    %v4099 = vld [vmem:[#allocation2] sm:$0x1]
    %v4101 = vlaneseq
    %v4102 = vshrl.u32 %v4101, 7
    %v4103 = vsub.s32 0, %v4102
    %v4104 = vrot.slane %v4099, %v4103
    %v4114 = vunpack.c.l.b16 %v4091
    %v4115 = vunpack.c.l.b16 %v4092
    %v4116 = vunpack.c.l.b16 %v4093
    %v4117 = vunpack.c.l.b16 %v4094
    %v4118 = vunpack.c.l.b16 %v4095
    %v4119 = vunpack.c.l.b16 %v4096
    %v4120 = vunpack.c.l.b16 %v4097
    %v4121 = vunpack.c.l.b16 %v4098
    %v4122 = vpack.c.b16 %v4115, %v4114
    %v4123 = vpack.c.b16 %v4117, %v4116
    %v4124 = vpack.c.b16 %v4119, %v4118
    %v4125 = vpack.c.b16 %v4121, %v4120
    %v4131 = vsel %vm3682, %v4090, 0
    %4133 = vmatprep.subr.bf16.mxu0 0
    %4134 = vmatpush1.bf16.msra.mxu0 %v4122
    %4135 = vmatprep.subr.bf16.mxu0 0
    %4136 = vmatpush1.bf16.msra.mxu0 %v4123
    %4137 = vmatprep.subr.bf16.mxu0 0
    %4138 = vmatpush1.bf16.msra.mxu0 %v4124
    %4139 = vmatprep.subr.bf16.mxu0 0
    %4140 = vmatpush1.bf16.msra.mxu0 %v4125
    %4141 = vmatprep.subr.bf16.mxu0 0
    %4142 = vmatpush1.bf16.msra.mxu0 0
    %4143 = vmatprep.subr.bf16.mxu0 0
    %4144 = vmatpush1.bf16.msra.mxu0 0
    %4145 = vmatprep.subr.bf16.mxu0 0
    %4146 = vmatpush1.bf16.msra.mxu0 0
    %4147 = vmatprep.subr.bf16.mxu0 0
    %4148 = vmatpush1.bf16.msra.mxu0 0
    %4149 = vmatprep.subr.bf16.mxu0 0
    %4150 = vmatpush1.bf16.msra.mxu0 0
    %4151 = vmatprep.subr.bf16.mxu0 0
    %4152 = vmatpush1.bf16.msra.mxu0 0
    %4153 = vmatprep.subr.bf16.mxu0 0
    %4154 = vmatpush1.bf16.msra.mxu0 0
    %4155 = vmatprep.subr.bf16.mxu0 0
    %4156 = vmatpush1.bf16.msra.mxu0 0
    %4157 = vmatprep.subr.bf16.mxu0 0
    %4158 = vmatpush1.bf16.msra.mxu0 0
    %4159 = vmatprep.subr.bf16.mxu0 0
    %4160 = vmatpush1.bf16.msra.mxu0 0
    %4161 = vmatprep.subr.bf16.mxu0 0
    %4162 = vmatpush1.bf16.msra.mxu0 0
    %4163 = vmatprep.subr.bf16.mxu0 0
    %4164 = vmatpush1.bf16.msra.mxu0 0
    %4165 = vmatprep.mubr.bf16.mxu0 0
    %4166 = vmatmul.mubr.bf16.gmra.mrb[0].mxu0 %v4131
    %v4167 = vpop.f32.mrb[0].mxu0
    %v4168 = vadd.f32 %v4104, %v4167
    %v4169 = vpop.f32.mrb[0].mxu0
    %v4170 = vpop.f32.mrb[0].mxu0
    %v4171 = vpop.f32.mrb[0].mxu0
    %4172 = vdwg.mxu0
    %v4173 = vand.u32 2147483647, %v4168
    %v4174 = vsub.f32 0.0, %v4173
    %v4175 = vmul.f32 %v4174, 1.442695
    %v4176 = vpow.pop %v4175
    %v4177 = vadd.f32 %v4176, 1.0
    %v4178 = vrcp.pop %v4177
    %v4179 = vmul.f32 1.0, %v4178
    %vm4180 = vcmp.ge.f32.partialorder %v4168, 0.0
    %v4181 = vmul.f32 %v4176, %v4179
    %v4182 = vsel %vm4180, %v4179, %v4181
    %vm4183 = vcmask 1024
    %4184 = vst.msk [vmem:[%s20] sm:$0x3] %vm4183, %v4182
    // Predicated region
    $region86: #{discriminator_forward.1} parent=1 // pred_check
      _
    $region87: #{discriminator_forward.1} parent=1 // pred_check_branch
      %4186 = sbr.rel (0) target = $region89
    $region88: #{discriminator_forward.1} parent=1 // pred_region
      _
    $region89: #{discriminator_forward.1} parent=1 // pred_fallthru
      _
    // Predicated region
    $region90: #{discriminator_forward.1} parent=1 // pred_check
      _
    $region91: #{discriminator_forward.1} parent=1 // pred_check_branch
      %4188 = sbr.rel (0) target = $region93
    $region92: #{discriminator_forward.1} parent=1 // pred_region
      _
    $region93: #{discriminator_forward.1} parent=1 // pred_fallthru
      _
    %4189 = vsyncpa [#allocation4], 1

</llo_original>
